<compile_context>
chip_gen: v6e
topology: v6e:2x2x1
jax: 0.10.0
libtpu: 0.0.40
codegen_flags: <defaults>
</compile_context>

<pallas_src>
import jax
import jax.numpy as jnp
from jax.experimental import pallas as pl
from jax.experimental.pallas import tpu as pltpu

# ----------------------------------------------------------------------------
# Scaled-down CLIPTextConfig (same structure as the real one: pre-LN encoder,
# quick_gelu MLP, causal attention, final LN, EOS-token pooling), plus the
# dim_align Linear (512 -> 768 in the original).
# ----------------------------------------------------------------------------
VOCAB      = 64
BOS_ID     = VOCAB - 2
EOS_ID     = VOCAB - 1
SEQ_LEN    = 8           # 77 in real CLIP
HIDDEN     = 32          # 512 in real CLIP
NUM_HEADS  = 4           # 8 in real CLIP
HEAD_DIM   = HIDDEN // NUM_HEADS
INTERMED   = 4 * HIDDEN  # 2048 in real CLIP
NUM_LAYERS = 2           # 12 in real CLIP
ALIGN_OUT  = 48          # 768 in real CLIP  (dim_align output)
ALIGN_PAD  = 128         # lane-dense padded output width (sliced to ALIGN_OUT)
LN_EPS     = 1e-5
BATCH      = 2


# ----------------------------------------------------------------------------
# The single fused encoder kernel
# ----------------------------------------------------------------------------
def _encoder_kernel(x_ref, sel_ref,
                    ln1_g_ref, ln1_b_ref, qkv_w_ref, qkv_b_ref,
                    o_w_ref, o_b_ref, ln2_g_ref, ln2_b_ref,
                    fc1_w_ref, fc1_b_ref, fc2_w_ref, fc2_b_ref,
                    lnf_g_ref, lnf_b_ref, align_w_ref, align_b_ref,
                    out_ref):
    B, L, H, dh, D = BATCH, SEQ_LEN, NUM_HEADS, HEAD_DIM, HIDDEN

    x = x_ref[...].astype(jnp.float32)                              # (B*L, D)

    # Causal mask bias, computed once and reused by every layer / head.
    row = jax.lax.broadcasted_iota(jnp.int32, (L, L), 0)
    col = jax.lax.broadcasted_iota(jnp.int32, (L, L), 1)
    causal_bias = jnp.where(col <= row, 0.0, -1e30).astype(jnp.float32)

    def layernorm(z, g, b):                                         # f32 math
        mu = jnp.mean(z, axis=-1, keepdims=True)
        var = jnp.mean(jnp.square(z - mu), axis=-1, keepdims=True)
        return (z - mu) * jax.lax.rsqrt(var + LN_EPS) * g + b

    # Small per-layer vectors: load whole stacks once, slice per layer.
    ln1_g = ln1_g_ref[...]; ln1_b = ln1_b_ref[...]
    qkv_b = qkv_b_ref[...]
    o_w_all = o_w_ref[...]; o_b = o_b_ref[...]
    ln2_g = ln2_g_ref[...]; ln2_b = ln2_b_ref[...]
    fc1_b = fc1_b_ref[...]; fc2_b = fc2_b_ref[...]

    for l in range(NUM_LAYERS):                       # statically unrolled
        # ---- self-attention block (pre-LN); LN1, QKV, o-proj, residual fused
        h1 = layernorm(x, ln1_g[l:l + 1, :], ln1_b[l:l + 1, :])
        qkv = (jnp.dot(h1.astype(jnp.bfloat16), qkv_w_ref[l],
                       preferred_element_type=jnp.float32)
               + qkv_b[l:l + 1, :])                               # (B*L, 3D)
        o_w_l = o_w_all[l]                                        # (D, D) f32

        batch_rows = []
        for b in range(B):
            q_b = qkv[b * L:(b + 1) * L, 0 * D:1 * D]             # (L, D)
            k_b = qkv[b * L:(b + 1) * L, 1 * D:2 * D]
            v_b = qkv[b * L:(b + 1) * L, 2 * D:3 * D]
            acc = jnp.zeros((L, D), jnp.float32)
            for hh in range(H):
                qh = q_b[:, hh * dh:(hh + 1) * dh]                # (L, dh)
                kh = k_b[:, hh * dh:(hh + 1) * dh]
                vh = v_b[:, hh * dh:(hh + 1) * dh]
                s = (jnp.dot(qh, kh.T, preferred_element_type=jnp.float32)
                     + causal_bias)                               # (L, L)
                m = jnp.max(s, axis=-1, keepdims=True)
                p = jnp.exp(s - m)
                p = p * pl.reciprocal(jnp.sum(p, axis=-1, keepdims=True),
                                      approx=True)
                ctx = jnp.dot(p, vh, preferred_element_type=jnp.float32)
                # Output projection folded per head: avoids a head concat.
                acc = acc + jnp.dot(ctx, o_w_l[hh * dh:(hh + 1) * dh, :],
                                    preferred_element_type=jnp.float32)
            batch_rows.append(acc)
        attn = jnp.concatenate(batch_rows, axis=0) + o_b[l:l + 1, :]
        x = x + attn                                              # residual

        # ---- MLP block (pre-LN); LN2, fc1, quick_gelu, fc2, residual fused
        h2 = layernorm(x, ln2_g[l:l + 1, :], ln2_b[l:l + 1, :])
        t = (jnp.dot(h2.astype(jnp.bfloat16), fc1_w_ref[l],
                     preferred_element_type=jnp.float32)
             + fc1_b[l:l + 1, :])                                 # (B*L, I)
        t = t * jax.nn.sigmoid(1.702 * t)                         # quick_gelu
        mlp_out = (jnp.dot(t.astype(jnp.bfloat16), fc2_w_ref[l],
                           preferred_element_type=jnp.float32)
                   + fc2_b[l:l + 1, :])
        x = x + mlp_out                                           # residual

    # ---- final LN, EOS pooling (one-hot row-select via MXU), dim_align ----
    xf = layernorm(x, lnf_g_ref[...], lnf_b_ref[...])             # (B*L, D)
    pooled = jnp.dot(sel_ref[...], xf,
                     preferred_element_type=jnp.float32)          # (B, D)
    out_ref[...] = (jnp.dot(pooled.astype(jnp.bfloat16), align_w_ref[...],
                            preferred_element_type=jnp.float32)
                    + align_b_ref[...]).astype(out_ref.dtype)     # (B, 128)


def _full_spec(a):
    n = a.ndim
    return pl.BlockSpec(a.shape, lambda i, n=n: (0,) * n)


def encoder_fused(packed, x_slab, sel):
    order = ["ln1_g", "ln1_b", "qkv_w", "qkv_b", "o_w", "o_b",
             "ln2_g", "ln2_b", "fc1_w", "fc1_b", "fc2_w", "fc2_b",
             "lnf_g", "lnf_b", "align_w", "align_b"]
    args = [x_slab, sel] + [packed[k] for k in order]
    out = pl.pallas_call(
        _encoder_kernel,
        out_shape=jax.ShapeDtypeStruct((BATCH, ALIGN_PAD), jnp.float32),
        grid=(1,),
        in_specs=[_full_spec(a) for a in args],
        out_specs=pl.BlockSpec((BATCH, ALIGN_PAD), lambda i: (0, 0)),
        compiler_params=pltpu.CompilerParams(
            dimension_semantics=("arbitrary",)),
    )(*args)
    return out[:, :ALIGN_OUT]


# ----------------------------------------------------------------------------
# Parameter init (deterministic, synthetic) + packing for the fused kernel
# ----------------------------------------------------------------------------
def init_params(key):
    def nrm(k, shape, std=0.02):
        return std * jax.random.normal(k, shape, dtype=jnp.float32)

    keys = jax.random.split(key, 4 + NUM_LAYERS)
    params = {
        "token_embedding": nrm(keys[0], (VOCAB, HIDDEN)),
        "position_embedding": nrm(keys[1], (SEQ_LEN, HIDDEN)),
        "lnf_g": jnp.ones((HIDDEN,), jnp.float32),
        "lnf_b": jnp.zeros((HIDDEN,), jnp.float32),
        "align_w": nrm(keys[2], (HIDDEN, ALIGN_OUT)),   # dim_align Linear
        "align_b": jnp.zeros((ALIGN_OUT,), jnp.float32),
        "layers": [],
    }
    for l in range(NUM_LAYERS):
        lk = jax.random.split(keys[4 + l], 6)
        params["layers"].append({
            "ln1_g": jnp.ones((HIDDEN,), jnp.float32),
            "ln1_b": jnp.zeros((HIDDEN,), jnp.float32),
            "q_w": nrm(lk[0], (HIDDEN, HIDDEN)), "q_b": jnp.zeros((HIDDEN,), jnp.float32),
            "k_w": nrm(lk[1], (HIDDEN, HIDDEN)), "k_b": jnp.zeros((HIDDEN,), jnp.float32),
            "v_w": nrm(lk[2], (HIDDEN, HIDDEN)), "v_b": jnp.zeros((HIDDEN,), jnp.float32),
            "o_w": nrm(lk[3], (HIDDEN, HIDDEN)), "o_b": jnp.zeros((HIDDEN,), jnp.float32),
            "ln2_g": jnp.ones((HIDDEN,), jnp.float32),
            "ln2_b": jnp.zeros((HIDDEN,), jnp.float32),
            "fc1_w": nrm(lk[4], (HIDDEN, INTERMED)), "fc1_b": jnp.zeros((INTERMED,), jnp.float32),
            "fc2_w": nrm(lk[5], (INTERMED, HIDDEN)), "fc2_b": jnp.zeros((HIDDEN,), jnp.float32),
        })
    return params


def pack_params(params):
    """Stack per-layer params, fuse QKV (with the attention scale folded into
    Q), cast MXU weight operands to bf16, pad dim_align to 128 lanes."""
    scale = HEAD_DIM ** -0.5
    layers = params["layers"]
    stk = lambda key: jnp.stack([lyr[key] for lyr in layers])

    qkv_w = jnp.stack([
        jnp.concatenate([lyr["q_w"] * scale, lyr["k_w"], lyr["v_w"]], axis=1)
        for lyr in layers]).astype(jnp.bfloat16)                  # (NL, D, 3D)
    qkv_b = jnp.stack([
        jnp.concatenate([lyr["q_b"] * scale, lyr["k_b"], lyr["v_b"]])
        for lyr in layers])                                       # (NL, 3D) f32

    align_w = jnp.zeros((HIDDEN, ALIGN_PAD), jnp.float32)
    align_w = align_w.at[:, :ALIGN_OUT].set(params["align_w"]).astype(jnp.bfloat16)
    align_b = jnp.zeros((1, ALIGN_PAD), jnp.float32)
    align_b = align_b.at[:, :ALIGN_OUT].set(params["align_b"].reshape(1, -1))

    return {
        "token_embedding": params["token_embedding"],
        "position_embedding": params["position_embedding"],
        "ln1_g": stk("ln1_g"), "ln1_b": stk("ln1_b"),
        "qkv_w": qkv_w, "qkv_b": qkv_b,
        "o_w": stk("o_w"),                   # f32: per-head row slices in kernel
        "o_b": stk("o_b"),
        "ln2_g": stk("ln2_g"), "ln2_b": stk("ln2_b"),
        "fc1_w": stk("fc1_w").astype(jnp.bfloat16), "fc1_b": stk("fc1_b"),
        "fc2_w": stk("fc2_w").astype(jnp.bfloat16), "fc2_b": stk("fc2_b"),
        "lnf_g": params["lnf_g"].reshape(1, HIDDEN),
        "lnf_b": params["lnf_b"].reshape(1, HIDDEN),
        "align_w": align_w, "align_b": align_b,
    }


# ----------------------------------------------------------------------------
# Forward pass (mirrors TextEncoder.forward: CLIPTextModel -> pooler -> dim_align)
# ----------------------------------------------------------------------------
def text_encoder_forward(packed, input_ids):
    B, L = input_ids.shape
    # Embeddings (JAX glue: gather + positional add).
    tok = packed["token_embedding"][input_ids]                    # (B, L, D)
    pos = packed["position_embedding"][:L]                        # (L, D)
    x = (tok + pos[None, :, :]).reshape(B * L, HIDDEN).astype(jnp.float32)
    # EOS pooling expressed as a one-hot selection matrix consumed in-kernel.
    eos_pos = jnp.argmax((input_ids == EOS_ID).astype(jnp.int32), axis=-1)
    sel = jax.nn.one_hot(jnp.arange(B) * L + eos_pos, B * L, dtype=jnp.float32)
    return encoder_fused(packed, x, sel)                          # (B, ALIGN_OUT)


# ----------------------------------------------------------------------------
if __name__ == "__main__":
    key = jax.random.PRNGKey(0)
    pkey, tkey = jax.random.split(key)
    params = init_params(pkey)
    packed = pack_params(params)

    # Synthetic "tokenized" prompts:  [BOS, body..., EOS]  (rectangular batch,
    # matching tokenizer(..., padding=True)).
    body = jax.random.randint(tkey, (BATCH, SEQ_LEN - 2), 0, VOCAB - 2,
                              dtype=jnp.int32)
    input_ids = jnp.concatenate(
        [jnp.full((BATCH, 1), BOS_ID, jnp.int32),
         body,
         jnp.full((BATCH, 1), EOS_ID, jnp.int32)],
        axis=1,
    )  # (B, L)

    fwd = jax.jit(text_encoder_forward)
    text_embedding = fwd(packed, input_ids)
    jax.block_until_ready(text_embedding)

    assert text_embedding.shape == (BATCH, ALIGN_OUT)
    assert text_embedding.dtype == jnp.float32
    assert bool(jnp.all(jnp.isfinite(text_embedding)))
    print("KERNEL_OK")
</pallas_src>

<mosaic_0001>
module attributes {stable_mosaic.version = 11 : i64} {
  func.func @_encoder_kernel(%arg0: i32, %arg1: memref<16x32xf32, #tpu.memory_space<vmem>>, %arg2: memref<2x16xf32, #tpu.memory_space<vmem>>, %arg3: memref<2x32xf32, #tpu.memory_space<vmem>>, %arg4: memref<2x32xf32, #tpu.memory_space<vmem>>, %arg5: memref<2x32x96xbf16, #tpu.memory_space<vmem>>, %arg6: memref<2x96xf32, #tpu.memory_space<vmem>>, %arg7: memref<2x32x32xf32, #tpu.memory_space<vmem>>, %arg8: memref<2x32xf32, #tpu.memory_space<vmem>>, %arg9: memref<2x32xf32, #tpu.memory_space<vmem>>, %arg10: memref<2x32xf32, #tpu.memory_space<vmem>>, %arg11: memref<2x32x128xbf16, #tpu.memory_space<vmem>>, %arg12: memref<2x128xf32, #tpu.memory_space<vmem>>, %arg13: memref<2x128x32xbf16, #tpu.memory_space<vmem>>, %arg14: memref<2x32xf32, #tpu.memory_space<vmem>>, %arg15: memref<1x32xf32, #tpu.memory_space<vmem>>, %arg16: memref<1x32xf32, #tpu.memory_space<vmem>>, %arg17: memref<32x128xbf16, #tpu.memory_space<vmem>>, %arg18: memref<1x128xf32, #tpu.memory_space<vmem>>, %arg19: memref<2x128xf32, #tpu.memory_space<vmem>>) attributes {dimension_semantics = [#tpu.dimension_semantics<arbitrary>], iteration_bounds = array<i64: 1>, scalar_prefetch = 0 : i64, scratch_operands = 0 : i64, tpu.core_type = #tpu.core_type<tc>, window_params = [{pipeline_mode = #tpu.pipeline_mode<synchronous>, transform_indices = @transform_0, window_bounds = array<i64: 16, 32>}, {pipeline_mode = #tpu.pipeline_mode<synchronous>, transform_indices = @transform_1, window_bounds = array<i64: 2, 16>}, {pipeline_mode = #tpu.pipeline_mode<synchronous>, transform_indices = @transform_2, window_bounds = array<i64: 2, 32>}, {pipeline_mode = #tpu.pipeline_mode<synchronous>, transform_indices = @transform_3, window_bounds = array<i64: 2, 32>}, {pipeline_mode = #tpu.pipeline_mode<synchronous>, transform_indices = @transform_4, window_bounds = array<i64: 2, 32, 96>}, {pipeline_mode = #tpu.pipeline_mode<synchronous>, transform_indices = @transform_5, window_bounds = array<i64: 2, 96>}, {pipeline_mode = #tpu.pipeline_mode<synchronous>, transform_indices = @transform_6, window_bounds = array<i64: 2, 32, 32>}, {pipeline_mode = #tpu.pipeline_mode<synchronous>, transform_indices = @transform_7, window_bounds = array<i64: 2, 32>}, {pipeline_mode = #tpu.pipeline_mode<synchronous>, transform_indices = @transform_8, window_bounds = array<i64: 2, 32>}, {pipeline_mode = #tpu.pipeline_mode<synchronous>, transform_indices = @transform_9, window_bounds = array<i64: 2, 32>}, {pipeline_mode = #tpu.pipeline_mode<synchronous>, transform_indices = @transform_10, window_bounds = array<i64: 2, 32, 128>}, {pipeline_mode = #tpu.pipeline_mode<synchronous>, transform_indices = @transform_11, window_bounds = array<i64: 2, 128>}, {pipeline_mode = #tpu.pipeline_mode<synchronous>, transform_indices = @transform_12, window_bounds = array<i64: 2, 128, 32>}, {pipeline_mode = #tpu.pipeline_mode<synchronous>, transform_indices = @transform_13, window_bounds = array<i64: 2, 32>}, {pipeline_mode = #tpu.pipeline_mode<synchronous>, transform_indices = @transform_14, window_bounds = array<i64: 1, 32>}, {pipeline_mode = #tpu.pipeline_mode<synchronous>, transform_indices = @transform_15, window_bounds = array<i64: 1, 32>}, {pipeline_mode = #tpu.pipeline_mode<synchronous>, transform_indices = @transform_16, window_bounds = array<i64: 32, 128>}, {pipeline_mode = #tpu.pipeline_mode<synchronous>, transform_indices = @transform_17, window_bounds = array<i64: 1, 128>}, {pipeline_mode = #tpu.pipeline_mode<synchronous>, transform_indices = @transform_18, window_bounds = array<i64: 2, 128>}]} {
    %c0 = arith.constant 0 : index
    %c0_0 = arith.constant 0 : index
    %0 = vector.load %arg1[%c0, %c0_0] : memref<16x32xf32, #tpu.memory_space<vmem>>, vector<16x32xf32>
    %1 = tpu.iota {dimensions = array<i32: 0>} : vector<8x8xi32>
    %2 = tpu.iota {dimensions = array<i32: 1>} : vector<8x8xi32>
    %3 = arith.cmpi sle, %2, %1 : vector<8x8xi32>
    %cst = arith.constant 0.000000e+00 : f32
    %cst_1 = arith.constant -1.000000e+30 : f32
    %4 = vector.broadcast %cst : f32 to vector<8x8xf32>
    %5 = vector.broadcast %cst_1 : f32 to vector<8x8xf32>
    %6 = arith.select %3, %4, %5 : vector<8x8xi1>, vector<8x8xf32>
    %c0_2 = arith.constant 0 : index
    %c0_3 = arith.constant 0 : index
    %7 = vector.load %arg3[%c0_2, %c0_3] : memref<2x32xf32, #tpu.memory_space<vmem>>, vector<2x32xf32>
    %c0_4 = arith.constant 0 : index
    %c0_5 = arith.constant 0 : index
    %8 = vector.load %arg4[%c0_4, %c0_5] : memref<2x32xf32, #tpu.memory_space<vmem>>, vector<2x32xf32>
    %c0_6 = arith.constant 0 : index
    %c0_7 = arith.constant 0 : index
    %9 = vector.load %arg6[%c0_6, %c0_7] : memref<2x96xf32, #tpu.memory_space<vmem>>, vector<2x96xf32>
    %c0_8 = arith.constant 0 : index
    %c0_9 = arith.constant 0 : index
    %c0_10 = arith.constant 0 : index
    %10 = vector.load %arg7[%c0_8, %c0_9, %c0_10] : memref<2x32x32xf32, #tpu.memory_space<vmem>>, vector<2x32x32xf32>
    %c0_11 = arith.constant 0 : index
    %c0_12 = arith.constant 0 : index
    %11 = vector.load %arg8[%c0_11, %c0_12] : memref<2x32xf32, #tpu.memory_space<vmem>>, vector<2x32xf32>
    %c0_13 = arith.constant 0 : index
    %c0_14 = arith.constant 0 : index
    %12 = vector.load %arg9[%c0_13, %c0_14] : memref<2x32xf32, #tpu.memory_space<vmem>>, vector<2x32xf32>
    %c0_15 = arith.constant 0 : index
    %c0_16 = arith.constant 0 : index
    %13 = vector.load %arg10[%c0_15, %c0_16] : memref<2x32xf32, #tpu.memory_space<vmem>>, vector<2x32xf32>
    %c0_17 = arith.constant 0 : index
    %c0_18 = arith.constant 0 : index
    %14 = vector.load %arg12[%c0_17, %c0_18] : memref<2x128xf32, #tpu.memory_space<vmem>>, vector<2x128xf32>
    %c0_19 = arith.constant 0 : index
    %c0_20 = arith.constant 0 : index
    %15 = vector.load %arg14[%c0_19, %c0_20] : memref<2x32xf32, #tpu.memory_space<vmem>>, vector<2x32xf32>
    %16 = vector.extract_strided_slice %7 {offsets = [0, 0], sizes = [1, 32], strides = [1, 1]} : vector<2x32xf32> to vector<1x32xf32>
    %17 = vector.extract_strided_slice %8 {offsets = [0, 0], sizes = [1, 32], strides = [1, 1]} : vector<2x32xf32> to vector<1x32xf32>
    %cst_21 = arith.constant dense<0.000000e+00> : vector<16xf32>
    %18 = vector.multi_reduction <add>, %0, %cst_21 [1] : vector<16x32xf32> to vector<16xf32>
    %19 = vector.shape_cast %18 : vector<16xf32> to vector<16x1xf32>
    %cst_22 = arith.constant 3.200000e+01 : f32
    %20 = vector.broadcast %cst_22 : f32 to vector<16x1xf32>
    %21 = arith.divf %19, %20 : vector<16x1xf32>
    %22 = vector.broadcast %21 : vector<16x1xf32> to vector<16x32xf32>
    %23 = arith.subf %0, %22 : vector<16x32xf32>
    %24 = arith.mulf %23, %23 : vector<16x32xf32>
    %cst_23 = arith.constant dense<0.000000e+00> : vector<16xf32>
    %25 = vector.multi_reduction <add>, %24, %cst_23 [1] : vector<16x32xf32> to vector<16xf32>
    %26 = vector.shape_cast %25 : vector<16xf32> to vector<16x1xf32>
    %cst_24 = arith.constant 3.200000e+01 : f32
    %27 = vector.broadcast %cst_24 : f32 to vector<16x1xf32>
    %28 = arith.divf %26, %27 : vector<16x1xf32>
    %29 = vector.broadcast %21 : vector<16x1xf32> to vector<16x32xf32>
    %30 = arith.subf %0, %29 : vector<16x32xf32>
    %cst_25 = arith.constant 9.99999974E-6 : f32
    %31 = vector.broadcast %cst_25 : f32 to vector<16x1xf32>
    %32 = arith.addf %28, %31 : vector<16x1xf32>
    %33 = math.rsqrt %32 : vector<16x1xf32>
    %34 = vector.broadcast %33 : vector<16x1xf32> to vector<16x32xf32>
    %35 = arith.mulf %30, %34 : vector<16x32xf32>
    %36 = vector.broadcast %16 : vector<1x32xf32> to vector<16x32xf32>
    %37 = arith.mulf %35, %36 : vector<16x32xf32>
    %38 = vector.broadcast %17 : vector<1x32xf32> to vector<16x32xf32>
    %39 = arith.addf %37, %38 : vector<16x32xf32>
    %40 = arith.truncf %39 : vector<16x32xf32> to vector<16x32xbf16>
    %c0_26 = arith.constant 0 : index
    %c0_27 = arith.constant 0 : index
    %c0_28 = arith.constant 0 : index
    %41 = vector.load %arg5[%c0_26, %c0_27, %c0_28] : memref<2x32x96xbf16, #tpu.memory_space<vmem>>, vector<1x32x96xbf16>
    %42 = vector.shape_cast %41 : vector<1x32x96xbf16> to vector<32x96xbf16>
    %cst_29 = arith.constant dense<0.000000e+00> : vector<16x96xf32>
    %43 = tpu.matmul %40, %42, %cst_29 {dimension_numbers = #tpu.dot_dimension_numbers<[1], [0], [0], [1], [0, 0, 1, 1], [], []>} : vector<16x32xbf16>, vector<32x96xbf16>, vector<16x96xf32> -> vector<16x96xf32>
    %44 = vector.extract_strided_slice %9 {offsets = [0, 0], sizes = [1, 96], strides = [1, 1]} : vector<2x96xf32> to vector<1x96xf32>
    %45 = vector.broadcast %44 : vector<1x96xf32> to vector<16x96xf32>
    %46 = arith.addf %43, %45 : vector<16x96xf32>
    %47 = vector.extract_strided_slice %10 {offsets = [0, 0, 0], sizes = [1, 32, 32], strides = [1, 1, 1]} : vector<2x32x32xf32> to vector<1x32x32xf32>
    %48 = vector.shape_cast %47 : vector<1x32x32xf32> to vector<32x32xf32>
    %49 = vector.extract_strided_slice %46 {offsets = [0, 0], sizes = [8, 32], strides = [1, 1]} : vector<16x96xf32> to vector<8x32xf32>
    %50 = vector.extract_strided_slice %46 {offsets = [0, 32], sizes = [8, 32], strides = [1, 1]} : vector<16x96xf32> to vector<8x32xf32>
    %51 = vector.extract_strided_slice %46 {offsets = [0, 64], sizes = [8, 32], strides = [1, 1]} : vector<16x96xf32> to vector<8x32xf32>
    %cst_30 = arith.constant 0.000000e+00 : f32
    %52 = vector.broadcast %cst_30 : f32 to vector<8x32xf32>
    %53 = vector.extract_strided_slice %49 {offsets = [0, 0], sizes = [8, 8], strides = [1, 1]} : vector<8x32xf32> to vector<8x8xf32>
    %54 = vector.extract_strided_slice %50 {offsets = [0, 0], sizes = [8, 8], strides = [1, 1]} : vector<8x32xf32> to vector<8x8xf32>
    %55 = vector.extract_strided_slice %51 {offsets = [0, 0], sizes = [8, 8], strides = [1, 1]} : vector<8x32xf32> to vector<8x8xf32>
    %56 = tpu.transpose %54, [1, 0] : vector<8x8xf32> -> vector<8x8xf32>
    %cst_31 = arith.constant dense<0.000000e+00> : vector<8x8xf32>
    %57 = tpu.matmul %53, %56, %cst_31 {dimension_numbers = #tpu.dot_dimension_numbers<[1], [0], [0], [1], [0, 0, 1, 1], [], []>} : vector<8x8xf32>, vector<8x8xf32>, vector<8x8xf32> -> vector<8x8xf32>
    %58 = arith.addf %57, %6 : vector<8x8xf32>
    %cst_32 = arith.constant dense<0xFF800000> : vector<8xf32>
    %59 = vector.multi_reduction <maximumf>, %58, %cst_32 [1] : vector<8x8xf32> to vector<8xf32>
    %60 = vector.shape_cast %59 : vector<8xf32> to vector<8x1xf32>
    %61 = vector.broadcast %60 : vector<8x1xf32> to vector<8x8xf32>
    %62 = arith.subf %58, %61 : vector<8x8xf32>
    %63 = math.exp %62 : vector<8x8xf32>
    %cst_33 = arith.constant dense<0.000000e+00> : vector<8xf32>
    %64 = vector.multi_reduction <add>, %63, %cst_33 [1] : vector<8x8xf32> to vector<8xf32>
    %65 = vector.shape_cast %64 : vector<8xf32> to vector<8x1xf32>
    %66 = tpu.reciprocal %65 {approx = true} : vector<8x1xf32> -> vector<8x1xf32>
    %67 = vector.broadcast %66 : vector<8x1xf32> to vector<8x8xf32>
    %68 = arith.mulf %63, %67 : vector<8x8xf32>
    %cst_34 = arith.constant dense<0.000000e+00> : vector<8x8xf32>
    %69 = tpu.matmul %68, %55, %cst_34 {dimension_numbers = #tpu.dot_dimension_numbers<[1], [0], [0], [1], [0, 0, 1, 1], [], []>} : vector<8x8xf32>, vector<8x8xf32>, vector<8x8xf32> -> vector<8x8xf32>
    %70 = vector.extract_strided_slice %48 {offsets = [0, 0], sizes = [8, 32], strides = [1, 1]} : vector<32x32xf32> to vector<8x32xf32>
    %cst_35 = arith.constant dense<0.000000e+00> : vector<8x32xf32>
    %71 = tpu.matmul %69, %70, %cst_35 {dimension_numbers = #tpu.dot_dimension_numbers<[1], [0], [0], [1], [0, 0, 1, 1], [], []>} : vector<8x8xf32>, vector<8x32xf32>, vector<8x32xf32> -> vector<8x32xf32>
    %72 = arith.addf %52, %71 : vector<8x32xf32>
    %73 = vector.extract_strided_slice %49 {offsets = [0, 8], sizes = [8, 8], strides = [1, 1]} : vector<8x32xf32> to vector<8x8xf32>
    %74 = vector.extract_strided_slice %50 {offsets = [0, 8], sizes = [8, 8], strides = [1, 1]} : vector<8x32xf32> to vector<8x8xf32>
    %75 = vector.extract_strided_slice %51 {offsets = [0, 8], sizes = [8, 8], strides = [1, 1]} : vector<8x32xf32> to vector<8x8xf32>
    %76 = tpu.transpose %74, [1, 0] : vector<8x8xf32> -> vector<8x8xf32>
    %cst_36 = arith.constant dense<0.000000e+00> : vector<8x8xf32>
    %77 = tpu.matmul %73, %76, %cst_36 {dimension_numbers = #tpu.dot_dimension_numbers<[1], [0], [0], [1], [0, 0, 1, 1], [], []>} : vector<8x8xf32>, vector<8x8xf32>, vector<8x8xf32> -> vector<8x8xf32>
    %78 = arith.addf %77, %6 : vector<8x8xf32>
    %cst_37 = arith.constant dense<0xFF800000> : vector<8xf32>
    %79 = vector.multi_reduction <maximumf>, %78, %cst_37 [1] : vector<8x8xf32> to vector<8xf32>
    %80 = vector.shape_cast %79 : vector<8xf32> to vector<8x1xf32>
    %81 = vector.broadcast %80 : vector<8x1xf32> to vector<8x8xf32>
    %82 = arith.subf %78, %81 : vector<8x8xf32>
    %83 = math.exp %82 : vector<8x8xf32>
    %cst_38 = arith.constant dense<0.000000e+00> : vector<8xf32>
    %84 = vector.multi_reduction <add>, %83, %cst_38 [1] : vector<8x8xf32> to vector<8xf32>
    %85 = vector.shape_cast %84 : vector<8xf32> to vector<8x1xf32>
    %86 = tpu.reciprocal %85 {approx = true} : vector<8x1xf32> -> vector<8x1xf32>
    %87 = vector.broadcast %86 : vector<8x1xf32> to vector<8x8xf32>
    %88 = arith.mulf %83, %87 : vector<8x8xf32>
    %cst_39 = arith.constant dense<0.000000e+00> : vector<8x8xf32>
    %89 = tpu.matmul %88, %75, %cst_39 {dimension_numbers = #tpu.dot_dimension_numbers<[1], [0], [0], [1], [0, 0, 1, 1], [], []>} : vector<8x8xf32>, vector<8x8xf32>, vector<8x8xf32> -> vector<8x8xf32>
    %90 = vector.extract_strided_slice %48 {offsets = [8, 0], sizes = [8, 32], strides = [1, 1]} : vector<32x32xf32> to vector<8x32xf32>
    %cst_40 = arith.constant dense<0.000000e+00> : vector<8x32xf32>
    %91 = tpu.matmul %89, %90, %cst_40 {dimension_numbers = #tpu.dot_dimension_numbers<[1], [0], [0], [1], [0, 0, 1, 1], [], []>} : vector<8x8xf32>, vector<8x32xf32>, vector<8x32xf32> -> vector<8x32xf32>
    %92 = arith.addf %72, %91 : vector<8x32xf32>
    %93 = vector.extract_strided_slice %49 {offsets = [0, 16], sizes = [8, 8], strides = [1, 1]} : vector<8x32xf32> to vector<8x8xf32>
    %94 = vector.extract_strided_slice %50 {offsets = [0, 16], sizes = [8, 8], strides = [1, 1]} : vector<8x32xf32> to vector<8x8xf32>
    %95 = vector.extract_strided_slice %51 {offsets = [0, 16], sizes = [8, 8], strides = [1, 1]} : vector<8x32xf32> to vector<8x8xf32>
    %96 = tpu.transpose %94, [1, 0] : vector<8x8xf32> -> vector<8x8xf32>
    %cst_41 = arith.constant dense<0.000000e+00> : vector<8x8xf32>
    %97 = tpu.matmul %93, %96, %cst_41 {dimension_numbers = #tpu.dot_dimension_numbers<[1], [0], [0], [1], [0, 0, 1, 1], [], []>} : vector<8x8xf32>, vector<8x8xf32>, vector<8x8xf32> -> vector<8x8xf32>
    %98 = arith.addf %97, %6 : vector<8x8xf32>
    %cst_42 = arith.constant dense<0xFF800000> : vector<8xf32>
    %99 = vector.multi_reduction <maximumf>, %98, %cst_42 [1] : vector<8x8xf32> to vector<8xf32>
    %100 = vector.shape_cast %99 : vector<8xf32> to vector<8x1xf32>
    %101 = vector.broadcast %100 : vector<8x1xf32> to vector<8x8xf32>
    %102 = arith.subf %98, %101 : vector<8x8xf32>
    %103 = math.exp %102 : vector<8x8xf32>
    %cst_43 = arith.constant dense<0.000000e+00> : vector<8xf32>
    %104 = vector.multi_reduction <add>, %103, %cst_43 [1] : vector<8x8xf32> to vector<8xf32>
    %105 = vector.shape_cast %104 : vector<8xf32> to vector<8x1xf32>
    %106 = tpu.reciprocal %105 {approx = true} : vector<8x1xf32> -> vector<8x1xf32>
    %107 = vector.broadcast %106 : vector<8x1xf32> to vector<8x8xf32>
    %108 = arith.mulf %103, %107 : vector<8x8xf32>
    %cst_44 = arith.constant dense<0.000000e+00> : vector<8x8xf32>
    %109 = tpu.matmul %108, %95, %cst_44 {dimension_numbers = #tpu.dot_dimension_numbers<[1], [0], [0], [1], [0, 0, 1, 1], [], []>} : vector<8x8xf32>, vector<8x8xf32>, vector<8x8xf32> -> vector<8x8xf32>
    %110 = vector.extract_strided_slice %48 {offsets = [16, 0], sizes = [8, 32], strides = [1, 1]} : vector<32x32xf32> to vector<8x32xf32>
    %cst_45 = arith.constant dense<0.000000e+00> : vector<8x32xf32>
    %111 = tpu.matmul %109, %110, %cst_45 {dimension_numbers = #tpu.dot_dimension_numbers<[1], [0], [0], [1], [0, 0, 1, 1], [], []>} : vector<8x8xf32>, vector<8x32xf32>, vector<8x32xf32> -> vector<8x32xf32>
    %112 = arith.addf %92, %111 : vector<8x32xf32>
    %113 = vector.extract_strided_slice %49 {offsets = [0, 24], sizes = [8, 8], strides = [1, 1]} : vector<8x32xf32> to vector<8x8xf32>
    %114 = vector.extract_strided_slice %50 {offsets = [0, 24], sizes = [8, 8], strides = [1, 1]} : vector<8x32xf32> to vector<8x8xf32>
    %115 = vector.extract_strided_slice %51 {offsets = [0, 24], sizes = [8, 8], strides = [1, 1]} : vector<8x32xf32> to vector<8x8xf32>
    %116 = tpu.transpose %114, [1, 0] : vector<8x8xf32> -> vector<8x8xf32>
    %cst_46 = arith.constant dense<0.000000e+00> : vector<8x8xf32>
    %117 = tpu.matmul %113, %116, %cst_46 {dimension_numbers = #tpu.dot_dimension_numbers<[1], [0], [0], [1], [0, 0, 1, 1], [], []>} : vector<8x8xf32>, vector<8x8xf32>, vector<8x8xf32> -> vector<8x8xf32>
    %118 = arith.addf %117, %6 : vector<8x8xf32>
    %cst_47 = arith.constant dense<0xFF800000> : vector<8xf32>
    %119 = vector.multi_reduction <maximumf>, %118, %cst_47 [1] : vector<8x8xf32> to vector<8xf32>
    %120 = vector.shape_cast %119 : vector<8xf32> to vector<8x1xf32>
    %121 = vector.broadcast %120 : vector<8x1xf32> to vector<8x8xf32>
    %122 = arith.subf %118, %121 : vector<8x8xf32>
    %123 = math.exp %122 : vector<8x8xf32>
    %cst_48 = arith.constant dense<0.000000e+00> : vector<8xf32>
    %124 = vector.multi_reduction <add>, %123, %cst_48 [1] : vector<8x8xf32> to vector<8xf32>
    %125 = vector.shape_cast %124 : vector<8xf32> to vector<8x1xf32>
    %126 = tpu.reciprocal %125 {approx = true} : vector<8x1xf32> -> vector<8x1xf32>
    %127 = vector.broadcast %126 : vector<8x1xf32> to vector<8x8xf32>
    %128 = arith.mulf %123, %127 : vector<8x8xf32>
    %cst_49 = arith.constant dense<0.000000e+00> : vector<8x8xf32>
    %129 = tpu.matmul %128, %115, %cst_49 {dimension_numbers = #tpu.dot_dimension_numbers<[1], [0], [0], [1], [0, 0, 1, 1], [], []>} : vector<8x8xf32>, vector<8x8xf32>, vector<8x8xf32> -> vector<8x8xf32>
    %130 = vector.extract_strided_slice %48 {offsets = [24, 0], sizes = [8, 32], strides = [1, 1]} : vector<32x32xf32> to vector<8x32xf32>
    %cst_50 = arith.constant dense<0.000000e+00> : vector<8x32xf32>
    %131 = tpu.matmul %129, %130, %cst_50 {dimension_numbers = #tpu.dot_dimension_numbers<[1], [0], [0], [1], [0, 0, 1, 1], [], []>} : vector<8x8xf32>, vector<8x32xf32>, vector<8x32xf32> -> vector<8x32xf32>
    %132 = arith.addf %112, %131 : vector<8x32xf32>
    %133 = vector.extract_strided_slice %46 {offsets = [8, 0], sizes = [8, 32], strides = [1, 1]} : vector<16x96xf32> to vector<8x32xf32>
    %134 = vector.extract_strided_slice %46 {offsets = [8, 32], sizes = [8, 32], strides = [1, 1]} : vector<16x96xf32> to vector<8x32xf32>
    %135 = vector.extract_strided_slice %46 {offsets = [8, 64], sizes = [8, 32], strides = [1, 1]} : vector<16x96xf32> to vector<8x32xf32>
    %cst_51 = arith.constant 0.000000e+00 : f32
    %136 = vector.broadcast %cst_51 : f32 to vector<8x32xf32>
    %137 = vector.extract_strided_slice %133 {offsets = [0, 0], sizes = [8, 8], strides = [1, 1]} : vector<8x32xf32> to vector<8x8xf32>
    %138 = vector.extract_strided_slice %134 {offsets = [0, 0], sizes = [8, 8], strides = [1, 1]} : vector<8x32xf32> to vector<8x8xf32>
    %139 = vector.extract_strided_slice %135 {offsets = [0, 0], sizes = [8, 8], strides = [1, 1]} : vector<8x32xf32> to vector<8x8xf32>
    %140 = tpu.transpose %138, [1, 0] : vector<8x8xf32> -> vector<8x8xf32>
    %cst_52 = arith.constant dense<0.000000e+00> : vector<8x8xf32>
    %141 = tpu.matmul %137, %140, %cst_52 {dimension_numbers = #tpu.dot_dimension_numbers<[1], [0], [0], [1], [0, 0, 1, 1], [], []>} : vector<8x8xf32>, vector<8x8xf32>, vector<8x8xf32> -> vector<8x8xf32>
    %142 = arith.addf %141, %6 : vector<8x8xf32>
    %cst_53 = arith.constant dense<0xFF800000> : vector<8xf32>
    %143 = vector.multi_reduction <maximumf>, %142, %cst_53 [1] : vector<8x8xf32> to vector<8xf32>
    %144 = vector.shape_cast %143 : vector<8xf32> to vector<8x1xf32>
    %145 = vector.broadcast %144 : vector<8x1xf32> to vector<8x8xf32>
    %146 = arith.subf %142, %145 : vector<8x8xf32>
    %147 = math.exp %146 : vector<8x8xf32>
    %cst_54 = arith.constant dense<0.000000e+00> : vector<8xf32>
    %148 = vector.multi_reduction <add>, %147, %cst_54 [1] : vector<8x8xf32> to vector<8xf32>
    %149 = vector.shape_cast %148 : vector<8xf32> to vector<8x1xf32>
    %150 = tpu.reciprocal %149 {approx = true} : vector<8x1xf32> -> vector<8x1xf32>
    %151 = vector.broadcast %150 : vector<8x1xf32> to vector<8x8xf32>
    %152 = arith.mulf %147, %151 : vector<8x8xf32>
    %cst_55 = arith.constant dense<0.000000e+00> : vector<8x8xf32>
    %153 = tpu.matmul %152, %139, %cst_55 {dimension_numbers = #tpu.dot_dimension_numbers<[1], [0], [0], [1], [0, 0, 1, 1], [], []>} : vector<8x8xf32>, vector<8x8xf32>, vector<8x8xf32> -> vector<8x8xf32>
    %154 = vector.extract_strided_slice %48 {offsets = [0, 0], sizes = [8, 32], strides = [1, 1]} : vector<32x32xf32> to vector<8x32xf32>
    %cst_56 = arith.constant dense<0.000000e+00> : vector<8x32xf32>
    %155 = tpu.matmul %153, %154, %cst_56 {dimension_numbers = #tpu.dot_dimension_numbers<[1], [0], [0], [1], [0, 0, 1, 1], [], []>} : vector<8x8xf32>, vector<8x32xf32>, vector<8x32xf32> -> vector<8x32xf32>
    %156 = arith.addf %136, %155 : vector<8x32xf32>
    %157 = vector.extract_strided_slice %133 {offsets = [0, 8], sizes = [8, 8], strides = [1, 1]} : vector<8x32xf32> to vector<8x8xf32>
    %158 = vector.extract_strided_slice %134 {offsets = [0, 8], sizes = [8, 8], strides = [1, 1]} : vector<8x32xf32> to vector<8x8xf32>
    %159 = vector.extract_strided_slice %135 {offsets = [0, 8], sizes = [8, 8], strides = [1, 1]} : vector<8x32xf32> to vector<8x8xf32>
    %160 = tpu.transpose %158, [1, 0] : vector<8x8xf32> -> vector<8x8xf32>
    %cst_57 = arith.constant dense<0.000000e+00> : vector<8x8xf32>
    %161 = tpu.matmul %157, %160, %cst_57 {dimension_numbers = #tpu.dot_dimension_numbers<[1], [0], [0], [1], [0, 0, 1, 1], [], []>} : vector<8x8xf32>, vector<8x8xf32>, vector<8x8xf32> -> vector<8x8xf32>
    %162 = arith.addf %161, %6 : vector<8x8xf32>
    %cst_58 = arith.constant dense<0xFF800000> : vector<8xf32>
    %163 = vector.multi_reduction <maximumf>, %162, %cst_58 [1] : vector<8x8xf32> to vector<8xf32>
    %164 = vector.shape_cast %163 : vector<8xf32> to vector<8x1xf32>
    %165 = vector.broadcast %164 : vector<8x1xf32> to vector<8x8xf32>
    %166 = arith.subf %162, %165 : vector<8x8xf32>
    %167 = math.exp %166 : vector<8x8xf32>
    %cst_59 = arith.constant dense<0.000000e+00> : vector<8xf32>
    %168 = vector.multi_reduction <add>, %167, %cst_59 [1] : vector<8x8xf32> to vector<8xf32>
    %169 = vector.shape_cast %168 : vector<8xf32> to vector<8x1xf32>
    %170 = tpu.reciprocal %169 {approx = true} : vector<8x1xf32> -> vector<8x1xf32>
    %171 = vector.broadcast %170 : vector<8x1xf32> to vector<8x8xf32>
    %172 = arith.mulf %167, %171 : vector<8x8xf32>
    %cst_60 = arith.constant dense<0.000000e+00> : vector<8x8xf32>
    %173 = tpu.matmul %172, %159, %cst_60 {dimension_numbers = #tpu.dot_dimension_numbers<[1], [0], [0], [1], [0, 0, 1, 1], [], []>} : vector<8x8xf32>, vector<8x8xf32>, vector<8x8xf32> -> vector<8x8xf32>
    %174 = vector.extract_strided_slice %48 {offsets = [8, 0], sizes = [8, 32], strides = [1, 1]} : vector<32x32xf32> to vector<8x32xf32>
    %cst_61 = arith.constant dense<0.000000e+00> : vector<8x32xf32>
    %175 = tpu.matmul %173, %174, %cst_61 {dimension_numbers = #tpu.dot_dimension_numbers<[1], [0], [0], [1], [0, 0, 1, 1], [], []>} : vector<8x8xf32>, vector<8x32xf32>, vector<8x32xf32> -> vector<8x32xf32>
    %176 = arith.addf %156, %175 : vector<8x32xf32>
    %177 = vector.extract_strided_slice %133 {offsets = [0, 16], sizes = [8, 8], strides = [1, 1]} : vector<8x32xf32> to vector<8x8xf32>
    %178 = vector.extract_strided_slice %134 {offsets = [0, 16], sizes = [8, 8], strides = [1, 1]} : vector<8x32xf32> to vector<8x8xf32>
    %179 = vector.extract_strided_slice %135 {offsets = [0, 16], sizes = [8, 8], strides = [1, 1]} : vector<8x32xf32> to vector<8x8xf32>
    %180 = tpu.transpose %178, [1, 0] : vector<8x8xf32> -> vector<8x8xf32>
    %cst_62 = arith.constant dense<0.000000e+00> : vector<8x8xf32>
    %181 = tpu.matmul %177, %180, %cst_62 {dimension_numbers = #tpu.dot_dimension_numbers<[1], [0], [0], [1], [0, 0, 1, 1], [], []>} : vector<8x8xf32>, vector<8x8xf32>, vector<8x8xf32> -> vector<8x8xf32>
    %182 = arith.addf %181, %6 : vector<8x8xf32>
    %cst_63 = arith.constant dense<0xFF800000> : vector<8xf32>
    %183 = vector.multi_reduction <maximumf>, %182, %cst_63 [1] : vector<8x8xf32> to vector<8xf32>
    %184 = vector.shape_cast %183 : vector<8xf32> to vector<8x1xf32>
    %185 = vector.broadcast %184 : vector<8x1xf32> to vector<8x8xf32>
    %186 = arith.subf %182, %185 : vector<8x8xf32>
    %187 = math.exp %186 : vector<8x8xf32>
    %cst_64 = arith.constant dense<0.000000e+00> : vector<8xf32>
    %188 = vector.multi_reduction <add>, %187, %cst_64 [1] : vector<8x8xf32> to vector<8xf32>
    %189 = vector.shape_cast %188 : vector<8xf32> to vector<8x1xf32>
    %190 = tpu.reciprocal %189 {approx = true} : vector<8x1xf32> -> vector<8x1xf32>
    %191 = vector.broadcast %190 : vector<8x1xf32> to vector<8x8xf32>
    %192 = arith.mulf %187, %191 : vector<8x8xf32>
    %cst_65 = arith.constant dense<0.000000e+00> : vector<8x8xf32>
    %193 = tpu.matmul %192, %179, %cst_65 {dimension_numbers = #tpu.dot_dimension_numbers<[1], [0], [0], [1], [0, 0, 1, 1], [], []>} : vector<8x8xf32>, vector<8x8xf32>, vector<8x8xf32> -> vector<8x8xf32>
    %194 = vector.extract_strided_slice %48 {offsets = [16, 0], sizes = [8, 32], strides = [1, 1]} : vector<32x32xf32> to vector<8x32xf32>
    %cst_66 = arith.constant dense<0.000000e+00> : vector<8x32xf32>
    %195 = tpu.matmul %193, %194, %cst_66 {dimension_numbers = #tpu.dot_dimension_numbers<[1], [0], [0], [1], [0, 0, 1, 1], [], []>} : vector<8x8xf32>, vector<8x32xf32>, vector<8x32xf32> -> vector<8x32xf32>
    %196 = arith.addf %176, %195 : vector<8x32xf32>
    %197 = vector.extract_strided_slice %133 {offsets = [0, 24], sizes = [8, 8], strides = [1, 1]} : vector<8x32xf32> to vector<8x8xf32>
    %198 = vector.extract_strided_slice %134 {offsets = [0, 24], sizes = [8, 8], strides = [1, 1]} : vector<8x32xf32> to vector<8x8xf32>
    %199 = vector.extract_strided_slice %135 {offsets = [0, 24], sizes = [8, 8], strides = [1, 1]} : vector<8x32xf32> to vector<8x8xf32>
    %200 = tpu.transpose %198, [1, 0] : vector<8x8xf32> -> vector<8x8xf32>
    %cst_67 = arith.constant dense<0.000000e+00> : vector<8x8xf32>
    %201 = tpu.matmul %197, %200, %cst_67 {dimension_numbers = #tpu.dot_dimension_numbers<[1], [0], [0], [1], [0, 0, 1, 1], [], []>} : vector<8x8xf32>, vector<8x8xf32>, vector<8x8xf32> -> vector<8x8xf32>
    %202 = arith.addf %201, %6 : vector<8x8xf32>
    %cst_68 = arith.constant dense<0xFF800000> : vector<8xf32>
    %203 = vector.multi_reduction <maximumf>, %202, %cst_68 [1] : vector<8x8xf32> to vector<8xf32>
    %204 = vector.shape_cast %203 : vector<8xf32> to vector<8x1xf32>
    %205 = vector.broadcast %204 : vector<8x1xf32> to vector<8x8xf32>
    %206 = arith.subf %202, %205 : vector<8x8xf32>
    %207 = math.exp %206 : vector<8x8xf32>
    %cst_69 = arith.constant dense<0.000000e+00> : vector<8xf32>
    %208 = vector.multi_reduction <add>, %207, %cst_69 [1] : vector<8x8xf32> to vector<8xf32>
    %209 = vector.shape_cast %208 : vector<8xf32> to vector<8x1xf32>
    %210 = tpu.reciprocal %209 {approx = true} : vector<8x1xf32> -> vector<8x1xf32>
    %211 = vector.broadcast %210 : vector<8x1xf32> to vector<8x8xf32>
    %212 = arith.mulf %207, %211 : vector<8x8xf32>
    %cst_70 = arith.constant dense<0.000000e+00> : vector<8x8xf32>
    %213 = tpu.matmul %212, %199, %cst_70 {dimension_numbers = #tpu.dot_dimension_numbers<[1], [0], [0], [1], [0, 0, 1, 1], [], []>} : vector<8x8xf32>, vector<8x8xf32>, vector<8x8xf32> -> vector<8x8xf32>
    %214 = vector.extract_strided_slice %48 {offsets = [24, 0], sizes = [8, 32], strides = [1, 1]} : vector<32x32xf32> to vector<8x32xf32>
    %cst_71 = arith.constant dense<0.000000e+00> : vector<8x32xf32>
    %215 = tpu.matmul %213, %214, %cst_71 {dimension_numbers = #tpu.dot_dimension_numbers<[1], [0], [0], [1], [0, 0, 1, 1], [], []>} : vector<8x8xf32>, vector<8x32xf32>, vector<8x32xf32> -> vector<8x32xf32>
    %216 = arith.addf %196, %215 : vector<8x32xf32>
    %217 = tpu.concatenate %132, %216 in 0 : vector<8x32xf32>, vector<8x32xf32> -> vector<16x32xf32>
    %218 = vector.extract_strided_slice %11 {offsets = [0, 0], sizes = [1, 32], strides = [1, 1]} : vector<2x32xf32> to vector<1x32xf32>
    %219 = vector.broadcast %218 : vector<1x32xf32> to vector<16x32xf32>
    %220 = arith.addf %217, %219 : vector<16x32xf32>
    %221 = arith.addf %0, %220 : vector<16x32xf32>
    %222 = vector.extract_strided_slice %12 {offsets = [0, 0], sizes = [1, 32], strides = [1, 1]} : vector<2x32xf32> to vector<1x32xf32>
    %223 = vector.extract_strided_slice %13 {offsets = [0, 0], sizes = [1, 32], strides = [1, 1]} : vector<2x32xf32> to vector<1x32xf32>
    %cst_72 = arith.constant dense<0.000000e+00> : vector<16xf32>
    %224 = vector.multi_reduction <add>, %221, %cst_72 [1] : vector<16x32xf32> to vector<16xf32>
    %225 = vector.shape_cast %224 : vector<16xf32> to vector<16x1xf32>
    %cst_73 = arith.constant 3.200000e+01 : f32
    %226 = vector.broadcast %cst_73 : f32 to vector<16x1xf32>
    %227 = arith.divf %225, %226 : vector<16x1xf32>
    %228 = vector.broadcast %227 : vector<16x1xf32> to vector<16x32xf32>
    %229 = arith.subf %221, %228 : vector<16x32xf32>
    %230 = arith.mulf %229, %229 : vector<16x32xf32>
    %cst_74 = arith.constant dense<0.000000e+00> : vector<16xf32>
    %231 = vector.multi_reduction <add>, %230, %cst_74 [1] : vector<16x32xf32> to vector<16xf32>
    %232 = vector.shape_cast %231 : vector<16xf32> to vector<16x1xf32>
    %cst_75 = arith.constant 3.200000e+01 : f32
    %233 = vector.broadcast %cst_75 : f32 to vector<16x1xf32>
    %234 = arith.divf %232, %233 : vector<16x1xf32>
    %235 = vector.broadcast %227 : vector<16x1xf32> to vector<16x32xf32>
    %236 = arith.subf %221, %235 : vector<16x32xf32>
    %cst_76 = arith.constant 9.99999974E-6 : f32
    %237 = vector.broadcast %cst_76 : f32 to vector<16x1xf32>
    %238 = arith.addf %234, %237 : vector<16x1xf32>
    %239 = math.rsqrt %238 : vector<16x1xf32>
    %240 = vector.broadcast %239 : vector<16x1xf32> to vector<16x32xf32>
    %241 = arith.mulf %236, %240 : vector<16x32xf32>
    %242 = vector.broadcast %222 : vector<1x32xf32> to vector<16x32xf32>
    %243 = arith.mulf %241, %242 : vector<16x32xf32>
    %244 = vector.broadcast %223 : vector<1x32xf32> to vector<16x32xf32>
    %245 = arith.addf %243, %244 : vector<16x32xf32>
    %246 = arith.truncf %245 : vector<16x32xf32> to vector<16x32xbf16>
    %c0_77 = arith.constant 0 : index
    %c0_78 = arith.constant 0 : index
    %c0_79 = arith.constant 0 : index
    %247 = vector.load %arg11[%c0_77, %c0_78, %c0_79] : memref<2x32x128xbf16, #tpu.memory_space<vmem>>, vector<1x32x128xbf16>
    %248 = vector.shape_cast %247 : vector<1x32x128xbf16> to vector<32x128xbf16>
    %cst_80 = arith.constant dense<0.000000e+00> : vector<16x128xf32>
    %249 = tpu.matmul %246, %248, %cst_80 {dimension_numbers = #tpu.dot_dimension_numbers<[1], [0], [0], [1], [0, 0, 1, 1], [], []>} : vector<16x32xbf16>, vector<32x128xbf16>, vector<16x128xf32> -> vector<16x128xf32>
    %250 = vector.extract_strided_slice %14 {offsets = [0, 0], sizes = [1, 128], strides = [1, 1]} : vector<2x128xf32> to vector<1x128xf32>
    %251 = vector.broadcast %250 : vector<1x128xf32> to vector<16x128xf32>
    %252 = arith.addf %249, %251 : vector<16x128xf32>
    %cst_81 = arith.constant 1.702000e+00 : f32
    %253 = vector.broadcast %cst_81 : f32 to vector<16x128xf32>
    %254 = arith.mulf %253, %252 : vector<16x128xf32>
    %255 = arith.negf %254 : vector<16x128xf32>
    %256 = math.exp %255 : vector<16x128xf32>
    %cst_82 = arith.constant 1.000000e+00 : f32
    %257 = vector.broadcast %cst_82 : f32 to vector<16x128xf32>
    %258 = arith.addf %257, %256 : vector<16x128xf32>
    %259 = arith.divf %257, %258 : vector<16x128xf32>
    %260 = arith.mulf %252, %259 : vector<16x128xf32>
    %261 = arith.truncf %260 : vector<16x128xf32> to vector<16x128xbf16>
    %c0_83 = arith.constant 0 : index
    %c0_84 = arith.constant 0 : index
    %c0_85 = arith.constant 0 : index
    %262 = vector.load %arg13[%c0_83, %c0_84, %c0_85] : memref<2x128x32xbf16, #tpu.memory_space<vmem>>, vector<1x128x32xbf16>
    %263 = vector.shape_cast %262 : vector<1x128x32xbf16> to vector<128x32xbf16>
    %cst_86 = arith.constant dense<0.000000e+00> : vector<16x32xf32>
    %264 = tpu.matmul %261, %263, %cst_86 {dimension_numbers = #tpu.dot_dimension_numbers<[1], [0], [0], [1], [0, 0, 1, 1], [], []>} : vector<16x128xbf16>, vector<128x32xbf16>, vector<16x32xf32> -> vector<16x32xf32>
    %265 = vector.extract_strided_slice %15 {offsets = [0, 0], sizes = [1, 32], strides = [1, 1]} : vector<2x32xf32> to vector<1x32xf32>
    %266 = vector.broadcast %265 : vector<1x32xf32> to vector<16x32xf32>
    %267 = arith.addf %264, %266 : vector<16x32xf32>
    %268 = arith.addf %221, %267 : vector<16x32xf32>
    %269 = vector.extract_strided_slice %7 {offsets = [1, 0], sizes = [1, 32], strides = [1, 1]} : vector<2x32xf32> to vector<1x32xf32>
    %270 = vector.extract_strided_slice %8 {offsets = [1, 0], sizes = [1, 32], strides = [1, 1]} : vector<2x32xf32> to vector<1x32xf32>
    %cst_87 = arith.constant dense<0.000000e+00> : vector<16xf32>
    %271 = vector.multi_reduction <add>, %268, %cst_87 [1] : vector<16x32xf32> to vector<16xf32>
    %272 = vector.shape_cast %271 : vector<16xf32> to vector<16x1xf32>
    %cst_88 = arith.constant 3.200000e+01 : f32
    %273 = vector.broadcast %cst_88 : f32 to vector<16x1xf32>
    %274 = arith.divf %272, %273 : vector<16x1xf32>
    %275 = vector.broadcast %274 : vector<16x1xf32> to vector<16x32xf32>
    %276 = arith.subf %268, %275 : vector<16x32xf32>
    %277 = arith.mulf %276, %276 : vector<16x32xf32>
    %cst_89 = arith.constant dense<0.000000e+00> : vector<16xf32>
    %278 = vector.multi_reduction <add>, %277, %cst_89 [1] : vector<16x32xf32> to vector<16xf32>
    %279 = vector.shape_cast %278 : vector<16xf32> to vector<16x1xf32>
    %cst_90 = arith.constant 3.200000e+01 : f32
    %280 = vector.broadcast %cst_90 : f32 to vector<16x1xf32>
    %281 = arith.divf %279, %280 : vector<16x1xf32>
    %282 = vector.broadcast %274 : vector<16x1xf32> to vector<16x32xf32>
    %283 = arith.subf %268, %282 : vector<16x32xf32>
    %cst_91 = arith.constant 9.99999974E-6 : f32
    %284 = vector.broadcast %cst_91 : f32 to vector<16x1xf32>
    %285 = arith.addf %281, %284 : vector<16x1xf32>
    %286 = math.rsqrt %285 : vector<16x1xf32>
    %287 = vector.broadcast %286 : vector<16x1xf32> to vector<16x32xf32>
    %288 = arith.mulf %283, %287 : vector<16x32xf32>
    %289 = vector.broadcast %269 : vector<1x32xf32> to vector<16x32xf32>
    %290 = arith.mulf %288, %289 : vector<16x32xf32>
    %291 = vector.broadcast %270 : vector<1x32xf32> to vector<16x32xf32>
    %292 = arith.addf %290, %291 : vector<16x32xf32>
    %293 = arith.truncf %292 : vector<16x32xf32> to vector<16x32xbf16>
    %c1 = arith.constant 1 : index
    %c0_92 = arith.constant 0 : index
    %c0_93 = arith.constant 0 : index
    %294 = vector.load %arg5[%c1, %c0_92, %c0_93] : memref<2x32x96xbf16, #tpu.memory_space<vmem>>, vector<1x32x96xbf16>
    %295 = vector.shape_cast %294 : vector<1x32x96xbf16> to vector<32x96xbf16>
    %cst_94 = arith.constant dense<0.000000e+00> : vector<16x96xf32>
    %296 = tpu.matmul %293, %295, %cst_94 {dimension_numbers = #tpu.dot_dimension_numbers<[1], [0], [0], [1], [0, 0, 1, 1], [], []>} : vector<16x32xbf16>, vector<32x96xbf16>, vector<16x96xf32> -> vector<16x96xf32>
    %297 = vector.extract_strided_slice %9 {offsets = [1, 0], sizes = [1, 96], strides = [1, 1]} : vector<2x96xf32> to vector<1x96xf32>
    %298 = vector.broadcast %297 : vector<1x96xf32> to vector<16x96xf32>
    %299 = arith.addf %296, %298 : vector<16x96xf32>
    %300 = vector.extract_strided_slice %10 {offsets = [1, 0, 0], sizes = [1, 32, 32], strides = [1, 1, 1]} : vector<2x32x32xf32> to vector<1x32x32xf32>
    %301 = vector.shape_cast %300 : vector<1x32x32xf32> to vector<32x32xf32>
    %302 = vector.extract_strided_slice %299 {offsets = [0, 0], sizes = [8, 32], strides = [1, 1]} : vector<16x96xf32> to vector<8x32xf32>
    %303 = vector.extract_strided_slice %299 {offsets = [0, 32], sizes = [8, 32], strides = [1, 1]} : vector<16x96xf32> to vector<8x32xf32>
    %304 = vector.extract_strided_slice %299 {offsets = [0, 64], sizes = [8, 32], strides = [1, 1]} : vector<16x96xf32> to vector<8x32xf32>
    %cst_95 = arith.constant 0.000000e+00 : f32
    %305 = vector.broadcast %cst_95 : f32 to vector<8x32xf32>
    %306 = vector.extract_strided_slice %302 {offsets = [0, 0], sizes = [8, 8], strides = [1, 1]} : vector<8x32xf32> to vector<8x8xf32>
    %307 = vector.extract_strided_slice %303 {offsets = [0, 0], sizes = [8, 8], strides = [1, 1]} : vector<8x32xf32> to vector<8x8xf32>
    %308 = vector.extract_strided_slice %304 {offsets = [0, 0], sizes = [8, 8], strides = [1, 1]} : vector<8x32xf32> to vector<8x8xf32>
    %309 = tpu.transpose %307, [1, 0] : vector<8x8xf32> -> vector<8x8xf32>
    %cst_96 = arith.constant dense<0.000000e+00> : vector<8x8xf32>
    %310 = tpu.matmul %306, %309, %cst_96 {dimension_numbers = #tpu.dot_dimension_numbers<[1], [0], [0], [1], [0, 0, 1, 1], [], []>} : vector<8x8xf32>, vector<8x8xf32>, vector<8x8xf32> -> vector<8x8xf32>
    %311 = arith.addf %310, %6 : vector<8x8xf32>
    %cst_97 = arith.constant dense<0xFF800000> : vector<8xf32>
    %312 = vector.multi_reduction <maximumf>, %311, %cst_97 [1] : vector<8x8xf32> to vector<8xf32>
    %313 = vector.shape_cast %312 : vector<8xf32> to vector<8x1xf32>
    %314 = vector.broadcast %313 : vector<8x1xf32> to vector<8x8xf32>
    %315 = arith.subf %311, %314 : vector<8x8xf32>
    %316 = math.exp %315 : vector<8x8xf32>
    %cst_98 = arith.constant dense<0.000000e+00> : vector<8xf32>
    %317 = vector.multi_reduction <add>, %316, %cst_98 [1] : vector<8x8xf32> to vector<8xf32>
    %318 = vector.shape_cast %317 : vector<8xf32> to vector<8x1xf32>
    %319 = tpu.reciprocal %318 {approx = true} : vector<8x1xf32> -> vector<8x1xf32>
    %320 = vector.broadcast %319 : vector<8x1xf32> to vector<8x8xf32>
    %321 = arith.mulf %316, %320 : vector<8x8xf32>
    %cst_99 = arith.constant dense<0.000000e+00> : vector<8x8xf32>
    %322 = tpu.matmul %321, %308, %cst_99 {dimension_numbers = #tpu.dot_dimension_numbers<[1], [0], [0], [1], [0, 0, 1, 1], [], []>} : vector<8x8xf32>, vector<8x8xf32>, vector<8x8xf32> -> vector<8x8xf32>
    %323 = vector.extract_strided_slice %301 {offsets = [0, 0], sizes = [8, 32], strides = [1, 1]} : vector<32x32xf32> to vector<8x32xf32>
    %cst_100 = arith.constant dense<0.000000e+00> : vector<8x32xf32>
    %324 = tpu.matmul %322, %323, %cst_100 {dimension_numbers = #tpu.dot_dimension_numbers<[1], [0], [0], [1], [0, 0, 1, 1], [], []>} : vector<8x8xf32>, vector<8x32xf32>, vector<8x32xf32> -> vector<8x32xf32>
    %325 = arith.addf %305, %324 : vector<8x32xf32>
    %326 = vector.extract_strided_slice %302 {offsets = [0, 8], sizes = [8, 8], strides = [1, 1]} : vector<8x32xf32> to vector<8x8xf32>
    %327 = vector.extract_strided_slice %303 {offsets = [0, 8], sizes = [8, 8], strides = [1, 1]} : vector<8x32xf32> to vector<8x8xf32>
    %328 = vector.extract_strided_slice %304 {offsets = [0, 8], sizes = [8, 8], strides = [1, 1]} : vector<8x32xf32> to vector<8x8xf32>
    %329 = tpu.transpose %327, [1, 0] : vector<8x8xf32> -> vector<8x8xf32>
    %cst_101 = arith.constant dense<0.000000e+00> : vector<8x8xf32>
    %330 = tpu.matmul %326, %329, %cst_101 {dimension_numbers = #tpu.dot_dimension_numbers<[1], [0], [0], [1], [0, 0, 1, 1], [], []>} : vector<8x8xf32>, vector<8x8xf32>, vector<8x8xf32> -> vector<8x8xf32>
    %331 = arith.addf %330, %6 : vector<8x8xf32>
    %cst_102 = arith.constant dense<0xFF800000> : vector<8xf32>
    %332 = vector.multi_reduction <maximumf>, %331, %cst_102 [1] : vector<8x8xf32> to vector<8xf32>
    %333 = vector.shape_cast %332 : vector<8xf32> to vector<8x1xf32>
    %334 = vector.broadcast %333 : vector<8x1xf32> to vector<8x8xf32>
    %335 = arith.subf %331, %334 : vector<8x8xf32>
    %336 = math.exp %335 : vector<8x8xf32>
    %cst_103 = arith.constant dense<0.000000e+00> : vector<8xf32>
    %337 = vector.multi_reduction <add>, %336, %cst_103 [1] : vector<8x8xf32> to vector<8xf32>
    %338 = vector.shape_cast %337 : vector<8xf32> to vector<8x1xf32>
    %339 = tpu.reciprocal %338 {approx = true} : vector<8x1xf32> -> vector<8x1xf32>
    %340 = vector.broadcast %339 : vector<8x1xf32> to vector<8x8xf32>
    %341 = arith.mulf %336, %340 : vector<8x8xf32>
    %cst_104 = arith.constant dense<0.000000e+00> : vector<8x8xf32>
    %342 = tpu.matmul %341, %328, %cst_104 {dimension_numbers = #tpu.dot_dimension_numbers<[1], [0], [0], [1], [0, 0, 1, 1], [], []>} : vector<8x8xf32>, vector<8x8xf32>, vector<8x8xf32> -> vector<8x8xf32>
    %343 = vector.extract_strided_slice %301 {offsets = [8, 0], sizes = [8, 32], strides = [1, 1]} : vector<32x32xf32> to vector<8x32xf32>
    %cst_105 = arith.constant dense<0.000000e+00> : vector<8x32xf32>
    %344 = tpu.matmul %342, %343, %cst_105 {dimension_numbers = #tpu.dot_dimension_numbers<[1], [0], [0], [1], [0, 0, 1, 1], [], []>} : vector<8x8xf32>, vector<8x32xf32>, vector<8x32xf32> -> vector<8x32xf32>
    %345 = arith.addf %325, %344 : vector<8x32xf32>
    %346 = vector.extract_strided_slice %302 {offsets = [0, 16], sizes = [8, 8], strides = [1, 1]} : vector<8x32xf32> to vector<8x8xf32>
    %347 = vector.extract_strided_slice %303 {offsets = [0, 16], sizes = [8, 8], strides = [1, 1]} : vector<8x32xf32> to vector<8x8xf32>
    %348 = vector.extract_strided_slice %304 {offsets = [0, 16], sizes = [8, 8], strides = [1, 1]} : vector<8x32xf32> to vector<8x8xf32>
    %349 = tpu.transpose %347, [1, 0] : vector<8x8xf32> -> vector<8x8xf32>
    %cst_106 = arith.constant dense<0.000000e+00> : vector<8x8xf32>
    %350 = tpu.matmul %346, %349, %cst_106 {dimension_numbers = #tpu.dot_dimension_numbers<[1], [0], [0], [1], [0, 0, 1, 1], [], []>} : vector<8x8xf32>, vector<8x8xf32>, vector<8x8xf32> -> vector<8x8xf32>
    %351 = arith.addf %350, %6 : vector<8x8xf32>
    %cst_107 = arith.constant dense<0xFF800000> : vector<8xf32>
    %352 = vector.multi_reduction <maximumf>, %351, %cst_107 [1] : vector<8x8xf32> to vector<8xf32>
    %353 = vector.shape_cast %352 : vector<8xf32> to vector<8x1xf32>
    %354 = vector.broadcast %353 : vector<8x1xf32> to vector<8x8xf32>
    %355 = arith.subf %351, %354 : vector<8x8xf32>
    %356 = math.exp %355 : vector<8x8xf32>
    %cst_108 = arith.constant dense<0.000000e+00> : vector<8xf32>
    %357 = vector.multi_reduction <add>, %356, %cst_108 [1] : vector<8x8xf32> to vector<8xf32>
    %358 = vector.shape_cast %357 : vector<8xf32> to vector<8x1xf32>
    %359 = tpu.reciprocal %358 {approx = true} : vector<8x1xf32> -> vector<8x1xf32>
    %360 = vector.broadcast %359 : vector<8x1xf32> to vector<8x8xf32>
    %361 = arith.mulf %356, %360 : vector<8x8xf32>
    %cst_109 = arith.constant dense<0.000000e+00> : vector<8x8xf32>
    %362 = tpu.matmul %361, %348, %cst_109 {dimension_numbers = #tpu.dot_dimension_numbers<[1], [0], [0], [1], [0, 0, 1, 1], [], []>} : vector<8x8xf32>, vector<8x8xf32>, vector<8x8xf32> -> vector<8x8xf32>
    %363 = vector.extract_strided_slice %301 {offsets = [16, 0], sizes = [8, 32], strides = [1, 1]} : vector<32x32xf32> to vector<8x32xf32>
    %cst_110 = arith.constant dense<0.000000e+00> : vector<8x32xf32>
    %364 = tpu.matmul %362, %363, %cst_110 {dimension_numbers = #tpu.dot_dimension_numbers<[1], [0], [0], [1], [0, 0, 1, 1], [], []>} : vector<8x8xf32>, vector<8x32xf32>, vector<8x32xf32> -> vector<8x32xf32>
    %365 = arith.addf %345, %364 : vector<8x32xf32>
    %366 = vector.extract_strided_slice %302 {offsets = [0, 24], sizes = [8, 8], strides = [1, 1]} : vector<8x32xf32> to vector<8x8xf32>
    %367 = vector.extract_strided_slice %303 {offsets = [0, 24], sizes = [8, 8], strides = [1, 1]} : vector<8x32xf32> to vector<8x8xf32>
    %368 = vector.extract_strided_slice %304 {offsets = [0, 24], sizes = [8, 8], strides = [1, 1]} : vector<8x32xf32> to vector<8x8xf32>
    %369 = tpu.transpose %367, [1, 0] : vector<8x8xf32> -> vector<8x8xf32>
    %cst_111 = arith.constant dense<0.000000e+00> : vector<8x8xf32>
    %370 = tpu.matmul %366, %369, %cst_111 {dimension_numbers = #tpu.dot_dimension_numbers<[1], [0], [0], [1], [0, 0, 1, 1], [], []>} : vector<8x8xf32>, vector<8x8xf32>, vector<8x8xf32> -> vector<8x8xf32>
    %371 = arith.addf %370, %6 : vector<8x8xf32>
    %cst_112 = arith.constant dense<0xFF800000> : vector<8xf32>
    %372 = vector.multi_reduction <maximumf>, %371, %cst_112 [1] : vector<8x8xf32> to vector<8xf32>
    %373 = vector.shape_cast %372 : vector<8xf32> to vector<8x1xf32>
    %374 = vector.broadcast %373 : vector<8x1xf32> to vector<8x8xf32>
    %375 = arith.subf %371, %374 : vector<8x8xf32>
    %376 = math.exp %375 : vector<8x8xf32>
    %cst_113 = arith.constant dense<0.000000e+00> : vector<8xf32>
    %377 = vector.multi_reduction <add>, %376, %cst_113 [1] : vector<8x8xf32> to vector<8xf32>
    %378 = vector.shape_cast %377 : vector<8xf32> to vector<8x1xf32>
    %379 = tpu.reciprocal %378 {approx = true} : vector<8x1xf32> -> vector<8x1xf32>
    %380 = vector.broadcast %379 : vector<8x1xf32> to vector<8x8xf32>
    %381 = arith.mulf %376, %380 : vector<8x8xf32>
    %cst_114 = arith.constant dense<0.000000e+00> : vector<8x8xf32>
    %382 = tpu.matmul %381, %368, %cst_114 {dimension_numbers = #tpu.dot_dimension_numbers<[1], [0], [0], [1], [0, 0, 1, 1], [], []>} : vector<8x8xf32>, vector<8x8xf32>, vector<8x8xf32> -> vector<8x8xf32>
    %383 = vector.extract_strided_slice %301 {offsets = [24, 0], sizes = [8, 32], strides = [1, 1]} : vector<32x32xf32> to vector<8x32xf32>
    %cst_115 = arith.constant dense<0.000000e+00> : vector<8x32xf32>
    %384 = tpu.matmul %382, %383, %cst_115 {dimension_numbers = #tpu.dot_dimension_numbers<[1], [0], [0], [1], [0, 0, 1, 1], [], []>} : vector<8x8xf32>, vector<8x32xf32>, vector<8x32xf32> -> vector<8x32xf32>
    %385 = arith.addf %365, %384 : vector<8x32xf32>
    %386 = vector.extract_strided_slice %299 {offsets = [8, 0], sizes = [8, 32], strides = [1, 1]} : vector<16x96xf32> to vector<8x32xf32>
    %387 = vector.extract_strided_slice %299 {offsets = [8, 32], sizes = [8, 32], strides = [1, 1]} : vector<16x96xf32> to vector<8x32xf32>
    %388 = vector.extract_strided_slice %299 {offsets = [8, 64], sizes = [8, 32], strides = [1, 1]} : vector<16x96xf32> to vector<8x32xf32>
    %cst_116 = arith.constant 0.000000e+00 : f32
    %389 = vector.broadcast %cst_116 : f32 to vector<8x32xf32>
    %390 = vector.extract_strided_slice %386 {offsets = [0, 0], sizes = [8, 8], strides = [1, 1]} : vector<8x32xf32> to vector<8x8xf32>
    %391 = vector.extract_strided_slice %387 {offsets = [0, 0], sizes = [8, 8], strides = [1, 1]} : vector<8x32xf32> to vector<8x8xf32>
    %392 = vector.extract_strided_slice %388 {offsets = [0, 0], sizes = [8, 8], strides = [1, 1]} : vector<8x32xf32> to vector<8x8xf32>
    %393 = tpu.transpose %391, [1, 0] : vector<8x8xf32> -> vector<8x8xf32>
    %cst_117 = arith.constant dense<0.000000e+00> : vector<8x8xf32>
    %394 = tpu.matmul %390, %393, %cst_117 {dimension_numbers = #tpu.dot_dimension_numbers<[1], [0], [0], [1], [0, 0, 1, 1], [], []>} : vector<8x8xf32>, vector<8x8xf32>, vector<8x8xf32> -> vector<8x8xf32>
    %395 = arith.addf %394, %6 : vector<8x8xf32>
    %cst_118 = arith.constant dense<0xFF800000> : vector<8xf32>
    %396 = vector.multi_reduction <maximumf>, %395, %cst_118 [1] : vector<8x8xf32> to vector<8xf32>
    %397 = vector.shape_cast %396 : vector<8xf32> to vector<8x1xf32>
    %398 = vector.broadcast %397 : vector<8x1xf32> to vector<8x8xf32>
    %399 = arith.subf %395, %398 : vector<8x8xf32>
    %400 = math.exp %399 : vector<8x8xf32>
    %cst_119 = arith.constant dense<0.000000e+00> : vector<8xf32>
    %401 = vector.multi_reduction <add>, %400, %cst_119 [1] : vector<8x8xf32> to vector<8xf32>
    %402 = vector.shape_cast %401 : vector<8xf32> to vector<8x1xf32>
    %403 = tpu.reciprocal %402 {approx = true} : vector<8x1xf32> -> vector<8x1xf32>
    %404 = vector.broadcast %403 : vector<8x1xf32> to vector<8x8xf32>
    %405 = arith.mulf %400, %404 : vector<8x8xf32>
    %cst_120 = arith.constant dense<0.000000e+00> : vector<8x8xf32>
    %406 = tpu.matmul %405, %392, %cst_120 {dimension_numbers = #tpu.dot_dimension_numbers<[1], [0], [0], [1], [0, 0, 1, 1], [], []>} : vector<8x8xf32>, vector<8x8xf32>, vector<8x8xf32> -> vector<8x8xf32>
    %407 = vector.extract_strided_slice %301 {offsets = [0, 0], sizes = [8, 32], strides = [1, 1]} : vector<32x32xf32> to vector<8x32xf32>
    %cst_121 = arith.constant dense<0.000000e+00> : vector<8x32xf32>
    %408 = tpu.matmul %406, %407, %cst_121 {dimension_numbers = #tpu.dot_dimension_numbers<[1], [0], [0], [1], [0, 0, 1, 1], [], []>} : vector<8x8xf32>, vector<8x32xf32>, vector<8x32xf32> -> vector<8x32xf32>
    %409 = arith.addf %389, %408 : vector<8x32xf32>
    %410 = vector.extract_strided_slice %386 {offsets = [0, 8], sizes = [8, 8], strides = [1, 1]} : vector<8x32xf32> to vector<8x8xf32>
    %411 = vector.extract_strided_slice %387 {offsets = [0, 8], sizes = [8, 8], strides = [1, 1]} : vector<8x32xf32> to vector<8x8xf32>
    %412 = vector.extract_strided_slice %388 {offsets = [0, 8], sizes = [8, 8], strides = [1, 1]} : vector<8x32xf32> to vector<8x8xf32>
    %413 = tpu.transpose %411, [1, 0] : vector<8x8xf32> -> vector<8x8xf32>
    %cst_122 = arith.constant dense<0.000000e+00> : vector<8x8xf32>
    %414 = tpu.matmul %410, %413, %cst_122 {dimension_numbers = #tpu.dot_dimension_numbers<[1], [0], [0], [1], [0, 0, 1, 1], [], []>} : vector<8x8xf32>, vector<8x8xf32>, vector<8x8xf32> -> vector<8x8xf32>
    %415 = arith.addf %414, %6 : vector<8x8xf32>
    %cst_123 = arith.constant dense<0xFF800000> : vector<8xf32>
    %416 = vector.multi_reduction <maximumf>, %415, %cst_123 [1] : vector<8x8xf32> to vector<8xf32>
    %417 = vector.shape_cast %416 : vector<8xf32> to vector<8x1xf32>
    %418 = vector.broadcast %417 : vector<8x1xf32> to vector<8x8xf32>
    %419 = arith.subf %415, %418 : vector<8x8xf32>
    %420 = math.exp %419 : vector<8x8xf32>
    %cst_124 = arith.constant dense<0.000000e+00> : vector<8xf32>
    %421 = vector.multi_reduction <add>, %420, %cst_124 [1] : vector<8x8xf32> to vector<8xf32>
    %422 = vector.shape_cast %421 : vector<8xf32> to vector<8x1xf32>
    %423 = tpu.reciprocal %422 {approx = true} : vector<8x1xf32> -> vector<8x1xf32>
    %424 = vector.broadcast %423 : vector<8x1xf32> to vector<8x8xf32>
    %425 = arith.mulf %420, %424 : vector<8x8xf32>
    %cst_125 = arith.constant dense<0.000000e+00> : vector<8x8xf32>
    %426 = tpu.matmul %425, %412, %cst_125 {dimension_numbers = #tpu.dot_dimension_numbers<[1], [0], [0], [1], [0, 0, 1, 1], [], []>} : vector<8x8xf32>, vector<8x8xf32>, vector<8x8xf32> -> vector<8x8xf32>
    %427 = vector.extract_strided_slice %301 {offsets = [8, 0], sizes = [8, 32], strides = [1, 1]} : vector<32x32xf32> to vector<8x32xf32>
    %cst_126 = arith.constant dense<0.000000e+00> : vector<8x32xf32>
    %428 = tpu.matmul %426, %427, %cst_126 {dimension_numbers = #tpu.dot_dimension_numbers<[1], [0], [0], [1], [0, 0, 1, 1], [], []>} : vector<8x8xf32>, vector<8x32xf32>, vector<8x32xf32> -> vector<8x32xf32>
    %429 = arith.addf %409, %428 : vector<8x32xf32>
    %430 = vector.extract_strided_slice %386 {offsets = [0, 16], sizes = [8, 8], strides = [1, 1]} : vector<8x32xf32> to vector<8x8xf32>
    %431 = vector.extract_strided_slice %387 {offsets = [0, 16], sizes = [8, 8], strides = [1, 1]} : vector<8x32xf32> to vector<8x8xf32>
    %432 = vector.extract_strided_slice %388 {offsets = [0, 16], sizes = [8, 8], strides = [1, 1]} : vector<8x32xf32> to vector<8x8xf32>
    %433 = tpu.transpose %431, [1, 0] : vector<8x8xf32> -> vector<8x8xf32>
    %cst_127 = arith.constant dense<0.000000e+00> : vector<8x8xf32>
    %434 = tpu.matmul %430, %433, %cst_127 {dimension_numbers = #tpu.dot_dimension_numbers<[1], [0], [0], [1], [0, 0, 1, 1], [], []>} : vector<8x8xf32>, vector<8x8xf32>, vector<8x8xf32> -> vector<8x8xf32>
    %435 = arith.addf %434, %6 : vector<8x8xf32>
    %cst_128 = arith.constant dense<0xFF800000> : vector<8xf32>
    %436 = vector.multi_reduction <maximumf>, %435, %cst_128 [1] : vector<8x8xf32> to vector<8xf32>
    %437 = vector.shape_cast %436 : vector<8xf32> to vector<8x1xf32>
    %438 = vector.broadcast %437 : vector<8x1xf32> to vector<8x8xf32>
    %439 = arith.subf %435, %438 : vector<8x8xf32>
    %440 = math.exp %439 : vector<8x8xf32>
    %cst_129 = arith.constant dense<0.000000e+00> : vector<8xf32>
    %441 = vector.multi_reduction <add>, %440, %cst_129 [1] : vector<8x8xf32> to vector<8xf32>
    %442 = vector.shape_cast %441 : vector<8xf32> to vector<8x1xf32>
    %443 = tpu.reciprocal %442 {approx = true} : vector<8x1xf32> -> vector<8x1xf32>
    %444 = vector.broadcast %443 : vector<8x1xf32> to vector<8x8xf32>
    %445 = arith.mulf %440, %444 : vector<8x8xf32>
    %cst_130 = arith.constant dense<0.000000e+00> : vector<8x8xf32>
    %446 = tpu.matmul %445, %432, %cst_130 {dimension_numbers = #tpu.dot_dimension_numbers<[1], [0], [0], [1], [0, 0, 1, 1], [], []>} : vector<8x8xf32>, vector<8x8xf32>, vector<8x8xf32> -> vector<8x8xf32>
    %447 = vector.extract_strided_slice %301 {offsets = [16, 0], sizes = [8, 32], strides = [1, 1]} : vector<32x32xf32> to vector<8x32xf32>
    %cst_131 = arith.constant dense<0.000000e+00> : vector<8x32xf32>
    %448 = tpu.matmul %446, %447, %cst_131 {dimension_numbers = #tpu.dot_dimension_numbers<[1], [0], [0], [1], [0, 0, 1, 1], [], []>} : vector<8x8xf32>, vector<8x32xf32>, vector<8x32xf32> -> vector<8x32xf32>
    %449 = arith.addf %429, %448 : vector<8x32xf32>
    %450 = vector.extract_strided_slice %386 {offsets = [0, 24], sizes = [8, 8], strides = [1, 1]} : vector<8x32xf32> to vector<8x8xf32>
    %451 = vector.extract_strided_slice %387 {offsets = [0, 24], sizes = [8, 8], strides = [1, 1]} : vector<8x32xf32> to vector<8x8xf32>
    %452 = vector.extract_strided_slice %388 {offsets = [0, 24], sizes = [8, 8], strides = [1, 1]} : vector<8x32xf32> to vector<8x8xf32>
    %453 = tpu.transpose %451, [1, 0] : vector<8x8xf32> -> vector<8x8xf32>
    %cst_132 = arith.constant dense<0.000000e+00> : vector<8x8xf32>
    %454 = tpu.matmul %450, %453, %cst_132 {dimension_numbers = #tpu.dot_dimension_numbers<[1], [0], [0], [1], [0, 0, 1, 1], [], []>} : vector<8x8xf32>, vector<8x8xf32>, vector<8x8xf32> -> vector<8x8xf32>
    %455 = arith.addf %454, %6 : vector<8x8xf32>
    %cst_133 = arith.constant dense<0xFF800000> : vector<8xf32>
    %456 = vector.multi_reduction <maximumf>, %455, %cst_133 [1] : vector<8x8xf32> to vector<8xf32>
    %457 = vector.shape_cast %456 : vector<8xf32> to vector<8x1xf32>
    %458 = vector.broadcast %457 : vector<8x1xf32> to vector<8x8xf32>
    %459 = arith.subf %455, %458 : vector<8x8xf32>
    %460 = math.exp %459 : vector<8x8xf32>
    %cst_134 = arith.constant dense<0.000000e+00> : vector<8xf32>
    %461 = vector.multi_reduction <add>, %460, %cst_134 [1] : vector<8x8xf32> to vector<8xf32>
    %462 = vector.shape_cast %461 : vector<8xf32> to vector<8x1xf32>
    %463 = tpu.reciprocal %462 {approx = true} : vector<8x1xf32> -> vector<8x1xf32>
    %464 = vector.broadcast %463 : vector<8x1xf32> to vector<8x8xf32>
    %465 = arith.mulf %460, %464 : vector<8x8xf32>
    %cst_135 = arith.constant dense<0.000000e+00> : vector<8x8xf32>
    %466 = tpu.matmul %465, %452, %cst_135 {dimension_numbers = #tpu.dot_dimension_numbers<[1], [0], [0], [1], [0, 0, 1, 1], [], []>} : vector<8x8xf32>, vector<8x8xf32>, vector<8x8xf32> -> vector<8x8xf32>
    %467 = vector.extract_strided_slice %301 {offsets = [24, 0], sizes = [8, 32], strides = [1, 1]} : vector<32x32xf32> to vector<8x32xf32>
    %cst_136 = arith.constant dense<0.000000e+00> : vector<8x32xf32>
    %468 = tpu.matmul %466, %467, %cst_136 {dimension_numbers = #tpu.dot_dimension_numbers<[1], [0], [0], [1], [0, 0, 1, 1], [], []>} : vector<8x8xf32>, vector<8x32xf32>, vector<8x32xf32> -> vector<8x32xf32>
    %469 = arith.addf %449, %468 : vector<8x32xf32>
    %470 = tpu.concatenate %385, %469 in 0 : vector<8x32xf32>, vector<8x32xf32> -> vector<16x32xf32>
    %471 = vector.extract_strided_slice %11 {offsets = [1, 0], sizes = [1, 32], strides = [1, 1]} : vector<2x32xf32> to vector<1x32xf32>
    %472 = vector.broadcast %471 : vector<1x32xf32> to vector<16x32xf32>
    %473 = arith.addf %470, %472 : vector<16x32xf32>
    %474 = arith.addf %268, %473 : vector<16x32xf32>
    %475 = vector.extract_strided_slice %12 {offsets = [1, 0], sizes = [1, 32], strides = [1, 1]} : vector<2x32xf32> to vector<1x32xf32>
    %476 = vector.extract_strided_slice %13 {offsets = [1, 0], sizes = [1, 32], strides = [1, 1]} : vector<2x32xf32> to vector<1x32xf32>
    %cst_137 = arith.constant dense<0.000000e+00> : vector<16xf32>
    %477 = vector.multi_reduction <add>, %474, %cst_137 [1] : vector<16x32xf32> to vector<16xf32>
    %478 = vector.shape_cast %477 : vector<16xf32> to vector<16x1xf32>
    %cst_138 = arith.constant 3.200000e+01 : f32
    %479 = vector.broadcast %cst_138 : f32 to vector<16x1xf32>
    %480 = arith.divf %478, %479 : vector<16x1xf32>
    %481 = vector.broadcast %480 : vector<16x1xf32> to vector<16x32xf32>
    %482 = arith.subf %474, %481 : vector<16x32xf32>
    %483 = arith.mulf %482, %482 : vector<16x32xf32>
    %cst_139 = arith.constant dense<0.000000e+00> : vector<16xf32>
    %484 = vector.multi_reduction <add>, %483, %cst_139 [1] : vector<16x32xf32> to vector<16xf32>
    %485 = vector.shape_cast %484 : vector<16xf32> to vector<16x1xf32>
    %cst_140 = arith.constant 3.200000e+01 : f32
    %486 = vector.broadcast %cst_140 : f32 to vector<16x1xf32>
    %487 = arith.divf %485, %486 : vector<16x1xf32>
    %488 = vector.broadcast %480 : vector<16x1xf32> to vector<16x32xf32>
    %489 = arith.subf %474, %488 : vector<16x32xf32>
    %cst_141 = arith.constant 9.99999974E-6 : f32
    %490 = vector.broadcast %cst_141 : f32 to vector<16x1xf32>
    %491 = arith.addf %487, %490 : vector<16x1xf32>
    %492 = math.rsqrt %491 : vector<16x1xf32>
    %493 = vector.broadcast %492 : vector<16x1xf32> to vector<16x32xf32>
    %494 = arith.mulf %489, %493 : vector<16x32xf32>
    %495 = vector.broadcast %475 : vector<1x32xf32> to vector<16x32xf32>
    %496 = arith.mulf %494, %495 : vector<16x32xf32>
    %497 = vector.broadcast %476 : vector<1x32xf32> to vector<16x32xf32>
    %498 = arith.addf %496, %497 : vector<16x32xf32>
    %499 = arith.truncf %498 : vector<16x32xf32> to vector<16x32xbf16>
    %c1_142 = arith.constant 1 : index
    %c0_143 = arith.constant 0 : index
    %c0_144 = arith.constant 0 : index
    %500 = vector.load %arg11[%c1_142, %c0_143, %c0_144] : memref<2x32x128xbf16, #tpu.memory_space<vmem>>, vector<1x32x128xbf16>
    %501 = vector.shape_cast %500 : vector<1x32x128xbf16> to vector<32x128xbf16>
    %cst_145 = arith.constant dense<0.000000e+00> : vector<16x128xf32>
    %502 = tpu.matmul %499, %501, %cst_145 {dimension_numbers = #tpu.dot_dimension_numbers<[1], [0], [0], [1], [0, 0, 1, 1], [], []>} : vector<16x32xbf16>, vector<32x128xbf16>, vector<16x128xf32> -> vector<16x128xf32>
    %503 = vector.extract_strided_slice %14 {offsets = [1, 0], sizes = [1, 128], strides = [1, 1]} : vector<2x128xf32> to vector<1x128xf32>
    %504 = vector.broadcast %503 : vector<1x128xf32> to vector<16x128xf32>
    %505 = arith.addf %502, %504 : vector<16x128xf32>
    %cst_146 = arith.constant 1.702000e+00 : f32
    %506 = vector.broadcast %cst_146 : f32 to vector<16x128xf32>
    %507 = arith.mulf %506, %505 : vector<16x128xf32>
    %508 = arith.negf %507 : vector<16x128xf32>
    %509 = math.exp %508 : vector<16x128xf32>
    %cst_147 = arith.constant 1.000000e+00 : f32
    %510 = vector.broadcast %cst_147 : f32 to vector<16x128xf32>
    %511 = arith.addf %510, %509 : vector<16x128xf32>
    %512 = arith.divf %510, %511 : vector<16x128xf32>
    %513 = arith.mulf %505, %512 : vector<16x128xf32>
    %514 = arith.truncf %513 : vector<16x128xf32> to vector<16x128xbf16>
    %c1_148 = arith.constant 1 : index
    %c0_149 = arith.constant 0 : index
    %c0_150 = arith.constant 0 : index
    %515 = vector.load %arg13[%c1_148, %c0_149, %c0_150] : memref<2x128x32xbf16, #tpu.memory_space<vmem>>, vector<1x128x32xbf16>
    %516 = vector.shape_cast %515 : vector<1x128x32xbf16> to vector<128x32xbf16>
    %cst_151 = arith.constant dense<0.000000e+00> : vector<16x32xf32>
    %517 = tpu.matmul %514, %516, %cst_151 {dimension_numbers = #tpu.dot_dimension_numbers<[1], [0], [0], [1], [0, 0, 1, 1], [], []>} : vector<16x128xbf16>, vector<128x32xbf16>, vector<16x32xf32> -> vector<16x32xf32>
    %518 = vector.extract_strided_slice %15 {offsets = [1, 0], sizes = [1, 32], strides = [1, 1]} : vector<2x32xf32> to vector<1x32xf32>
    %519 = vector.broadcast %518 : vector<1x32xf32> to vector<16x32xf32>
    %520 = arith.addf %517, %519 : vector<16x32xf32>
    %521 = arith.addf %474, %520 : vector<16x32xf32>
    %c0_152 = arith.constant 0 : index
    %c0_153 = arith.constant 0 : index
    %522 = vector.load %arg15[%c0_152, %c0_153] : memref<1x32xf32, #tpu.memory_space<vmem>>, vector<1x32xf32>
    %c0_154 = arith.constant 0 : index
    %c0_155 = arith.constant 0 : index
    %523 = vector.load %arg16[%c0_154, %c0_155] : memref<1x32xf32, #tpu.memory_space<vmem>>, vector<1x32xf32>
    %cst_156 = arith.constant dense<0.000000e+00> : vector<16xf32>
    %524 = vector.multi_reduction <add>, %521, %cst_156 [1] : vector<16x32xf32> to vector<16xf32>
    %525 = vector.shape_cast %524 : vector<16xf32> to vector<16x1xf32>
    %cst_157 = arith.constant 3.200000e+01 : f32
    %526 = vector.broadcast %cst_157 : f32 to vector<16x1xf32>
    %527 = arith.divf %525, %526 : vector<16x1xf32>
    %528 = vector.broadcast %527 : vector<16x1xf32> to vector<16x32xf32>
    %529 = arith.subf %521, %528 : vector<16x32xf32>
    %530 = arith.mulf %529, %529 : vector<16x32xf32>
    %cst_158 = arith.constant dense<0.000000e+00> : vector<16xf32>
    %531 = vector.multi_reduction <add>, %530, %cst_158 [1] : vector<16x32xf32> to vector<16xf32>
    %532 = vector.shape_cast %531 : vector<16xf32> to vector<16x1xf32>
    %cst_159 = arith.constant 3.200000e+01 : f32
    %533 = vector.broadcast %cst_159 : f32 to vector<16x1xf32>
    %534 = arith.divf %532, %533 : vector<16x1xf32>
    %535 = vector.broadcast %527 : vector<16x1xf32> to vector<16x32xf32>
    %536 = arith.subf %521, %535 : vector<16x32xf32>
    %cst_160 = arith.constant 9.99999974E-6 : f32
    %537 = vector.broadcast %cst_160 : f32 to vector<16x1xf32>
    %538 = arith.addf %534, %537 : vector<16x1xf32>
    %539 = math.rsqrt %538 : vector<16x1xf32>
    %540 = vector.broadcast %539 : vector<16x1xf32> to vector<16x32xf32>
    %541 = arith.mulf %536, %540 : vector<16x32xf32>
    %542 = vector.broadcast %522 : vector<1x32xf32> to vector<16x32xf32>
    %543 = arith.mulf %541, %542 : vector<16x32xf32>
    %544 = vector.broadcast %523 : vector<1x32xf32> to vector<16x32xf32>
    %545 = arith.addf %543, %544 : vector<16x32xf32>
    %c0_161 = arith.constant 0 : index
    %c0_162 = arith.constant 0 : index
    %546 = vector.load %arg2[%c0_161, %c0_162] : memref<2x16xf32, #tpu.memory_space<vmem>>, vector<2x16xf32>
    %cst_163 = arith.constant dense<0.000000e+00> : vector<2x32xf32>
    %547 = tpu.matmul %546, %545, %cst_163 {dimension_numbers = #tpu.dot_dimension_numbers<[1], [0], [0], [1], [0, 0, 1, 1], [], []>} : vector<2x16xf32>, vector<16x32xf32>, vector<2x32xf32> -> vector<2x32xf32>
    %548 = arith.truncf %547 : vector<2x32xf32> to vector<2x32xbf16>
    %c0_164 = arith.constant 0 : index
    %c0_165 = arith.constant 0 : index
    %549 = vector.load %arg17[%c0_164, %c0_165] : memref<32x128xbf16, #tpu.memory_space<vmem>>, vector<32x128xbf16>
    %cst_166 = arith.constant dense<0.000000e+00> : vector<2x128xf32>
    %550 = tpu.matmul %548, %549, %cst_166 {dimension_numbers = #tpu.dot_dimension_numbers<[1], [0], [0], [1], [0, 0, 1, 1], [], []>} : vector<2x32xbf16>, vector<32x128xbf16>, vector<2x128xf32> -> vector<2x128xf32>
    %c0_167 = arith.constant 0 : index
    %c0_168 = arith.constant 0 : index
    %551 = vector.load %arg18[%c0_167, %c0_168] : memref<1x128xf32, #tpu.memory_space<vmem>>, vector<1x128xf32>
    %552 = vector.broadcast %551 : vector<1x128xf32> to vector<2x128xf32>
    %553 = arith.addf %550, %552 : vector<2x128xf32>
    %c0_169 = arith.constant 0 : index
    %c0_170 = arith.constant 0 : index
    %554 = vector.load %arg19[%c0_169, %c0_170] : memref<2x128xf32, #tpu.memory_space<vmem>>, vector<2x128xf32>
    tpu.vector_store %arg19[%c0_169, %c0_170], %553 {strides = array<i32>} : memref<2x128xf32, #tpu.memory_space<vmem>>, vector<2x128xf32>,
    return
  }
  func.func @transform_0(%arg0: i32) -> (i32, i32) {
    %c0_i32 = arith.constant 0 : i32
    %c0_i32_0 = arith.constant 0 : i32
    %c0_i32_1 = arith.constant 0 : i32
    return %c0_i32, %c0_i32_0 : i32, i32
  }
  func.func @transform_1(%arg0: i32) -> (i32, i32) {
    %c0_i32 = arith.constant 0 : i32
    %c0_i32_0 = arith.constant 0 : i32
    %c0_i32_1 = arith.constant 0 : i32
    return %c0_i32, %c0_i32_0 : i32, i32
  }
  func.func @transform_2(%arg0: i32) -> (i32, i32) {
    %c0_i32 = arith.constant 0 : i32
    %c0_i32_0 = arith.constant 0 : i32
    %c0_i32_1 = arith.constant 0 : i32
    return %c0_i32, %c0_i32_0 : i32, i32
  }
  func.func @transform_3(%arg0: i32) -> (i32, i32) {
    %c0_i32 = arith.constant 0 : i32
    %c0_i32_0 = arith.constant 0 : i32
    %c0_i32_1 = arith.constant 0 : i32
    return %c0_i32, %c0_i32_0 : i32, i32
  }
  func.func @transform_4(%arg0: i32) -> (i32, i32, i32) {
    %c0_i32 = arith.constant 0 : i32
    %c0_i32_0 = arith.constant 0 : i32
    %c0_i32_1 = arith.constant 0 : i32
    %c0_i32_2 = arith.constant 0 : i32
    return %c0_i32, %c0_i32_0, %c0_i32_1 : i32, i32, i32
  }
  func.func @transform_5(%arg0: i32) -> (i32, i32) {
    %c0_i32 = arith.constant 0 : i32
    %c0_i32_0 = arith.constant 0 : i32
    %c0_i32_1 = arith.constant 0 : i32
    return %c0_i32, %c0_i32_0 : i32, i32
  }
  func.func @transform_6(%arg0: i32) -> (i32, i32, i32) {
    %c0_i32 = arith.constant 0 : i32
    %c0_i32_0 = arith.constant 0 : i32
    %c0_i32_1 = arith.constant 0 : i32
    %c0_i32_2 = arith.constant 0 : i32
    return %c0_i32, %c0_i32_0, %c0_i32_1 : i32, i32, i32
  }
  func.func @transform_7(%arg0: i32) -> (i32, i32) {
    %c0_i32 = arith.constant 0 : i32
    %c0_i32_0 = arith.constant 0 : i32
    %c0_i32_1 = arith.constant 0 : i32
    return %c0_i32, %c0_i32_0 : i32, i32
  }
  func.func @transform_8(%arg0: i32) -> (i32, i32) {
    %c0_i32 = arith.constant 0 : i32
    %c0_i32_0 = arith.constant 0 : i32
    %c0_i32_1 = arith.constant 0 : i32
    return %c0_i32, %c0_i32_0 : i32, i32
  }
  func.func @transform_9(%arg0: i32) -> (i32, i32) {
    %c0_i32 = arith.constant 0 : i32
    %c0_i32_0 = arith.constant 0 : i32
    %c0_i32_1 = arith.constant 0 : i32
    return %c0_i32, %c0_i32_0 : i32, i32
  }
  func.func @transform_10(%arg0: i32) -> (i32, i32, i32) {
    %c0_i32 = arith.constant 0 : i32
    %c0_i32_0 = arith.constant 0 : i32
    %c0_i32_1 = arith.constant 0 : i32
    %c0_i32_2 = arith.constant 0 : i32
    return %c0_i32, %c0_i32_0, %c0_i32_1 : i32, i32, i32
  }
  func.func @transform_11(%arg0: i32) -> (i32, i32) {
    %c0_i32 = arith.constant 0 : i32
    %c0_i32_0 = arith.constant 0 : i32
    %c0_i32_1 = arith.constant 0 : i32
    return %c0_i32, %c0_i32_0 : i32, i32
  }
  func.func @transform_12(%arg0: i32) -> (i32, i32, i32) {
    %c0_i32 = arith.constant 0 : i32
    %c0_i32_0 = arith.constant 0 : i32
    %c0_i32_1 = arith.constant 0 : i32
    %c0_i32_2 = arith.constant 0 : i32
    return %c0_i32, %c0_i32_0, %c0_i32_1 : i32, i32, i32
  }
  func.func @transform_13(%arg0: i32) -> (i32, i32) {
    %c0_i32 = arith.constant 0 : i32
    %c0_i32_0 = arith.constant 0 : i32
    %c0_i32_1 = arith.constant 0 : i32
    return %c0_i32, %c0_i32_0 : i32, i32
  }
  func.func @transform_14(%arg0: i32) -> (i32, i32) {
    %c0_i32 = arith.constant 0 : i32
    %c0_i32_0 = arith.constant 0 : i32
    %c0_i32_1 = arith.constant 0 : i32
    return %c0_i32, %c0_i32_0 : i32, i32
  }
  func.func @transform_15(%arg0: i32) -> (i32, i32) {
    %c0_i32 = arith.constant 0 : i32
    %c0_i32_0 = arith.constant 0 : i32
    %c0_i32_1 = arith.constant 0 : i32
    return %c0_i32, %c0_i32_0 : i32, i32
  }
  func.func @transform_16(%arg0: i32) -> (i32, i32) {
    %c0_i32 = arith.constant 0 : i32
    %c0_i32_0 = arith.constant 0 : i32
    %c0_i32_1 = arith.constant 0 : i32
    return %c0_i32, %c0_i32_0 : i32, i32
  }
  func.func @transform_17(%arg0: i32) -> (i32, i32) {
    %c0_i32 = arith.constant 0 : i32
    %c0_i32_0 = arith.constant 0 : i32
    %c0_i32_1 = arith.constant 0 : i32
    return %c0_i32, %c0_i32_0 : i32, i32
  }
  func.func @transform_18(%arg0: i32) -> (i32, i32) {
    %c0_i32 = arith.constant 0 : i32
    %c0_i32_0 = arith.constant 0 : i32
    %c0_i32_1 = arith.constant 0 : i32
    return %c0_i32, %c0_i32_0 : i32, i32
  }
}

</mosaic_0001>

<llo_original>
// kernel: text_encoder_forward.1
$region0: #{text_encoder_forward.1}
  #allocation0 [shape = 'u32[]', space=smem, size = 0x4, offset = 0x4, fixed_abs, tag = 'smem constant byte address 0x4 - core index']
  #allocation1 [shape = 'u32[144,128]{1,0:T(1,128)}', space=vmem, size = 0x12000, scoped, tag = 'internal scratch']
  %s0 = inlined_call_operand.vmem [shape: f32[16,32], index: 0, kind: input, shape index: {}]
  %s1 = inlined_call_operand.vmem [shape: f32[2,16], index: 1, kind: input, shape index: {}]
  %s2 = inlined_call_operand.vmem [shape: f32[2,32], index: 2, kind: input, shape index: {}]
  %s3 = inlined_call_operand.vmem [shape: f32[2,32], index: 3, kind: input, shape index: {}]
  %s4 = inlined_call_operand.vmem [shape: bf16[2,32,96], index: 4, kind: input, shape index: {}]
  %s5 = inlined_call_operand.vmem [shape: f32[2,96], index: 5, kind: input, shape index: {}]
  %s6 = inlined_call_operand.vmem [shape: f32[2,32,32], index: 6, kind: input, shape index: {}]
  %s7 = inlined_call_operand.vmem [shape: f32[2,32], index: 7, kind: input, shape index: {}]
  %s8 = inlined_call_operand.vmem [shape: f32[2,32], index: 8, kind: input, shape index: {}]
  %s9 = inlined_call_operand.vmem [shape: f32[2,32], index: 9, kind: input, shape index: {}]
  %s10 = inlined_call_operand.vmem [shape: bf16[2,32,128], index: 10, kind: input, shape index: {}]
  %s11 = inlined_call_operand.vmem [shape: f32[2,128], index: 11, kind: input, shape index: {}]
  %s12 = inlined_call_operand.vmem [shape: bf16[2,128,32], index: 12, kind: input, shape index: {}]
  %s13 = inlined_call_operand.vmem [shape: f32[2,32], index: 13, kind: input, shape index: {}]
  %s14 = inlined_call_operand.vmem [shape: f32[1,32], index: 14, kind: input, shape index: {}]
  %s15 = inlined_call_operand.vmem [shape: f32[1,32], index: 15, kind: input, shape index: {}]
  %s16 = inlined_call_operand.vmem [shape: bf16[32,128], index: 16, kind: input, shape index: {}]
  %s17 = inlined_call_operand.vmem [shape: f32[1,128], index: 17, kind: input, shape index: {}]
  %s18 = inlined_call_operand.hbm [shape: f32[2,128], index: 18, kind: output, shape index: {}]
  %s19 = sld [smem:[#allocation0]]
  $region82: #{text_encoder_forward.1} parent=0
    _
  %s21 = ssub.s32 1, %s19
  %s22 = scalar_select 0, %s21, %s19
  $region1: #{text_encoder_forward.1} parent=0
    #allocation2 [shape = 'u8[1024]{0}', space=vmem, size = 0x400, scoped, tag = 'output window, operand 0, single buffered']
    #allocation3 [shape = 's32[1]{0}', space=sflag, size = 0x4, scoped, tag = 'scoped memory for text_encoder_forward.1']
    %23 = vsyncpa [#allocation3], 0
    // Predicated region
    $region2: #{text_encoder_forward.1} parent=1 // pred_check
      _
    $region3: #{text_encoder_forward.1} parent=1 // pred_check_branch
      %25 = sbr.rel (0) target = $region5
    $region4: #{text_encoder_forward.1} parent=1 // pred_region
      _
    $region5: #{text_encoder_forward.1} parent=1 // pred_fallthru
      _
    // Predicated region
    $region6: #{text_encoder_forward.1} parent=1 // pred_check
      _
    $region7: #{text_encoder_forward.1} parent=1 // pred_check_branch
      %27 = sbr.rel (0) target = $region9
    $region8: #{text_encoder_forward.1} parent=1 // pred_region
      _
    $region9: #{text_encoder_forward.1} parent=1 // pred_fallthru
      _
    // Predicated region
    $region10: #{text_encoder_forward.1} parent=1 // pred_check
      _
    $region11: #{text_encoder_forward.1} parent=1 // pred_check_branch
      %29 = sbr.rel (0) target = $region13
    $region12: #{text_encoder_forward.1} parent=1 // pred_region
      _
    $region13: #{text_encoder_forward.1} parent=1 // pred_fallthru
      _
    // Predicated region
    $region14: #{text_encoder_forward.1} parent=1 // pred_check
      _
    $region15: #{text_encoder_forward.1} parent=1 // pred_check_branch
      %31 = sbr.rel (0) target = $region17
    $region16: #{text_encoder_forward.1} parent=1 // pred_region
      _
    $region17: #{text_encoder_forward.1} parent=1 // pred_fallthru
      _
    // Predicated region
    $region18: #{text_encoder_forward.1} parent=1 // pred_check
      _
    $region19: #{text_encoder_forward.1} parent=1 // pred_check_branch
      %33 = sbr.rel (0) target = $region21
    $region20: #{text_encoder_forward.1} parent=1 // pred_region
      _
    $region21: #{text_encoder_forward.1} parent=1 // pred_fallthru
      _
    // Predicated region
    $region22: #{text_encoder_forward.1} parent=1 // pred_check
      _
    $region23: #{text_encoder_forward.1} parent=1 // pred_check_branch
      %35 = sbr.rel (0) target = $region25
    $region24: #{text_encoder_forward.1} parent=1 // pred_region
      _
    $region25: #{text_encoder_forward.1} parent=1 // pred_fallthru
      _
    // Predicated region
    $region26: #{text_encoder_forward.1} parent=1 // pred_check
      _
    $region27: #{text_encoder_forward.1} parent=1 // pred_check_branch
      %37 = sbr.rel (0) target = $region29
    $region28: #{text_encoder_forward.1} parent=1 // pred_region
      _
    $region29: #{text_encoder_forward.1} parent=1 // pred_fallthru
      _
    // Predicated region
    $region30: #{text_encoder_forward.1} parent=1 // pred_check
      _
    $region31: #{text_encoder_forward.1} parent=1 // pred_check_branch
      %39 = sbr.rel (0) target = $region33
    $region32: #{text_encoder_forward.1} parent=1 // pred_region
      _
    $region33: #{text_encoder_forward.1} parent=1 // pred_fallthru
      _
    // Predicated region
    $region34: #{text_encoder_forward.1} parent=1 // pred_check
      _
    $region35: #{text_encoder_forward.1} parent=1 // pred_check_branch
      %41 = sbr.rel (0) target = $region37
    $region36: #{text_encoder_forward.1} parent=1 // pred_region
      _
    $region37: #{text_encoder_forward.1} parent=1 // pred_fallthru
      _
    // Predicated region
    $region38: #{text_encoder_forward.1} parent=1 // pred_check
      _
    $region39: #{text_encoder_forward.1} parent=1 // pred_check_branch
      %43 = sbr.rel (0) target = $region41
    $region40: #{text_encoder_forward.1} parent=1 // pred_region
      _
    $region41: #{text_encoder_forward.1} parent=1 // pred_fallthru
      _
    // Predicated region
    $region42: #{text_encoder_forward.1} parent=1 // pred_check
      _
    $region43: #{text_encoder_forward.1} parent=1 // pred_check_branch
      %45 = sbr.rel (0) target = $region45
    $region44: #{text_encoder_forward.1} parent=1 // pred_region
      _
    $region45: #{text_encoder_forward.1} parent=1 // pred_fallthru
      _
    // Predicated region
    $region46: #{text_encoder_forward.1} parent=1 // pred_check
      _
    $region47: #{text_encoder_forward.1} parent=1 // pred_check_branch
      %47 = sbr.rel (0) target = $region49
    $region48: #{text_encoder_forward.1} parent=1 // pred_region
      _
    $region49: #{text_encoder_forward.1} parent=1 // pred_fallthru
      _
    // Predicated region
    $region50: #{text_encoder_forward.1} parent=1 // pred_check
      _
    $region51: #{text_encoder_forward.1} parent=1 // pred_check_branch
      %49 = sbr.rel (0) target = $region53
    $region52: #{text_encoder_forward.1} parent=1 // pred_region
      _
    $region53: #{text_encoder_forward.1} parent=1 // pred_fallthru
      _
    // Predicated region
    $region54: #{text_encoder_forward.1} parent=1 // pred_check
      _
    $region55: #{text_encoder_forward.1} parent=1 // pred_check_branch
      %51 = sbr.rel (0) target = $region57
    $region56: #{text_encoder_forward.1} parent=1 // pred_region
      _
    $region57: #{text_encoder_forward.1} parent=1 // pred_fallthru
      _
    // Predicated region
    $region58: #{text_encoder_forward.1} parent=1 // pred_check
      _
    $region59: #{text_encoder_forward.1} parent=1 // pred_check_branch
      %53 = sbr.rel (0) target = $region61
    $region60: #{text_encoder_forward.1} parent=1 // pred_region
      _
    $region61: #{text_encoder_forward.1} parent=1 // pred_fallthru
      _
    // Predicated region
    $region62: #{text_encoder_forward.1} parent=1 // pred_check
      _
    $region63: #{text_encoder_forward.1} parent=1 // pred_check_branch
      %55 = sbr.rel (0) target = $region65
    $region64: #{text_encoder_forward.1} parent=1 // pred_region
      _
    $region65: #{text_encoder_forward.1} parent=1 // pred_fallthru
      _
    // Predicated region
    $region66: #{text_encoder_forward.1} parent=1 // pred_check
      _
    $region67: #{text_encoder_forward.1} parent=1 // pred_check_branch
      %57 = sbr.rel (0) target = $region69
    $region68: #{text_encoder_forward.1} parent=1 // pred_region
      _
    $region69: #{text_encoder_forward.1} parent=1 // pred_fallthru
      _
    // Predicated region
    $region70: #{text_encoder_forward.1} parent=1 // pred_check
      _
    $region71: #{text_encoder_forward.1} parent=1 // pred_check_branch
      %59 = sbr.rel (0) target = $region73
    $region72: #{text_encoder_forward.1} parent=1 // pred_region
      _
    $region73: #{text_encoder_forward.1} parent=1 // pred_fallthru
      _
    %v61 = vld [vmem:[%s0] sm:$0xff]
    %v62 = vld [vmem:[%s0 + $0x8] sm:$0xff]
    %v63 = vlaneseq
    %v64 = vshrl.u32 %v63, 7
    %v65 = vlaneseq
    %v66 = vand.u32 %v65, 127
    %vm67 = vcmp.le.s32.totalorder %v66, %v64
    %v68 = vsel %vm67, 0.0, -1e+30
    %v69 = vld [vmem:[%s2] sm:$0x3]
    %v70 = vld [vmem:[%s3] sm:$0x3]
    %v71 = vld [vmem:[%s5] sm:$0x3]
    %v72 = vld [vmem:[%s6] sm:$0xff]
    %v73 = vld [vmem:[%s6 + $0x8] sm:$0xff]
    %v74 = vld [vmem:[%s6 + $0x10] sm:$0xff]
    %v75 = vld [vmem:[%s6 + $0x18] sm:$0xff]
    %v76 = vld [vmem:[%s6 + $0x20] sm:$0xff]
    %v77 = vld [vmem:[%s6 + $0x28] sm:$0xff]
    %v78 = vld [vmem:[%s6 + $0x30] sm:$0xff]
    %v79 = vld [vmem:[%s6 + $0x38] sm:$0xff]
    %v80 = vld [vmem:[%s7] sm:$0x3]
    %v81 = vld [vmem:[%s8] sm:$0x3]
    %v82 = vld [vmem:[%s9] sm:$0x3]
    %v83 = vld [vmem:[%s11] sm:$0x3]
    %v84 = vld [vmem:[%s13] sm:$0x3]
    %vm85 = vcmask 261120
    %v86 = vsel %vm85, %v61, 0.0
    %87 = vadd.xlane.f32.xlu0 %v86
    %v88 = vpop.xlane.xlu0 %87
    %v89 = vsel %vm85, %v62, 0.0
    %90 = vadd.xlane.f32.xlu0 %v89
    %v91 = vpop.xlane.xlu0 %90
    %v92 = vrcp.pop 32.0
    %v93 = vmul.f32 %v88, %v92
    %v94 = vmul.f32 %v91, %v92
    %v95 = vsub.f32 %v61, %v93
    %v96 = vsub.f32 %v62, %v94
    %v97 = vmul.f32 %v95, %v95
    %v98 = vmul.f32 %v96, %v96
    %v99 = vsel %vm85, %v97, 0.0
    %100 = vadd.xlane.f32.xlu0 %v99
    %v101 = vpop.xlane.xlu0 %100
    %v102 = vsel %vm85, %v98, 0.0
    %103 = vadd.xlane.f32.xlu0 %v102
    %v104 = vpop.xlane.xlu0 %103
    %v105 = vmul.f32 %v101, %v92
    %v106 = vmul.f32 %v104, %v92
    %v107 = vadd.f32 %v105, 1e-05
    %v108 = vadd.f32 %v106, 1e-05
    %v109 = vrsqrt.pop %v107
    %v110 = vrsqrt.pop %v108
    %v111 = vmul.f32 %v95, %v109
    %v112 = vmul.f32 %v96, %v110
    %v113 = vlaneseq
    %v114 = vshrl.u32 %v113, 7
    %v115 = vsub.s32 0, %v114
    %v116 = vrot.slane %v69, %v115
    %v117 = vmul.f32 %v111, %v116
    %v118 = vmul.f32 %v112, %v116
    %v119 = vlaneseq
    %v120 = vshrl.u32 %v119, 7
    %v121 = vsub.s32 0, %v120
    %v122 = vrot.slane %v70, %v121
    %v123 = vadd.f32 %v117, %v122
    %v124 = vadd.f32 %v118, %v122
    %v125 = vpack.c.bf16 %v124, %v123
    %v126 = vld [vmem:[%s4] sm:$0xf]
    %v127 = vld [vmem:[%s4 + $0x4] sm:$0xf]
    %v128 = vld [vmem:[%s4 + $0x8] sm:$0xf]
    %v129 = vld [vmem:[%s4 + $0xc] sm:$0xf]
    %v130 = vlaneseq
    %v131 = vshrl.u32 %v130, 7
    %v132 = vsub.s32 0, %v131
    %v133 = vrot.slane %v71, %v132
    %v138 = vunpack.c.l.b16 %v126
    %v139 = vunpack.c.l.b16 %v127
    %v140 = vunpack.c.l.b16 %v128
    %v141 = vunpack.c.l.b16 %v129
    %v142 = vpack.c.b16 %v139, %v138
    %v143 = vpack.c.b16 %v141, %v140
    %v147 = vsel %vm85, %v125, 0
    %149 = vmatprep.subr.bf16.mxu0 0
    %150 = vmatpush1.bf16.msra.mxu0 0
    %151 = vmatprep.subr.bf16.mxu0 0
    %152 = vmatpush1.bf16.msra.mxu0 0
    %153 = vmatprep.subr.bf16.mxu0 0
    %154 = vmatpush1.bf16.msra.mxu0 0
    %155 = vmatprep.subr.bf16.mxu0 0
    %156 = vmatpush1.bf16.msra.mxu0 0
    %157 = vmatprep.subr.bf16.mxu0 0
    %158 = vmatpush1.bf16.msra.mxu0 0
    %159 = vmatprep.subr.bf16.mxu0 0
    %160 = vmatpush1.bf16.msra.mxu0 0
    %161 = vmatprep.subr.bf16.mxu0 0
    %162 = vmatpush1.bf16.msra.mxu0 %v143
    %163 = vmatprep.subr.bf16.mxu0 0
    %164 = vmatpush1.bf16.msra.mxu0 %v142
    %165 = vmatprep.subr.bf16.mxu0 0
    %166 = vmatpush2.bf16.msra.mxu0 0
    %167 = vmatprep.subr.bf16.mxu0 0
    %168 = vmatpush2.bf16.msra.mxu0 0
    %169 = vmatprep.subr.bf16.mxu0 0
    %170 = vmatpush2.bf16.msra.mxu0 0
    %171 = vmatprep.subr.bf16.mxu0 0
    %172 = vmatpush2.bf16.msra.mxu0 0
    %173 = vmatprep.subr.bf16.mxu0 0
    %174 = vmatpush2.bf16.msra.mxu0 0
    %175 = vmatprep.subr.bf16.mxu0 0
    %176 = vmatpush2.bf16.msra.mxu0 0
    %177 = vmatprep.subr.bf16.mxu0 0
    %178 = vmatpush2.bf16.msra.mxu0 0
    %179 = vmatprep.subr.bf16.mxu0 0
    %180 = vmatpush2.bf16.msra.mxu0 0
    %181 = vmatprep.mubr.bf16.mxu0 0
    %182 = vmatmul.mubr.bf16.gmra.mxu0 %v147
    %v183 = vpop.f32.mrf.mxu0
    %v184 = vadd.f32 %v133, %v183
    %v185 = vpop.f32.mrf.mxu0
    %v186 = vpop.f32.mrf.mxu0
    %v187 = vadd.f32 %v133, %v186
    %v188 = vpop.f32.mrf.mxu0
    %189 = vdwg.mxu0
    %191 = vrot.lane.b32.xlu0 %v184, 96
    %v192 = vpop.permute.xlu0 %191
    %vm193 = vcmask 64512
    %v194 = vsel %vm193, %v184, 0
    %v196 = vsel %vm193, %v192, 0
    %198 = vmatprep.subr.mxu0 0.0
    %199 = vmatpush1.xpose.msra.mxu0 0.0
    %200 = vmatprep.subr.mxu0 0.0
    %201 = vmatpush1.xpose.msra.mxu0 0.0
    %202 = vmatprep.subr.mxu0 0.0
    %203 = vmatpush1.xpose.msra.mxu0 0.0
    %204 = vmatprep.subr.mxu0 0.0
    %205 = vmatpush1.xpose.msra.mxu0 0.0
    %206 = vmatprep.subr.mxu0 0.0
    %207 = vmatpush1.xpose.msra.mxu0 0.0
    %208 = vmatprep.subr.mxu0 0.0
    %209 = vmatpush1.xpose.msra.mxu0 0.0
    %210 = vmatprep.subr.mxu0 0.0
    %211 = vmatpush1.xpose.msra.mxu0 0.0
    %212 = vmatprep.subr.mxu0 0.0
    %213 = vmatpush1.xpose.msra.mxu0 0.0
    %214 = vmatprep.subr.mxu0 0.0
    %215 = vmatpush1.xpose.msra.mxu0 0.0
    %216 = vmatprep.subr.mxu0 0.0
    %217 = vmatpush1.xpose.msra.mxu0 0.0
    %218 = vmatprep.subr.mxu0 0.0
    %219 = vmatpush1.xpose.msra.mxu0 0.0
    %220 = vmatprep.subr.mxu0 0.0
    %221 = vmatpush1.xpose.msra.mxu0 0.0
    %222 = vmatprep.subr.mxu0 0.0
    %223 = vmatpush1.xpose.msra.mxu0 0.0
    %224 = vmatprep.subr.mxu0 0.0
    %225 = vmatpush1.xpose.msra.mxu0 0.0
    %226 = vmatprep.subr.mxu0 0.0
    %227 = vmatpush1.xpose.msra.mxu0 0.0
    %228 = vmatprep.subr.mxu0 0.0
    %229 = vmatpush1.xpose.msra.mxu0 %v196
    %230 = vmatprep.subr.mxu0 0.0
    %231 = vmatpush2.xpose.msra.mxu0 0.0
    %232 = vmatprep.subr.mxu0 0.0
    %233 = vmatpush2.xpose.msra.mxu0 0.0
    %234 = vmatprep.subr.mxu0 0.0
    %235 = vmatpush2.xpose.msra.mxu0 0.0
    %236 = vmatprep.subr.mxu0 0.0
    %237 = vmatpush2.xpose.msra.mxu0 0.0
    %238 = vmatprep.subr.mxu0 0.0
    %239 = vmatpush2.xpose.msra.mxu0 0.0
    %240 = vmatprep.subr.mxu0 0.0
    %241 = vmatpush2.xpose.msra.mxu0 0.0
    %242 = vmatprep.subr.mxu0 0.0
    %243 = vmatpush2.xpose.msra.mxu0 0.0
    %244 = vmatprep.subr.mxu0 0.0
    %245 = vmatpush2.xpose.msra.mxu0 0.0
    %246 = vmatprep.subr.mxu0 0.0
    %247 = vmatpush2.xpose.msra.mxu0 0.0
    %248 = vmatprep.subr.mxu0 0.0
    %249 = vmatpush2.xpose.msra.mxu0 0.0
    %250 = vmatprep.subr.mxu0 0.0
    %251 = vmatpush2.xpose.msra.mxu0 0.0
    %252 = vmatprep.subr.mxu0 0.0
    %253 = vmatpush2.xpose.msra.mxu0 0.0
    %254 = vmatprep.subr.mxu0 0.0
    %255 = vmatpush2.xpose.msra.mxu0 0.0
    %256 = vmatprep.subr.mxu0 0.0
    %257 = vmatpush2.xpose.msra.mxu0 0.0
    %258 = vmatprep.subr.mxu0 0.0
    %259 = vmatpush2.xpose.msra.mxu0 0.0
    %260 = vmatprep.subr.mxu0 0.0
    %261 = vmatpush2.xpose.msra.mxu0 0.0
    %262 = vmatprep.mubr.f32.mxu0 0.0
    %263 = vmatmul.mubr.f32.gmra.mxu0 %v194
    %v264 = vpop.f32.mrf.mxu0
    %v265 = vadd.f32 %v68, %v264
    %v266 = vpop.f32.mrf.mxu0
    %267 = vdwg.mxu0
    %v268 = vsel %vm193, %v265, -inf
    %269 = vmax.xlane.f32.xlu0 %v268
    %v270 = vpop.xlane.xlu0 %269
    %v271 = vsub.f32 %v265, %v270
    %v272 = vmul.f32 %v271, 1.442695
    %v273 = vpow.pop %v272
    %v274 = vsel %vm193, %v273, 0.0
    %275 = vadd.xlane.f32.xlu0 %v274
    %v276 = vpop.xlane.xlu0 %275
    %v277 = vrcp.pop %v276
    %v278 = vmul.f32 %v273, %v277
    %279 = vrot.lane.b32.xlu0 %v184, 64
    %v280 = vpop.permute.xlu0 %279
    %v283 = vsel %vm193, %v278, 0
    %285 = vmatprep.subr.mxu0 0.0
    %286 = vmatpush1.msra.mxu0 0.0
    %287 = vmatprep.subr.mxu0 0.0
    %288 = vmatpush1.msra.mxu0 0.0
    %289 = vmatprep.subr.mxu0 0.0
    %290 = vmatpush1.msra.mxu0 0.0
    %291 = vmatprep.subr.mxu0 0.0
    %292 = vmatpush1.msra.mxu0 0.0
    %293 = vmatprep.subr.mxu0 0.0
    %294 = vmatpush1.msra.mxu0 0.0
    %295 = vmatprep.subr.mxu0 0.0
    %296 = vmatpush1.msra.mxu0 0.0
    %297 = vmatprep.subr.mxu0 0.0
    %298 = vmatpush1.msra.mxu0 0.0
    %299 = vmatprep.subr.mxu0 0.0
    %300 = vmatpush1.msra.mxu0 0.0
    %301 = vmatprep.subr.mxu0 0.0
    %302 = vmatpush1.msra.mxu0 0.0
    %303 = vmatprep.subr.mxu0 0.0
    %304 = vmatpush1.msra.mxu0 0.0
    %305 = vmatprep.subr.mxu0 0.0
    %306 = vmatpush1.msra.mxu0 0.0
    %307 = vmatprep.subr.mxu0 0.0
    %308 = vmatpush1.msra.mxu0 0.0
    %309 = vmatprep.subr.mxu0 0.0
    %310 = vmatpush1.msra.mxu0 0.0
    %311 = vmatprep.subr.mxu0 0.0
    %312 = vmatpush1.msra.mxu0 0.0
    %313 = vmatprep.subr.mxu0 0.0
    %314 = vmatpush1.msra.mxu0 0.0
    %315 = vmatprep.subr.mxu0 0.0
    %316 = vmatpush1.msra.mxu0 %v280
    %317 = vmatprep.subr.mxu0 0.0
    %318 = vmatpush2.msra.mxu0 0.0
    %319 = vmatprep.subr.mxu0 0.0
    %320 = vmatpush2.msra.mxu0 0.0
    %321 = vmatprep.subr.mxu0 0.0
    %322 = vmatpush2.msra.mxu0 0.0
    %323 = vmatprep.subr.mxu0 0.0
    %324 = vmatpush2.msra.mxu0 0.0
    %325 = vmatprep.subr.mxu0 0.0
    %326 = vmatpush2.msra.mxu0 0.0
    %327 = vmatprep.subr.mxu0 0.0
    %328 = vmatpush2.msra.mxu0 0.0
    %329 = vmatprep.subr.mxu0 0.0
    %330 = vmatpush2.msra.mxu0 0.0
    %331 = vmatprep.subr.mxu0 0.0
    %332 = vmatpush2.msra.mxu0 0.0
    %333 = vmatprep.subr.mxu0 0.0
    %334 = vmatpush2.msra.mxu0 0.0
    %335 = vmatprep.subr.mxu0 0.0
    %336 = vmatpush2.msra.mxu0 0.0
    %337 = vmatprep.subr.mxu0 0.0
    %338 = vmatpush2.msra.mxu0 0.0
    %339 = vmatprep.subr.mxu0 0.0
    %340 = vmatpush2.msra.mxu0 0.0
    %341 = vmatprep.subr.mxu0 0.0
    %342 = vmatpush2.msra.mxu0 0.0
    %343 = vmatprep.subr.mxu0 0.0
    %344 = vmatpush2.msra.mxu0 0.0
    %345 = vmatprep.subr.mxu0 0.0
    %346 = vmatpush2.msra.mxu0 0.0
    %347 = vmatprep.subr.mxu0 0.0
    %348 = vmatpush2.msra.mxu0 0.0
    %349 = vmatprep.mubr.f32.mxu0 0.0
    %350 = vmatmul.mubr.f32.gmra.mxu0 %v283
    %v351 = vpop.f32.mrf.mxu0
    %v352 = vadd.f32 0.0, %v351
    %v353 = vpop.f32.mrf.mxu0
    %354 = vdwg.mxu0
    %355 = vrot.lane.b32.xlu0 %v184, 120
    %v356 = vpop.permute.xlu0 %355
    %357 = vrot.lane.b32.xlu0 %v184, 88
    %v358 = vpop.permute.xlu0 %357
    %v359 = vsel %vm193, %v356, 0
    %v361 = vsel %vm193, %v358, 0
    %363 = vmatprep.subr.mxu0 0.0
    %364 = vmatpush1.xpose.msra.mxu0 0.0
    %365 = vmatprep.subr.mxu0 0.0
    %366 = vmatpush1.xpose.msra.mxu0 0.0
    %367 = vmatprep.subr.mxu0 0.0
    %368 = vmatpush1.xpose.msra.mxu0 0.0
    %369 = vmatprep.subr.mxu0 0.0
    %370 = vmatpush1.xpose.msra.mxu0 0.0
    %371 = vmatprep.subr.mxu0 0.0
    %372 = vmatpush1.xpose.msra.mxu0 0.0
    %373 = vmatprep.subr.mxu0 0.0
    %374 = vmatpush1.xpose.msra.mxu0 0.0
    %375 = vmatprep.subr.mxu0 0.0
    %376 = vmatpush1.xpose.msra.mxu0 0.0
    %377 = vmatprep.subr.mxu0 0.0
    %378 = vmatpush1.xpose.msra.mxu0 0.0
    %379 = vmatprep.subr.mxu0 0.0
    %380 = vmatpush1.xpose.msra.mxu0 0.0
    %381 = vmatprep.subr.mxu0 0.0
    %382 = vmatpush1.xpose.msra.mxu0 0.0
    %383 = vmatprep.subr.mxu0 0.0
    %384 = vmatpush1.xpose.msra.mxu0 0.0
    %385 = vmatprep.subr.mxu0 0.0
    %386 = vmatpush1.xpose.msra.mxu0 0.0
    %387 = vmatprep.subr.mxu0 0.0
    %388 = vmatpush1.xpose.msra.mxu0 0.0
    %389 = vmatprep.subr.mxu0 0.0
    %390 = vmatpush1.xpose.msra.mxu0 0.0
    %391 = vmatprep.subr.mxu0 0.0
    %392 = vmatpush1.xpose.msra.mxu0 0.0
    %393 = vmatprep.subr.mxu0 0.0
    %394 = vmatpush1.xpose.msra.mxu0 %v361
    %395 = vmatprep.subr.mxu0 0.0
    %396 = vmatpush2.xpose.msra.mxu0 0.0
    %397 = vmatprep.subr.mxu0 0.0
    %398 = vmatpush2.xpose.msra.mxu0 0.0
    %399 = vmatprep.subr.mxu0 0.0
    %400 = vmatpush2.xpose.msra.mxu0 0.0
    %401 = vmatprep.subr.mxu0 0.0
    %402 = vmatpush2.xpose.msra.mxu0 0.0
    %403 = vmatprep.subr.mxu0 0.0
    %404 = vmatpush2.xpose.msra.mxu0 0.0
    %405 = vmatprep.subr.mxu0 0.0
    %406 = vmatpush2.xpose.msra.mxu0 0.0
    %407 = vmatprep.subr.mxu0 0.0
    %408 = vmatpush2.xpose.msra.mxu0 0.0
    %409 = vmatprep.subr.mxu0 0.0
    %410 = vmatpush2.xpose.msra.mxu0 0.0
    %411 = vmatprep.subr.mxu0 0.0
    %412 = vmatpush2.xpose.msra.mxu0 0.0
    %413 = vmatprep.subr.mxu0 0.0
    %414 = vmatpush2.xpose.msra.mxu0 0.0
    %415 = vmatprep.subr.mxu0 0.0
    %416 = vmatpush2.xpose.msra.mxu0 0.0
    %417 = vmatprep.subr.mxu0 0.0
    %418 = vmatpush2.xpose.msra.mxu0 0.0
    %419 = vmatprep.subr.mxu0 0.0
    %420 = vmatpush2.xpose.msra.mxu0 0.0
    %421 = vmatprep.subr.mxu0 0.0
    %422 = vmatpush2.xpose.msra.mxu0 0.0
    %423 = vmatprep.subr.mxu0 0.0
    %424 = vmatpush2.xpose.msra.mxu0 0.0
    %425 = vmatprep.subr.mxu0 0.0
    %426 = vmatpush2.xpose.msra.mxu0 0.0
    %427 = vmatprep.mubr.f32.mxu0 0.0
    %428 = vmatmul.mubr.f32.gmra.mxu0 %v359
    %v429 = vpop.f32.mrf.mxu0
    %v430 = vadd.f32 %v68, %v429
    %v431 = vpop.f32.mrf.mxu0
    %432 = vdwg.mxu0
    %v433 = vsel %vm193, %v430, -inf
    %434 = vmax.xlane.f32.xlu0 %v433
    %v435 = vpop.xlane.xlu0 %434
    %v436 = vsub.f32 %v430, %v435
    %v437 = vmul.f32 %v436, 1.442695
    %v438 = vpow.pop %v437
    %v439 = vsel %vm193, %v438, 0.0
    %440 = vadd.xlane.f32.xlu0 %v439
    %v441 = vpop.xlane.xlu0 %440
    %v442 = vrcp.pop %v441
    %v443 = vmul.f32 %v438, %v442
    %444 = vrot.lane.b32.xlu0 %v184, 56
    %v445 = vpop.permute.xlu0 %444
    %v448 = vsel %vm193, %v443, 0
    %450 = vmatprep.subr.mxu0 0.0
    %451 = vmatpush1.msra.mxu0 0.0
    %452 = vmatprep.subr.mxu0 0.0
    %453 = vmatpush1.msra.mxu0 0.0
    %454 = vmatprep.subr.mxu0 0.0
    %455 = vmatpush1.msra.mxu0 0.0
    %456 = vmatprep.subr.mxu0 0.0
    %457 = vmatpush1.msra.mxu0 0.0
    %458 = vmatprep.subr.mxu0 0.0
    %459 = vmatpush1.msra.mxu0 0.0
    %460 = vmatprep.subr.mxu0 0.0
    %461 = vmatpush1.msra.mxu0 0.0
    %462 = vmatprep.subr.mxu0 0.0
    %463 = vmatpush1.msra.mxu0 0.0
    %464 = vmatprep.subr.mxu0 0.0
    %465 = vmatpush1.msra.mxu0 0.0
    %466 = vmatprep.subr.mxu0 0.0
    %467 = vmatpush1.msra.mxu0 0.0
    %468 = vmatprep.subr.mxu0 0.0
    %469 = vmatpush1.msra.mxu0 0.0
    %470 = vmatprep.subr.mxu0 0.0
    %471 = vmatpush1.msra.mxu0 0.0
    %472 = vmatprep.subr.mxu0 0.0
    %473 = vmatpush1.msra.mxu0 0.0
    %474 = vmatprep.subr.mxu0 0.0
    %475 = vmatpush1.msra.mxu0 0.0
    %476 = vmatprep.subr.mxu0 0.0
    %477 = vmatpush1.msra.mxu0 0.0
    %478 = vmatprep.subr.mxu0 0.0
    %479 = vmatpush1.msra.mxu0 0.0
    %480 = vmatprep.subr.mxu0 0.0
    %481 = vmatpush1.msra.mxu0 %v445
    %482 = vmatprep.subr.mxu0 0.0
    %483 = vmatpush2.msra.mxu0 0.0
    %484 = vmatprep.subr.mxu0 0.0
    %485 = vmatpush2.msra.mxu0 0.0
    %486 = vmatprep.subr.mxu0 0.0
    %487 = vmatpush2.msra.mxu0 0.0
    %488 = vmatprep.subr.mxu0 0.0
    %489 = vmatpush2.msra.mxu0 0.0
    %490 = vmatprep.subr.mxu0 0.0
    %491 = vmatpush2.msra.mxu0 0.0
    %492 = vmatprep.subr.mxu0 0.0
    %493 = vmatpush2.msra.mxu0 0.0
    %494 = vmatprep.subr.mxu0 0.0
    %495 = vmatpush2.msra.mxu0 0.0
    %496 = vmatprep.subr.mxu0 0.0
    %497 = vmatpush2.msra.mxu0 0.0
    %498 = vmatprep.subr.mxu0 0.0
    %499 = vmatpush2.msra.mxu0 0.0
    %500 = vmatprep.subr.mxu0 0.0
    %501 = vmatpush2.msra.mxu0 0.0
    %502 = vmatprep.subr.mxu0 0.0
    %503 = vmatpush2.msra.mxu0 0.0
    %504 = vmatprep.subr.mxu0 0.0
    %505 = vmatpush2.msra.mxu0 0.0
    %506 = vmatprep.subr.mxu0 0.0
    %507 = vmatpush2.msra.mxu0 0.0
    %508 = vmatprep.subr.mxu0 0.0
    %509 = vmatpush2.msra.mxu0 0.0
    %510 = vmatprep.subr.mxu0 0.0
    %511 = vmatpush2.msra.mxu0 0.0
    %512 = vmatprep.subr.mxu0 0.0
    %513 = vmatpush2.msra.mxu0 0.0
    %514 = vmatprep.mubr.f32.mxu0 0.0
    %515 = vmatmul.mubr.f32.gmra.mxu0 %v448
    %v516 = vpop.f32.mrf.mxu0
    %v517 = vadd.f32 0.0, %v516
    %v518 = vpop.f32.mrf.mxu0
    %519 = vdwg.mxu0
    %v521 = vsel %vm193, %v517, 0
    %523 = vmatprep.subr.mxu0 0.0
    %524 = vmatpush1.msra.mxu0 0.0
    %525 = vmatprep.subr.mxu0 0.0
    %526 = vmatpush1.msra.mxu0 0.0
    %527 = vmatprep.subr.mxu0 0.0
    %528 = vmatpush1.msra.mxu0 0.0
    %529 = vmatprep.subr.mxu0 0.0
    %530 = vmatpush1.msra.mxu0 0.0
    %531 = vmatprep.subr.mxu0 0.0
    %532 = vmatpush1.msra.mxu0 0.0
    %533 = vmatprep.subr.mxu0 0.0
    %534 = vmatpush1.msra.mxu0 0.0
    %535 = vmatprep.subr.mxu0 0.0
    %536 = vmatpush1.msra.mxu0 0.0
    %537 = vmatprep.subr.mxu0 0.0
    %538 = vmatpush1.msra.mxu0 0.0
    %539 = vmatprep.subr.mxu0 0.0
    %540 = vmatpush1.msra.mxu0 0.0
    %541 = vmatprep.subr.mxu0 0.0
    %542 = vmatpush1.msra.mxu0 0.0
    %543 = vmatprep.subr.mxu0 0.0
    %544 = vmatpush1.msra.mxu0 0.0
    %545 = vmatprep.subr.mxu0 0.0
    %546 = vmatpush1.msra.mxu0 0.0
    %547 = vmatprep.subr.mxu0 0.0
    %548 = vmatpush1.msra.mxu0 0.0
    %549 = vmatprep.subr.mxu0 0.0
    %550 = vmatpush1.msra.mxu0 0.0
    %551 = vmatprep.subr.mxu0 0.0
    %552 = vmatpush1.msra.mxu0 0.0
    %553 = vmatprep.subr.mxu0 0.0
    %554 = vmatpush1.msra.mxu0 %v73
    %555 = vmatprep.subr.mxu0 0.0
    %556 = vmatpush2.msra.mxu0 0.0
    %557 = vmatprep.subr.mxu0 0.0
    %558 = vmatpush2.msra.mxu0 0.0
    %559 = vmatprep.subr.mxu0 0.0
    %560 = vmatpush2.msra.mxu0 0.0
    %561 = vmatprep.subr.mxu0 0.0
    %562 = vmatpush2.msra.mxu0 0.0
    %563 = vmatprep.subr.mxu0 0.0
    %564 = vmatpush2.msra.mxu0 0.0
    %565 = vmatprep.subr.mxu0 0.0
    %566 = vmatpush2.msra.mxu0 0.0
    %567 = vmatprep.subr.mxu0 0.0
    %568 = vmatpush2.msra.mxu0 0.0
    %569 = vmatprep.subr.mxu0 0.0
    %570 = vmatpush2.msra.mxu0 0.0
    %571 = vmatprep.subr.mxu0 0.0
    %572 = vmatpush2.msra.mxu0 0.0
    %573 = vmatprep.subr.mxu0 0.0
    %574 = vmatpush2.msra.mxu0 0.0
    %575 = vmatprep.subr.mxu0 0.0
    %576 = vmatpush2.msra.mxu0 0.0
    %577 = vmatprep.subr.mxu0 0.0
    %578 = vmatpush2.msra.mxu0 0.0
    %579 = vmatprep.subr.mxu0 0.0
    %580 = vmatpush2.msra.mxu0 0.0
    %581 = vmatprep.subr.mxu0 0.0
    %582 = vmatpush2.msra.mxu0 0.0
    %583 = vmatprep.subr.mxu0 0.0
    %584 = vmatpush2.msra.mxu0 0.0
    %585 = vmatprep.subr.mxu0 0.0
    %586 = vmatpush2.msra.mxu0 0.0
    %587 = vmatprep.mubr.f32.mxu0 0.0
    %588 = vmatmul.mubr.f32.gmra.mxu0 %v521
    %v589 = vpop.f32.mrf.mxu0
    %v590 = vadd.f32 0.0, %v589
    %v591 = vpop.f32.mrf.mxu0
    %592 = vdwg.mxu0
    %v594 = vsel %vm193, %v352, 0
    %596 = vmatprep.subr.mxu0 0.0
    %597 = vmatpush1.msra.mxu0 0.0
    %598 = vmatprep.subr.mxu0 0.0
    %599 = vmatpush1.msra.mxu0 0.0
    %600 = vmatprep.subr.mxu0 0.0
    %601 = vmatpush1.msra.mxu0 0.0
    %602 = vmatprep.subr.mxu0 0.0
    %603 = vmatpush1.msra.mxu0 0.0
    %604 = vmatprep.subr.mxu0 0.0
    %605 = vmatpush1.msra.mxu0 0.0
    %606 = vmatprep.subr.mxu0 0.0
    %607 = vmatpush1.msra.mxu0 0.0
    %608 = vmatprep.subr.mxu0 0.0
    %609 = vmatpush1.msra.mxu0 0.0
    %610 = vmatprep.subr.mxu0 0.0
    %611 = vmatpush1.msra.mxu0 0.0
    %612 = vmatprep.subr.mxu0 0.0
    %613 = vmatpush1.msra.mxu0 0.0
    %614 = vmatprep.subr.mxu0 0.0
    %615 = vmatpush1.msra.mxu0 0.0
    %616 = vmatprep.subr.mxu0 0.0
    %617 = vmatpush1.msra.mxu0 0.0
    %618 = vmatprep.subr.mxu0 0.0
    %619 = vmatpush1.msra.mxu0 0.0
    %620 = vmatprep.subr.mxu0 0.0
    %621 = vmatpush1.msra.mxu0 0.0
    %622 = vmatprep.subr.mxu0 0.0
    %623 = vmatpush1.msra.mxu0 0.0
    %624 = vmatprep.subr.mxu0 0.0
    %625 = vmatpush1.msra.mxu0 0.0
    %626 = vmatprep.subr.mxu0 0.0
    %627 = vmatpush1.msra.mxu0 %v72
    %628 = vmatprep.subr.mxu0 0.0
    %629 = vmatpush2.msra.mxu0 0.0
    %630 = vmatprep.subr.mxu0 0.0
    %631 = vmatpush2.msra.mxu0 0.0
    %632 = vmatprep.subr.mxu0 0.0
    %633 = vmatpush2.msra.mxu0 0.0
    %634 = vmatprep.subr.mxu0 0.0
    %635 = vmatpush2.msra.mxu0 0.0
    %636 = vmatprep.subr.mxu0 0.0
    %637 = vmatpush2.msra.mxu0 0.0
    %638 = vmatprep.subr.mxu0 0.0
    %639 = vmatpush2.msra.mxu0 0.0
    %640 = vmatprep.subr.mxu0 0.0
    %641 = vmatpush2.msra.mxu0 0.0
    %642 = vmatprep.subr.mxu0 0.0
    %643 = vmatpush2.msra.mxu0 0.0
    %644 = vmatprep.subr.mxu0 0.0
    %645 = vmatpush2.msra.mxu0 0.0
    %646 = vmatprep.subr.mxu0 0.0
    %647 = vmatpush2.msra.mxu0 0.0
    %648 = vmatprep.subr.mxu0 0.0
    %649 = vmatpush2.msra.mxu0 0.0
    %650 = vmatprep.subr.mxu0 0.0
    %651 = vmatpush2.msra.mxu0 0.0
    %652 = vmatprep.subr.mxu0 0.0
    %653 = vmatpush2.msra.mxu0 0.0
    %654 = vmatprep.subr.mxu0 0.0
    %655 = vmatpush2.msra.mxu0 0.0
    %656 = vmatprep.subr.mxu0 0.0
    %657 = vmatpush2.msra.mxu0 0.0
    %658 = vmatprep.subr.mxu0 0.0
    %659 = vmatpush2.msra.mxu0 0.0
    %660 = vmatprep.mubr.f32.mxu0 0.0
    %661 = vmatmul.mubr.f32.gmra.mxu0 %v594
    %v662 = vpop.f32.mrf.mxu0
    %v663 = vadd.f32 %v590, %v662
    %v664 = vpop.f32.mrf.mxu0
    %665 = vdwg.mxu0
    %666 = vrot.lane.b32.xlu0 %v184, 112
    %v667 = vpop.permute.xlu0 %666
    %668 = vrot.lane.b32.xlu0 %v184, 80
    %v669 = vpop.permute.xlu0 %668
    %v670 = vsel %vm193, %v667, 0
    %v672 = vsel %vm193, %v669, 0
    %674 = vmatprep.subr.mxu0 0.0
    %675 = vmatpush1.xpose.msra.mxu0 0.0
    %676 = vmatprep.subr.mxu0 0.0
    %677 = vmatpush1.xpose.msra.mxu0 0.0
    %678 = vmatprep.subr.mxu0 0.0
    %679 = vmatpush1.xpose.msra.mxu0 0.0
    %680 = vmatprep.subr.mxu0 0.0
    %681 = vmatpush1.xpose.msra.mxu0 0.0
    %682 = vmatprep.subr.mxu0 0.0
    %683 = vmatpush1.xpose.msra.mxu0 0.0
    %684 = vmatprep.subr.mxu0 0.0
    %685 = vmatpush1.xpose.msra.mxu0 0.0
    %686 = vmatprep.subr.mxu0 0.0
    %687 = vmatpush1.xpose.msra.mxu0 0.0
    %688 = vmatprep.subr.mxu0 0.0
    %689 = vmatpush1.xpose.msra.mxu0 0.0
    %690 = vmatprep.subr.mxu0 0.0
    %691 = vmatpush1.xpose.msra.mxu0 0.0
    %692 = vmatprep.subr.mxu0 0.0
    %693 = vmatpush1.xpose.msra.mxu0 0.0
    %694 = vmatprep.subr.mxu0 0.0
    %695 = vmatpush1.xpose.msra.mxu0 0.0
    %696 = vmatprep.subr.mxu0 0.0
    %697 = vmatpush1.xpose.msra.mxu0 0.0
    %698 = vmatprep.subr.mxu0 0.0
    %699 = vmatpush1.xpose.msra.mxu0 0.0
    %700 = vmatprep.subr.mxu0 0.0
    %701 = vmatpush1.xpose.msra.mxu0 0.0
    %702 = vmatprep.subr.mxu0 0.0
    %703 = vmatpush1.xpose.msra.mxu0 0.0
    %704 = vmatprep.subr.mxu0 0.0
    %705 = vmatpush1.xpose.msra.mxu0 %v672
    %706 = vmatprep.subr.mxu0 0.0
    %707 = vmatpush2.xpose.msra.mxu0 0.0
    %708 = vmatprep.subr.mxu0 0.0
    %709 = vmatpush2.xpose.msra.mxu0 0.0
    %710 = vmatprep.subr.mxu0 0.0
    %711 = vmatpush2.xpose.msra.mxu0 0.0
    %712 = vmatprep.subr.mxu0 0.0
    %713 = vmatpush2.xpose.msra.mxu0 0.0
    %714 = vmatprep.subr.mxu0 0.0
    %715 = vmatpush2.xpose.msra.mxu0 0.0
    %716 = vmatprep.subr.mxu0 0.0
    %717 = vmatpush2.xpose.msra.mxu0 0.0
    %718 = vmatprep.subr.mxu0 0.0
    %719 = vmatpush2.xpose.msra.mxu0 0.0
    %720 = vmatprep.subr.mxu0 0.0
    %721 = vmatpush2.xpose.msra.mxu0 0.0
    %722 = vmatprep.subr.mxu0 0.0
    %723 = vmatpush2.xpose.msra.mxu0 0.0
    %724 = vmatprep.subr.mxu0 0.0
    %725 = vmatpush2.xpose.msra.mxu0 0.0
    %726 = vmatprep.subr.mxu0 0.0
    %727 = vmatpush2.xpose.msra.mxu0 0.0
    %728 = vmatprep.subr.mxu0 0.0
    %729 = vmatpush2.xpose.msra.mxu0 0.0
    %730 = vmatprep.subr.mxu0 0.0
    %731 = vmatpush2.xpose.msra.mxu0 0.0
    %732 = vmatprep.subr.mxu0 0.0
    %733 = vmatpush2.xpose.msra.mxu0 0.0
    %734 = vmatprep.subr.mxu0 0.0
    %735 = vmatpush2.xpose.msra.mxu0 0.0
    %736 = vmatprep.subr.mxu0 0.0
    %737 = vmatpush2.xpose.msra.mxu0 0.0
    %738 = vmatprep.mubr.f32.mxu0 0.0
    %739 = vmatmul.mubr.f32.gmra.mxu0 %v670
    %v740 = vpop.f32.mrf.mxu0
    %v741 = vadd.f32 %v68, %v740
    %v742 = vpop.f32.mrf.mxu0
    %743 = vdwg.mxu0
    %v744 = vsel %vm193, %v741, -inf
    %745 = vmax.xlane.f32.xlu0 %v744
    %v746 = vpop.xlane.xlu0 %745
    %v747 = vsub.f32 %v741, %v746
    %v748 = vmul.f32 %v747, 1.442695
    %v749 = vpow.pop %v748
    %v750 = vsel %vm193, %v749, 0.0
    %751 = vadd.xlane.f32.xlu0 %v750
    %v752 = vpop.xlane.xlu0 %751
    %v753 = vrcp.pop %v752
    %v754 = vmul.f32 %v749, %v753
    %755 = vrot.lane.b32.xlu0 %v184, 48
    %v756 = vpop.permute.xlu0 %755
    %v759 = vsel %vm193, %v754, 0
    %761 = vmatprep.subr.mxu0 0.0
    %762 = vmatpush1.msra.mxu0 0.0
    %763 = vmatprep.subr.mxu0 0.0
    %764 = vmatpush1.msra.mxu0 0.0
    %765 = vmatprep.subr.mxu0 0.0
    %766 = vmatpush1.msra.mxu0 0.0
    %767 = vmatprep.subr.mxu0 0.0
    %768 = vmatpush1.msra.mxu0 0.0
    %769 = vmatprep.subr.mxu0 0.0
    %770 = vmatpush1.msra.mxu0 0.0
    %771 = vmatprep.subr.mxu0 0.0
    %772 = vmatpush1.msra.mxu0 0.0
    %773 = vmatprep.subr.mxu0 0.0
    %774 = vmatpush1.msra.mxu0 0.0
    %775 = vmatprep.subr.mxu0 0.0
    %776 = vmatpush1.msra.mxu0 0.0
    %777 = vmatprep.subr.mxu0 0.0
    %778 = vmatpush1.msra.mxu0 0.0
    %779 = vmatprep.subr.mxu0 0.0
    %780 = vmatpush1.msra.mxu0 0.0
    %781 = vmatprep.subr.mxu0 0.0
    %782 = vmatpush1.msra.mxu0 0.0
    %783 = vmatprep.subr.mxu0 0.0
    %784 = vmatpush1.msra.mxu0 0.0
    %785 = vmatprep.subr.mxu0 0.0
    %786 = vmatpush1.msra.mxu0 0.0
    %787 = vmatprep.subr.mxu0 0.0
    %788 = vmatpush1.msra.mxu0 0.0
    %789 = vmatprep.subr.mxu0 0.0
    %790 = vmatpush1.msra.mxu0 0.0
    %791 = vmatprep.subr.mxu0 0.0
    %792 = vmatpush1.msra.mxu0 %v756
    %793 = vmatprep.subr.mxu0 0.0
    %794 = vmatpush2.msra.mxu0 0.0
    %795 = vmatprep.subr.mxu0 0.0
    %796 = vmatpush2.msra.mxu0 0.0
    %797 = vmatprep.subr.mxu0 0.0
    %798 = vmatpush2.msra.mxu0 0.0
    %799 = vmatprep.subr.mxu0 0.0
    %800 = vmatpush2.msra.mxu0 0.0
    %801 = vmatprep.subr.mxu0 0.0
    %802 = vmatpush2.msra.mxu0 0.0
    %803 = vmatprep.subr.mxu0 0.0
    %804 = vmatpush2.msra.mxu0 0.0
    %805 = vmatprep.subr.mxu0 0.0
    %806 = vmatpush2.msra.mxu0 0.0
    %807 = vmatprep.subr.mxu0 0.0
    %808 = vmatpush2.msra.mxu0 0.0
    %809 = vmatprep.subr.mxu0 0.0
    %810 = vmatpush2.msra.mxu0 0.0
    %811 = vmatprep.subr.mxu0 0.0
    %812 = vmatpush2.msra.mxu0 0.0
    %813 = vmatprep.subr.mxu0 0.0
    %814 = vmatpush2.msra.mxu0 0.0
    %815 = vmatprep.subr.mxu0 0.0
    %816 = vmatpush2.msra.mxu0 0.0
    %817 = vmatprep.subr.mxu0 0.0
    %818 = vmatpush2.msra.mxu0 0.0
    %819 = vmatprep.subr.mxu0 0.0
    %820 = vmatpush2.msra.mxu0 0.0
    %821 = vmatprep.subr.mxu0 0.0
    %822 = vmatpush2.msra.mxu0 0.0
    %823 = vmatprep.subr.mxu0 0.0
    %824 = vmatpush2.msra.mxu0 0.0
    %825 = vmatprep.mubr.f32.mxu0 0.0
    %826 = vmatmul.mubr.f32.gmra.mxu0 %v759
    %v827 = vpop.f32.mrf.mxu0
    %v828 = vadd.f32 0.0, %v827
    %v829 = vpop.f32.mrf.mxu0
    %830 = vdwg.mxu0
    %v832 = vsel %vm193, %v828, 0
    %834 = vmatprep.subr.mxu0 0.0
    %835 = vmatpush1.msra.mxu0 0.0
    %836 = vmatprep.subr.mxu0 0.0
    %837 = vmatpush1.msra.mxu0 0.0
    %838 = vmatprep.subr.mxu0 0.0
    %839 = vmatpush1.msra.mxu0 0.0
    %840 = vmatprep.subr.mxu0 0.0
    %841 = vmatpush1.msra.mxu0 0.0
    %842 = vmatprep.subr.mxu0 0.0
    %843 = vmatpush1.msra.mxu0 0.0
    %844 = vmatprep.subr.mxu0 0.0
    %845 = vmatpush1.msra.mxu0 0.0
    %846 = vmatprep.subr.mxu0 0.0
    %847 = vmatpush1.msra.mxu0 0.0
    %848 = vmatprep.subr.mxu0 0.0
    %849 = vmatpush1.msra.mxu0 0.0
    %850 = vmatprep.subr.mxu0 0.0
    %851 = vmatpush1.msra.mxu0 0.0
    %852 = vmatprep.subr.mxu0 0.0
    %853 = vmatpush1.msra.mxu0 0.0
    %854 = vmatprep.subr.mxu0 0.0
    %855 = vmatpush1.msra.mxu0 0.0
    %856 = vmatprep.subr.mxu0 0.0
    %857 = vmatpush1.msra.mxu0 0.0
    %858 = vmatprep.subr.mxu0 0.0
    %859 = vmatpush1.msra.mxu0 0.0
    %860 = vmatprep.subr.mxu0 0.0
    %861 = vmatpush1.msra.mxu0 0.0
    %862 = vmatprep.subr.mxu0 0.0
    %863 = vmatpush1.msra.mxu0 0.0
    %864 = vmatprep.subr.mxu0 0.0
    %865 = vmatpush1.msra.mxu0 %v74
    %866 = vmatprep.subr.mxu0 0.0
    %867 = vmatpush2.msra.mxu0 0.0
    %868 = vmatprep.subr.mxu0 0.0
    %869 = vmatpush2.msra.mxu0 0.0
    %870 = vmatprep.subr.mxu0 0.0
    %871 = vmatpush2.msra.mxu0 0.0
    %872 = vmatprep.subr.mxu0 0.0
    %873 = vmatpush2.msra.mxu0 0.0
    %874 = vmatprep.subr.mxu0 0.0
    %875 = vmatpush2.msra.mxu0 0.0
    %876 = vmatprep.subr.mxu0 0.0
    %877 = vmatpush2.msra.mxu0 0.0
    %878 = vmatprep.subr.mxu0 0.0
    %879 = vmatpush2.msra.mxu0 0.0
    %880 = vmatprep.subr.mxu0 0.0
    %881 = vmatpush2.msra.mxu0 0.0
    %882 = vmatprep.subr.mxu0 0.0
    %883 = vmatpush2.msra.mxu0 0.0
    %884 = vmatprep.subr.mxu0 0.0
    %885 = vmatpush2.msra.mxu0 0.0
    %886 = vmatprep.subr.mxu0 0.0
    %887 = vmatpush2.msra.mxu0 0.0
    %888 = vmatprep.subr.mxu0 0.0
    %889 = vmatpush2.msra.mxu0 0.0
    %890 = vmatprep.subr.mxu0 0.0
    %891 = vmatpush2.msra.mxu0 0.0
    %892 = vmatprep.subr.mxu0 0.0
    %893 = vmatpush2.msra.mxu0 0.0
    %894 = vmatprep.subr.mxu0 0.0
    %895 = vmatpush2.msra.mxu0 0.0
    %896 = vmatprep.subr.mxu0 0.0
    %897 = vmatpush2.msra.mxu0 0.0
    %898 = vmatprep.mubr.f32.mxu0 0.0
    %899 = vmatmul.mubr.f32.gmra.mxu0 %v832
    %v900 = vpop.f32.mrf.mxu0
    %v901 = vadd.f32 0.0, %v900
    %v902 = vpop.f32.mrf.mxu0
    %903 = vdwg.mxu0
    %v904 = vadd.f32 %v663, %v901
    %905 = vrot.lane.b32.xlu0 %v184, 104
    %v906 = vpop.permute.xlu0 %905
    %907 = vrot.lane.b32.xlu0 %v184, 72
    %v908 = vpop.permute.xlu0 %907
    %v909 = vsel %vm193, %v906, 0
    %v911 = vsel %vm193, %v908, 0
    %913 = vmatprep.subr.mxu0 0.0
    %914 = vmatpush1.xpose.msra.mxu0 0.0
    %915 = vmatprep.subr.mxu0 0.0
    %916 = vmatpush1.xpose.msra.mxu0 0.0
    %917 = vmatprep.subr.mxu0 0.0
    %918 = vmatpush1.xpose.msra.mxu0 0.0
    %919 = vmatprep.subr.mxu0 0.0
    %920 = vmatpush1.xpose.msra.mxu0 0.0
    %921 = vmatprep.subr.mxu0 0.0
    %922 = vmatpush1.xpose.msra.mxu0 0.0
    %923 = vmatprep.subr.mxu0 0.0
    %924 = vmatpush1.xpose.msra.mxu0 0.0
    %925 = vmatprep.subr.mxu0 0.0
    %926 = vmatpush1.xpose.msra.mxu0 0.0
    %927 = vmatprep.subr.mxu0 0.0
    %928 = vmatpush1.xpose.msra.mxu0 0.0
    %929 = vmatprep.subr.mxu0 0.0
    %930 = vmatpush1.xpose.msra.mxu0 0.0
    %931 = vmatprep.subr.mxu0 0.0
    %932 = vmatpush1.xpose.msra.mxu0 0.0
    %933 = vmatprep.subr.mxu0 0.0
    %934 = vmatpush1.xpose.msra.mxu0 0.0
    %935 = vmatprep.subr.mxu0 0.0
    %936 = vmatpush1.xpose.msra.mxu0 0.0
    %937 = vmatprep.subr.mxu0 0.0
    %938 = vmatpush1.xpose.msra.mxu0 0.0
    %939 = vmatprep.subr.mxu0 0.0
    %940 = vmatpush1.xpose.msra.mxu0 0.0
    %941 = vmatprep.subr.mxu0 0.0
    %942 = vmatpush1.xpose.msra.mxu0 0.0
    %943 = vmatprep.subr.mxu0 0.0
    %944 = vmatpush1.xpose.msra.mxu0 %v911
    %945 = vmatprep.subr.mxu0 0.0
    %946 = vmatpush2.xpose.msra.mxu0 0.0
    %947 = vmatprep.subr.mxu0 0.0
    %948 = vmatpush2.xpose.msra.mxu0 0.0
    %949 = vmatprep.subr.mxu0 0.0
    %950 = vmatpush2.xpose.msra.mxu0 0.0
    %951 = vmatprep.subr.mxu0 0.0
    %952 = vmatpush2.xpose.msra.mxu0 0.0
    %953 = vmatprep.subr.mxu0 0.0
    %954 = vmatpush2.xpose.msra.mxu0 0.0
    %955 = vmatprep.subr.mxu0 0.0
    %956 = vmatpush2.xpose.msra.mxu0 0.0
    %957 = vmatprep.subr.mxu0 0.0
    %958 = vmatpush2.xpose.msra.mxu0 0.0
    %959 = vmatprep.subr.mxu0 0.0
    %960 = vmatpush2.xpose.msra.mxu0 0.0
    %961 = vmatprep.subr.mxu0 0.0
    %962 = vmatpush2.xpose.msra.mxu0 0.0
    %963 = vmatprep.subr.mxu0 0.0
    %964 = vmatpush2.xpose.msra.mxu0 0.0
    %965 = vmatprep.subr.mxu0 0.0
    %966 = vmatpush2.xpose.msra.mxu0 0.0
    %967 = vmatprep.subr.mxu0 0.0
    %968 = vmatpush2.xpose.msra.mxu0 0.0
    %969 = vmatprep.subr.mxu0 0.0
    %970 = vmatpush2.xpose.msra.mxu0 0.0
    %971 = vmatprep.subr.mxu0 0.0
    %972 = vmatpush2.xpose.msra.mxu0 0.0
    %973 = vmatprep.subr.mxu0 0.0
    %974 = vmatpush2.xpose.msra.mxu0 0.0
    %975 = vmatprep.subr.mxu0 0.0
    %976 = vmatpush2.xpose.msra.mxu0 0.0
    %977 = vmatprep.mubr.f32.mxu0 0.0
    %978 = vmatmul.mubr.f32.gmra.mxu0 %v909
    %v979 = vpop.f32.mrf.mxu0
    %v980 = vadd.f32 %v68, %v979
    %v981 = vpop.f32.mrf.mxu0
    %982 = vdwg.mxu0
    %v983 = vsel %vm193, %v980, -inf
    %984 = vmax.xlane.f32.xlu0 %v983
    %v985 = vpop.xlane.xlu0 %984
    %v986 = vsub.f32 %v980, %v985
    %v987 = vmul.f32 %v986, 1.442695
    %v988 = vpow.pop %v987
    %v989 = vsel %vm193, %v988, 0.0
    %990 = vadd.xlane.f32.xlu0 %v989
    %v991 = vpop.xlane.xlu0 %990
    %v992 = vrcp.pop %v991
    %v993 = vmul.f32 %v988, %v992
    %994 = vrot.lane.b32.xlu0 %v184, 40
    %v995 = vpop.permute.xlu0 %994
    %v998 = vsel %vm193, %v993, 0
    %1000 = vmatprep.subr.mxu0 0.0
    %1001 = vmatpush1.msra.mxu0 0.0
    %1002 = vmatprep.subr.mxu0 0.0
    %1003 = vmatpush1.msra.mxu0 0.0
    %1004 = vmatprep.subr.mxu0 0.0
    %1005 = vmatpush1.msra.mxu0 0.0
    %1006 = vmatprep.subr.mxu0 0.0
    %1007 = vmatpush1.msra.mxu0 0.0
    %1008 = vmatprep.subr.mxu0 0.0
    %1009 = vmatpush1.msra.mxu0 0.0
    %1010 = vmatprep.subr.mxu0 0.0
    %1011 = vmatpush1.msra.mxu0 0.0
    %1012 = vmatprep.subr.mxu0 0.0
    %1013 = vmatpush1.msra.mxu0 0.0
    %1014 = vmatprep.subr.mxu0 0.0
    %1015 = vmatpush1.msra.mxu0 0.0
    %1016 = vmatprep.subr.mxu0 0.0
    %1017 = vmatpush1.msra.mxu0 0.0
    %1018 = vmatprep.subr.mxu0 0.0
    %1019 = vmatpush1.msra.mxu0 0.0
    %1020 = vmatprep.subr.mxu0 0.0
    %1021 = vmatpush1.msra.mxu0 0.0
    %1022 = vmatprep.subr.mxu0 0.0
    %1023 = vmatpush1.msra.mxu0 0.0
    %1024 = vmatprep.subr.mxu0 0.0
    %1025 = vmatpush1.msra.mxu0 0.0
    %1026 = vmatprep.subr.mxu0 0.0
    %1027 = vmatpush1.msra.mxu0 0.0
    %1028 = vmatprep.subr.mxu0 0.0
    %1029 = vmatpush1.msra.mxu0 0.0
    %1030 = vmatprep.subr.mxu0 0.0
    %1031 = vmatpush1.msra.mxu0 %v995
    %1032 = vmatprep.subr.mxu0 0.0
    %1033 = vmatpush2.msra.mxu0 0.0
    %1034 = vmatprep.subr.mxu0 0.0
    %1035 = vmatpush2.msra.mxu0 0.0
    %1036 = vmatprep.subr.mxu0 0.0
    %1037 = vmatpush2.msra.mxu0 0.0
    %1038 = vmatprep.subr.mxu0 0.0
    %1039 = vmatpush2.msra.mxu0 0.0
    %1040 = vmatprep.subr.mxu0 0.0
    %1041 = vmatpush2.msra.mxu0 0.0
    %1042 = vmatprep.subr.mxu0 0.0
    %1043 = vmatpush2.msra.mxu0 0.0
    %1044 = vmatprep.subr.mxu0 0.0
    %1045 = vmatpush2.msra.mxu0 0.0
    %1046 = vmatprep.subr.mxu0 0.0
    %1047 = vmatpush2.msra.mxu0 0.0
    %1048 = vmatprep.subr.mxu0 0.0
    %1049 = vmatpush2.msra.mxu0 0.0
    %1050 = vmatprep.subr.mxu0 0.0
    %1051 = vmatpush2.msra.mxu0 0.0
    %1052 = vmatprep.subr.mxu0 0.0
    %1053 = vmatpush2.msra.mxu0 0.0
    %1054 = vmatprep.subr.mxu0 0.0
    %1055 = vmatpush2.msra.mxu0 0.0
    %1056 = vmatprep.subr.mxu0 0.0
    %1057 = vmatpush2.msra.mxu0 0.0
    %1058 = vmatprep.subr.mxu0 0.0
    %1059 = vmatpush2.msra.mxu0 0.0
    %1060 = vmatprep.subr.mxu0 0.0
    %1061 = vmatpush2.msra.mxu0 0.0
    %1062 = vmatprep.subr.mxu0 0.0
    %1063 = vmatpush2.msra.mxu0 0.0
    %1064 = vmatprep.mubr.f32.mxu0 0.0
    %1065 = vmatmul.mubr.f32.gmra.mxu0 %v998
    %v1066 = vpop.f32.mrf.mxu0
    %v1067 = vadd.f32 0.0, %v1066
    %v1068 = vpop.f32.mrf.mxu0
    %1069 = vdwg.mxu0
    %v1071 = vsel %vm193, %v1067, 0
    %1073 = vmatprep.subr.mxu0 0.0
    %1074 = vmatpush1.msra.mxu0 0.0
    %1075 = vmatprep.subr.mxu0 0.0
    %1076 = vmatpush1.msra.mxu0 0.0
    %1077 = vmatprep.subr.mxu0 0.0
    %1078 = vmatpush1.msra.mxu0 0.0
    %1079 = vmatprep.subr.mxu0 0.0
    %1080 = vmatpush1.msra.mxu0 0.0
    %1081 = vmatprep.subr.mxu0 0.0
    %1082 = vmatpush1.msra.mxu0 0.0
    %1083 = vmatprep.subr.mxu0 0.0
    %1084 = vmatpush1.msra.mxu0 0.0
    %1085 = vmatprep.subr.mxu0 0.0
    %1086 = vmatpush1.msra.mxu0 0.0
    %1087 = vmatprep.subr.mxu0 0.0
    %1088 = vmatpush1.msra.mxu0 0.0
    %1089 = vmatprep.subr.mxu0 0.0
    %1090 = vmatpush1.msra.mxu0 0.0
    %1091 = vmatprep.subr.mxu0 0.0
    %1092 = vmatpush1.msra.mxu0 0.0
    %1093 = vmatprep.subr.mxu0 0.0
    %1094 = vmatpush1.msra.mxu0 0.0
    %1095 = vmatprep.subr.mxu0 0.0
    %1096 = vmatpush1.msra.mxu0 0.0
    %1097 = vmatprep.subr.mxu0 0.0
    %1098 = vmatpush1.msra.mxu0 0.0
    %1099 = vmatprep.subr.mxu0 0.0
    %1100 = vmatpush1.msra.mxu0 0.0
    %1101 = vmatprep.subr.mxu0 0.0
    %1102 = vmatpush1.msra.mxu0 0.0
    %1103 = vmatprep.subr.mxu0 0.0
    %1104 = vmatpush1.msra.mxu0 %v75
    %1105 = vmatprep.subr.mxu0 0.0
    %1106 = vmatpush2.msra.mxu0 0.0
    %1107 = vmatprep.subr.mxu0 0.0
    %1108 = vmatpush2.msra.mxu0 0.0
    %1109 = vmatprep.subr.mxu0 0.0
    %1110 = vmatpush2.msra.mxu0 0.0
    %1111 = vmatprep.subr.mxu0 0.0
    %1112 = vmatpush2.msra.mxu0 0.0
    %1113 = vmatprep.subr.mxu0 0.0
    %1114 = vmatpush2.msra.mxu0 0.0
    %1115 = vmatprep.subr.mxu0 0.0
    %1116 = vmatpush2.msra.mxu0 0.0
    %1117 = vmatprep.subr.mxu0 0.0
    %1118 = vmatpush2.msra.mxu0 0.0
    %1119 = vmatprep.subr.mxu0 0.0
    %1120 = vmatpush2.msra.mxu0 0.0
    %1121 = vmatprep.subr.mxu0 0.0
    %1122 = vmatpush2.msra.mxu0 0.0
    %1123 = vmatprep.subr.mxu0 0.0
    %1124 = vmatpush2.msra.mxu0 0.0
    %1125 = vmatprep.subr.mxu0 0.0
    %1126 = vmatpush2.msra.mxu0 0.0
    %1127 = vmatprep.subr.mxu0 0.0
    %1128 = vmatpush2.msra.mxu0 0.0
    %1129 = vmatprep.subr.mxu0 0.0
    %1130 = vmatpush2.msra.mxu0 0.0
    %1131 = vmatprep.subr.mxu0 0.0
    %1132 = vmatpush2.msra.mxu0 0.0
    %1133 = vmatprep.subr.mxu0 0.0
    %1134 = vmatpush2.msra.mxu0 0.0
    %1135 = vmatprep.subr.mxu0 0.0
    %1136 = vmatpush2.msra.mxu0 0.0
    %1137 = vmatprep.mubr.f32.mxu0 0.0
    %1138 = vmatmul.mubr.f32.gmra.mxu0 %v1071
    %v1139 = vpop.f32.mrf.mxu0
    %v1140 = vadd.f32 0.0, %v1139
    %v1141 = vpop.f32.mrf.mxu0
    %1142 = vdwg.mxu0
    %v1143 = vadd.f32 %v904, %v1140
    %1145 = vrot.lane.b32.xlu0 %v187, 96
    %v1146 = vpop.permute.xlu0 %1145
    %v1147 = vsel %vm193, %v187, 0
    %v1149 = vsel %vm193, %v1146, 0
    %1151 = vmatprep.subr.mxu0 0.0
    %1152 = vmatpush1.xpose.msra.mxu0 0.0
    %1153 = vmatprep.subr.mxu0 0.0
    %1154 = vmatpush1.xpose.msra.mxu0 0.0
    %1155 = vmatprep.subr.mxu0 0.0
    %1156 = vmatpush1.xpose.msra.mxu0 0.0
    %1157 = vmatprep.subr.mxu0 0.0
    %1158 = vmatpush1.xpose.msra.mxu0 0.0
    %1159 = vmatprep.subr.mxu0 0.0
    %1160 = vmatpush1.xpose.msra.mxu0 0.0
    %1161 = vmatprep.subr.mxu0 0.0
    %1162 = vmatpush1.xpose.msra.mxu0 0.0
    %1163 = vmatprep.subr.mxu0 0.0
    %1164 = vmatpush1.xpose.msra.mxu0 0.0
    %1165 = vmatprep.subr.mxu0 0.0
    %1166 = vmatpush1.xpose.msra.mxu0 0.0
    %1167 = vmatprep.subr.mxu0 0.0
    %1168 = vmatpush1.xpose.msra.mxu0 0.0
    %1169 = vmatprep.subr.mxu0 0.0
    %1170 = vmatpush1.xpose.msra.mxu0 0.0
    %1171 = vmatprep.subr.mxu0 0.0
    %1172 = vmatpush1.xpose.msra.mxu0 0.0
    %1173 = vmatprep.subr.mxu0 0.0
    %1174 = vmatpush1.xpose.msra.mxu0 0.0
    %1175 = vmatprep.subr.mxu0 0.0
    %1176 = vmatpush1.xpose.msra.mxu0 0.0
    %1177 = vmatprep.subr.mxu0 0.0
    %1178 = vmatpush1.xpose.msra.mxu0 0.0
    %1179 = vmatprep.subr.mxu0 0.0
    %1180 = vmatpush1.xpose.msra.mxu0 0.0
    %1181 = vmatprep.subr.mxu0 0.0
    %1182 = vmatpush1.xpose.msra.mxu0 %v1149
    %1183 = vmatprep.subr.mxu0 0.0
    %1184 = vmatpush2.xpose.msra.mxu0 0.0
    %1185 = vmatprep.subr.mxu0 0.0
    %1186 = vmatpush2.xpose.msra.mxu0 0.0
    %1187 = vmatprep.subr.mxu0 0.0
    %1188 = vmatpush2.xpose.msra.mxu0 0.0
    %1189 = vmatprep.subr.mxu0 0.0
    %1190 = vmatpush2.xpose.msra.mxu0 0.0
    %1191 = vmatprep.subr.mxu0 0.0
    %1192 = vmatpush2.xpose.msra.mxu0 0.0
    %1193 = vmatprep.subr.mxu0 0.0
    %1194 = vmatpush2.xpose.msra.mxu0 0.0
    %1195 = vmatprep.subr.mxu0 0.0
    %1196 = vmatpush2.xpose.msra.mxu0 0.0
    %1197 = vmatprep.subr.mxu0 0.0
    %1198 = vmatpush2.xpose.msra.mxu0 0.0
    %1199 = vmatprep.subr.mxu0 0.0
    %1200 = vmatpush2.xpose.msra.mxu0 0.0
    %1201 = vmatprep.subr.mxu0 0.0
    %1202 = vmatpush2.xpose.msra.mxu0 0.0
    %1203 = vmatprep.subr.mxu0 0.0
    %1204 = vmatpush2.xpose.msra.mxu0 0.0
    %1205 = vmatprep.subr.mxu0 0.0
    %1206 = vmatpush2.xpose.msra.mxu0 0.0
    %1207 = vmatprep.subr.mxu0 0.0
    %1208 = vmatpush2.xpose.msra.mxu0 0.0
    %1209 = vmatprep.subr.mxu0 0.0
    %1210 = vmatpush2.xpose.msra.mxu0 0.0
    %1211 = vmatprep.subr.mxu0 0.0
    %1212 = vmatpush2.xpose.msra.mxu0 0.0
    %1213 = vmatprep.subr.mxu0 0.0
    %1214 = vmatpush2.xpose.msra.mxu0 0.0
    %1215 = vmatprep.mubr.f32.mxu0 0.0
    %1216 = vmatmul.mubr.f32.gmra.mxu0 %v1147
    %v1217 = vpop.f32.mrf.mxu0
    %v1218 = vadd.f32 %v68, %v1217
    %v1219 = vpop.f32.mrf.mxu0
    %1220 = vdwg.mxu0
    %v1221 = vsel %vm193, %v1218, -inf
    %1222 = vmax.xlane.f32.xlu0 %v1221
    %v1223 = vpop.xlane.xlu0 %1222
    %v1224 = vsub.f32 %v1218, %v1223
    %v1225 = vmul.f32 %v1224, 1.442695
    %v1226 = vpow.pop %v1225
    %v1227 = vsel %vm193, %v1226, 0.0
    %1228 = vadd.xlane.f32.xlu0 %v1227
    %v1229 = vpop.xlane.xlu0 %1228
    %v1230 = vrcp.pop %v1229
    %v1231 = vmul.f32 %v1226, %v1230
    %1232 = vrot.lane.b32.xlu0 %v187, 64
    %v1233 = vpop.permute.xlu0 %1232
    %v1236 = vsel %vm193, %v1231, 0
    %1238 = vmatprep.subr.mxu0 0.0
    %1239 = vmatpush1.msra.mxu0 0.0
    %1240 = vmatprep.subr.mxu0 0.0
    %1241 = vmatpush1.msra.mxu0 0.0
    %1242 = vmatprep.subr.mxu0 0.0
    %1243 = vmatpush1.msra.mxu0 0.0
    %1244 = vmatprep.subr.mxu0 0.0
    %1245 = vmatpush1.msra.mxu0 0.0
    %1246 = vmatprep.subr.mxu0 0.0
    %1247 = vmatpush1.msra.mxu0 0.0
    %1248 = vmatprep.subr.mxu0 0.0
    %1249 = vmatpush1.msra.mxu0 0.0
    %1250 = vmatprep.subr.mxu0 0.0
    %1251 = vmatpush1.msra.mxu0 0.0
    %1252 = vmatprep.subr.mxu0 0.0
    %1253 = vmatpush1.msra.mxu0 0.0
    %1254 = vmatprep.subr.mxu0 0.0
    %1255 = vmatpush1.msra.mxu0 0.0
    %1256 = vmatprep.subr.mxu0 0.0
    %1257 = vmatpush1.msra.mxu0 0.0
    %1258 = vmatprep.subr.mxu0 0.0
    %1259 = vmatpush1.msra.mxu0 0.0
    %1260 = vmatprep.subr.mxu0 0.0
    %1261 = vmatpush1.msra.mxu0 0.0
    %1262 = vmatprep.subr.mxu0 0.0
    %1263 = vmatpush1.msra.mxu0 0.0
    %1264 = vmatprep.subr.mxu0 0.0
    %1265 = vmatpush1.msra.mxu0 0.0
    %1266 = vmatprep.subr.mxu0 0.0
    %1267 = vmatpush1.msra.mxu0 0.0
    %1268 = vmatprep.subr.mxu0 0.0
    %1269 = vmatpush1.msra.mxu0 %v1233
    %1270 = vmatprep.subr.mxu0 0.0
    %1271 = vmatpush2.msra.mxu0 0.0
    %1272 = vmatprep.subr.mxu0 0.0
    %1273 = vmatpush2.msra.mxu0 0.0
    %1274 = vmatprep.subr.mxu0 0.0
    %1275 = vmatpush2.msra.mxu0 0.0
    %1276 = vmatprep.subr.mxu0 0.0
    %1277 = vmatpush2.msra.mxu0 0.0
    %1278 = vmatprep.subr.mxu0 0.0
    %1279 = vmatpush2.msra.mxu0 0.0
    %1280 = vmatprep.subr.mxu0 0.0
    %1281 = vmatpush2.msra.mxu0 0.0
    %1282 = vmatprep.subr.mxu0 0.0
    %1283 = vmatpush2.msra.mxu0 0.0
    %1284 = vmatprep.subr.mxu0 0.0
    %1285 = vmatpush2.msra.mxu0 0.0
    %1286 = vmatprep.subr.mxu0 0.0
    %1287 = vmatpush2.msra.mxu0 0.0
    %1288 = vmatprep.subr.mxu0 0.0
    %1289 = vmatpush2.msra.mxu0 0.0
    %1290 = vmatprep.subr.mxu0 0.0
    %1291 = vmatpush2.msra.mxu0 0.0
    %1292 = vmatprep.subr.mxu0 0.0
    %1293 = vmatpush2.msra.mxu0 0.0
    %1294 = vmatprep.subr.mxu0 0.0
    %1295 = vmatpush2.msra.mxu0 0.0
    %1296 = vmatprep.subr.mxu0 0.0
    %1297 = vmatpush2.msra.mxu0 0.0
    %1298 = vmatprep.subr.mxu0 0.0
    %1299 = vmatpush2.msra.mxu0 0.0
    %1300 = vmatprep.subr.mxu0 0.0
    %1301 = vmatpush2.msra.mxu0 0.0
    %1302 = vmatprep.mubr.f32.mxu0 0.0
    %1303 = vmatmul.mubr.f32.gmra.mxu0 %v1236
    %v1304 = vpop.f32.mrf.mxu0
    %v1305 = vadd.f32 0.0, %v1304
    %v1306 = vpop.f32.mrf.mxu0
    %1307 = vdwg.mxu0
    %1308 = vrot.lane.b32.xlu0 %v187, 120
    %v1309 = vpop.permute.xlu0 %1308
    %1310 = vrot.lane.b32.xlu0 %v187, 88
    %v1311 = vpop.permute.xlu0 %1310
    %v1312 = vsel %vm193, %v1309, 0
    %v1314 = vsel %vm193, %v1311, 0
    %1316 = vmatprep.subr.mxu0 0.0
    %1317 = vmatpush1.xpose.msra.mxu0 0.0
    %1318 = vmatprep.subr.mxu0 0.0
    %1319 = vmatpush1.xpose.msra.mxu0 0.0
    %1320 = vmatprep.subr.mxu0 0.0
    %1321 = vmatpush1.xpose.msra.mxu0 0.0
    %1322 = vmatprep.subr.mxu0 0.0
    %1323 = vmatpush1.xpose.msra.mxu0 0.0
    %1324 = vmatprep.subr.mxu0 0.0
    %1325 = vmatpush1.xpose.msra.mxu0 0.0
    %1326 = vmatprep.subr.mxu0 0.0
    %1327 = vmatpush1.xpose.msra.mxu0 0.0
    %1328 = vmatprep.subr.mxu0 0.0
    %1329 = vmatpush1.xpose.msra.mxu0 0.0
    %1330 = vmatprep.subr.mxu0 0.0
    %1331 = vmatpush1.xpose.msra.mxu0 0.0
    %1332 = vmatprep.subr.mxu0 0.0
    %1333 = vmatpush1.xpose.msra.mxu0 0.0
    %1334 = vmatprep.subr.mxu0 0.0
    %1335 = vmatpush1.xpose.msra.mxu0 0.0
    %1336 = vmatprep.subr.mxu0 0.0
    %1337 = vmatpush1.xpose.msra.mxu0 0.0
    %1338 = vmatprep.subr.mxu0 0.0
    %1339 = vmatpush1.xpose.msra.mxu0 0.0
    %1340 = vmatprep.subr.mxu0 0.0
    %1341 = vmatpush1.xpose.msra.mxu0 0.0
    %1342 = vmatprep.subr.mxu0 0.0
    %1343 = vmatpush1.xpose.msra.mxu0 0.0
    %1344 = vmatprep.subr.mxu0 0.0
    %1345 = vmatpush1.xpose.msra.mxu0 0.0
    %1346 = vmatprep.subr.mxu0 0.0
    %1347 = vmatpush1.xpose.msra.mxu0 %v1314
    %1348 = vmatprep.subr.mxu0 0.0
    %1349 = vmatpush2.xpose.msra.mxu0 0.0
    %1350 = vmatprep.subr.mxu0 0.0
    %1351 = vmatpush2.xpose.msra.mxu0 0.0
    %1352 = vmatprep.subr.mxu0 0.0
    %1353 = vmatpush2.xpose.msra.mxu0 0.0
    %1354 = vmatprep.subr.mxu0 0.0
    %1355 = vmatpush2.xpose.msra.mxu0 0.0
    %1356 = vmatprep.subr.mxu0 0.0
    %1357 = vmatpush2.xpose.msra.mxu0 0.0
    %1358 = vmatprep.subr.mxu0 0.0
    %1359 = vmatpush2.xpose.msra.mxu0 0.0
    %1360 = vmatprep.subr.mxu0 0.0
    %1361 = vmatpush2.xpose.msra.mxu0 0.0
    %1362 = vmatprep.subr.mxu0 0.0
    %1363 = vmatpush2.xpose.msra.mxu0 0.0
    %1364 = vmatprep.subr.mxu0 0.0
    %1365 = vmatpush2.xpose.msra.mxu0 0.0
    %1366 = vmatprep.subr.mxu0 0.0
    %1367 = vmatpush2.xpose.msra.mxu0 0.0
    %1368 = vmatprep.subr.mxu0 0.0
    %1369 = vmatpush2.xpose.msra.mxu0 0.0
    %1370 = vmatprep.subr.mxu0 0.0
    %1371 = vmatpush2.xpose.msra.mxu0 0.0
    %1372 = vmatprep.subr.mxu0 0.0
    %1373 = vmatpush2.xpose.msra.mxu0 0.0
    %1374 = vmatprep.subr.mxu0 0.0
    %1375 = vmatpush2.xpose.msra.mxu0 0.0
    %1376 = vmatprep.subr.mxu0 0.0
    %1377 = vmatpush2.xpose.msra.mxu0 0.0
    %1378 = vmatprep.subr.mxu0 0.0
    %1379 = vmatpush2.xpose.msra.mxu0 0.0
    %1380 = vmatprep.mubr.f32.mxu0 0.0
    %1381 = vmatmul.mubr.f32.gmra.mxu0 %v1312
    %v1382 = vpop.f32.mrf.mxu0
    %v1383 = vadd.f32 %v68, %v1382
    %v1384 = vpop.f32.mrf.mxu0
    %1385 = vdwg.mxu0
    %v1386 = vsel %vm193, %v1383, -inf
    %1387 = vmax.xlane.f32.xlu0 %v1386
    %v1388 = vpop.xlane.xlu0 %1387
    %v1389 = vsub.f32 %v1383, %v1388
    %v1390 = vmul.f32 %v1389, 1.442695
    %v1391 = vpow.pop %v1390
    %v1392 = vsel %vm193, %v1391, 0.0
    %1393 = vadd.xlane.f32.xlu0 %v1392
    %v1394 = vpop.xlane.xlu0 %1393
    %v1395 = vrcp.pop %v1394
    %v1396 = vmul.f32 %v1391, %v1395
    %1397 = vrot.lane.b32.xlu0 %v187, 56
    %v1398 = vpop.permute.xlu0 %1397
    %v1401 = vsel %vm193, %v1396, 0
    %1403 = vmatprep.subr.mxu0 0.0
    %1404 = vmatpush1.msra.mxu0 0.0
    %1405 = vmatprep.subr.mxu0 0.0
    %1406 = vmatpush1.msra.mxu0 0.0
    %1407 = vmatprep.subr.mxu0 0.0
    %1408 = vmatpush1.msra.mxu0 0.0
    %1409 = vmatprep.subr.mxu0 0.0
    %1410 = vmatpush1.msra.mxu0 0.0
    %1411 = vmatprep.subr.mxu0 0.0
    %1412 = vmatpush1.msra.mxu0 0.0
    %1413 = vmatprep.subr.mxu0 0.0
    %1414 = vmatpush1.msra.mxu0 0.0
    %1415 = vmatprep.subr.mxu0 0.0
    %1416 = vmatpush1.msra.mxu0 0.0
    %1417 = vmatprep.subr.mxu0 0.0
    %1418 = vmatpush1.msra.mxu0 0.0
    %1419 = vmatprep.subr.mxu0 0.0
    %1420 = vmatpush1.msra.mxu0 0.0
    %1421 = vmatprep.subr.mxu0 0.0
    %1422 = vmatpush1.msra.mxu0 0.0
    %1423 = vmatprep.subr.mxu0 0.0
    %1424 = vmatpush1.msra.mxu0 0.0
    %1425 = vmatprep.subr.mxu0 0.0
    %1426 = vmatpush1.msra.mxu0 0.0
    %1427 = vmatprep.subr.mxu0 0.0
    %1428 = vmatpush1.msra.mxu0 0.0
    %1429 = vmatprep.subr.mxu0 0.0
    %1430 = vmatpush1.msra.mxu0 0.0
    %1431 = vmatprep.subr.mxu0 0.0
    %1432 = vmatpush1.msra.mxu0 0.0
    %1433 = vmatprep.subr.mxu0 0.0
    %1434 = vmatpush1.msra.mxu0 %v1398
    %1435 = vmatprep.subr.mxu0 0.0
    %1436 = vmatpush2.msra.mxu0 0.0
    %1437 = vmatprep.subr.mxu0 0.0
    %1438 = vmatpush2.msra.mxu0 0.0
    %1439 = vmatprep.subr.mxu0 0.0
    %1440 = vmatpush2.msra.mxu0 0.0
    %1441 = vmatprep.subr.mxu0 0.0
    %1442 = vmatpush2.msra.mxu0 0.0
    %1443 = vmatprep.subr.mxu0 0.0
    %1444 = vmatpush2.msra.mxu0 0.0
    %1445 = vmatprep.subr.mxu0 0.0
    %1446 = vmatpush2.msra.mxu0 0.0
    %1447 = vmatprep.subr.mxu0 0.0
    %1448 = vmatpush2.msra.mxu0 0.0
    %1449 = vmatprep.subr.mxu0 0.0
    %1450 = vmatpush2.msra.mxu0 0.0
    %1451 = vmatprep.subr.mxu0 0.0
    %1452 = vmatpush2.msra.mxu0 0.0
    %1453 = vmatprep.subr.mxu0 0.0
    %1454 = vmatpush2.msra.mxu0 0.0
    %1455 = vmatprep.subr.mxu0 0.0
    %1456 = vmatpush2.msra.mxu0 0.0
    %1457 = vmatprep.subr.mxu0 0.0
    %1458 = vmatpush2.msra.mxu0 0.0
    %1459 = vmatprep.subr.mxu0 0.0
    %1460 = vmatpush2.msra.mxu0 0.0
    %1461 = vmatprep.subr.mxu0 0.0
    %1462 = vmatpush2.msra.mxu0 0.0
    %1463 = vmatprep.subr.mxu0 0.0
    %1464 = vmatpush2.msra.mxu0 0.0
    %1465 = vmatprep.subr.mxu0 0.0
    %1466 = vmatpush2.msra.mxu0 0.0
    %1467 = vmatprep.mubr.f32.mxu0 0.0
    %1468 = vmatmul.mubr.f32.gmra.mxu0 %v1401
    %v1469 = vpop.f32.mrf.mxu0
    %v1470 = vadd.f32 0.0, %v1469
    %v1471 = vpop.f32.mrf.mxu0
    %1472 = vdwg.mxu0
    %v1474 = vsel %vm193, %v1470, 0
    %1476 = vmatprep.subr.mxu0 0.0
    %1477 = vmatpush1.msra.mxu0 0.0
    %1478 = vmatprep.subr.mxu0 0.0
    %1479 = vmatpush1.msra.mxu0 0.0
    %1480 = vmatprep.subr.mxu0 0.0
    %1481 = vmatpush1.msra.mxu0 0.0
    %1482 = vmatprep.subr.mxu0 0.0
    %1483 = vmatpush1.msra.mxu0 0.0
    %1484 = vmatprep.subr.mxu0 0.0
    %1485 = vmatpush1.msra.mxu0 0.0
    %1486 = vmatprep.subr.mxu0 0.0
    %1487 = vmatpush1.msra.mxu0 0.0
    %1488 = vmatprep.subr.mxu0 0.0
    %1489 = vmatpush1.msra.mxu0 0.0
    %1490 = vmatprep.subr.mxu0 0.0
    %1491 = vmatpush1.msra.mxu0 0.0
    %1492 = vmatprep.subr.mxu0 0.0
    %1493 = vmatpush1.msra.mxu0 0.0
    %1494 = vmatprep.subr.mxu0 0.0
    %1495 = vmatpush1.msra.mxu0 0.0
    %1496 = vmatprep.subr.mxu0 0.0
    %1497 = vmatpush1.msra.mxu0 0.0
    %1498 = vmatprep.subr.mxu0 0.0
    %1499 = vmatpush1.msra.mxu0 0.0
    %1500 = vmatprep.subr.mxu0 0.0
    %1501 = vmatpush1.msra.mxu0 0.0
    %1502 = vmatprep.subr.mxu0 0.0
    %1503 = vmatpush1.msra.mxu0 0.0
    %1504 = vmatprep.subr.mxu0 0.0
    %1505 = vmatpush1.msra.mxu0 0.0
    %1506 = vmatprep.subr.mxu0 0.0
    %1507 = vmatpush1.msra.mxu0 %v73
    %1508 = vmatprep.subr.mxu0 0.0
    %1509 = vmatpush2.msra.mxu0 0.0
    %1510 = vmatprep.subr.mxu0 0.0
    %1511 = vmatpush2.msra.mxu0 0.0
    %1512 = vmatprep.subr.mxu0 0.0
    %1513 = vmatpush2.msra.mxu0 0.0
    %1514 = vmatprep.subr.mxu0 0.0
    %1515 = vmatpush2.msra.mxu0 0.0
    %1516 = vmatprep.subr.mxu0 0.0
    %1517 = vmatpush2.msra.mxu0 0.0
    %1518 = vmatprep.subr.mxu0 0.0
    %1519 = vmatpush2.msra.mxu0 0.0
    %1520 = vmatprep.subr.mxu0 0.0
    %1521 = vmatpush2.msra.mxu0 0.0
    %1522 = vmatprep.subr.mxu0 0.0
    %1523 = vmatpush2.msra.mxu0 0.0
    %1524 = vmatprep.subr.mxu0 0.0
    %1525 = vmatpush2.msra.mxu0 0.0
    %1526 = vmatprep.subr.mxu0 0.0
    %1527 = vmatpush2.msra.mxu0 0.0
    %1528 = vmatprep.subr.mxu0 0.0
    %1529 = vmatpush2.msra.mxu0 0.0
    %1530 = vmatprep.subr.mxu0 0.0
    %1531 = vmatpush2.msra.mxu0 0.0
    %1532 = vmatprep.subr.mxu0 0.0
    %1533 = vmatpush2.msra.mxu0 0.0
    %1534 = vmatprep.subr.mxu0 0.0
    %1535 = vmatpush2.msra.mxu0 0.0
    %1536 = vmatprep.subr.mxu0 0.0
    %1537 = vmatpush2.msra.mxu0 0.0
    %1538 = vmatprep.subr.mxu0 0.0
    %1539 = vmatpush2.msra.mxu0 0.0
    %1540 = vmatprep.mubr.f32.mxu0 0.0
    %1541 = vmatmul.mubr.f32.gmra.mxu0 %v1474
    %v1542 = vpop.f32.mrf.mxu0
    %v1543 = vadd.f32 0.0, %v1542
    %v1544 = vpop.f32.mrf.mxu0
    %1545 = vdwg.mxu0
    %v1547 = vsel %vm193, %v1305, 0
    %1549 = vmatprep.subr.mxu0 0.0
    %1550 = vmatpush1.msra.mxu0 0.0
    %1551 = vmatprep.subr.mxu0 0.0
    %1552 = vmatpush1.msra.mxu0 0.0
    %1553 = vmatprep.subr.mxu0 0.0
    %1554 = vmatpush1.msra.mxu0 0.0
    %1555 = vmatprep.subr.mxu0 0.0
    %1556 = vmatpush1.msra.mxu0 0.0
    %1557 = vmatprep.subr.mxu0 0.0
    %1558 = vmatpush1.msra.mxu0 0.0
    %1559 = vmatprep.subr.mxu0 0.0
    %1560 = vmatpush1.msra.mxu0 0.0
    %1561 = vmatprep.subr.mxu0 0.0
    %1562 = vmatpush1.msra.mxu0 0.0
    %1563 = vmatprep.subr.mxu0 0.0
    %1564 = vmatpush1.msra.mxu0 0.0
    %1565 = vmatprep.subr.mxu0 0.0
    %1566 = vmatpush1.msra.mxu0 0.0
    %1567 = vmatprep.subr.mxu0 0.0
    %1568 = vmatpush1.msra.mxu0 0.0
    %1569 = vmatprep.subr.mxu0 0.0
    %1570 = vmatpush1.msra.mxu0 0.0
    %1571 = vmatprep.subr.mxu0 0.0
    %1572 = vmatpush1.msra.mxu0 0.0
    %1573 = vmatprep.subr.mxu0 0.0
    %1574 = vmatpush1.msra.mxu0 0.0
    %1575 = vmatprep.subr.mxu0 0.0
    %1576 = vmatpush1.msra.mxu0 0.0
    %1577 = vmatprep.subr.mxu0 0.0
    %1578 = vmatpush1.msra.mxu0 0.0
    %1579 = vmatprep.subr.mxu0 0.0
    %1580 = vmatpush1.msra.mxu0 %v72
    %1581 = vmatprep.subr.mxu0 0.0
    %1582 = vmatpush2.msra.mxu0 0.0
    %1583 = vmatprep.subr.mxu0 0.0
    %1584 = vmatpush2.msra.mxu0 0.0
    %1585 = vmatprep.subr.mxu0 0.0
    %1586 = vmatpush2.msra.mxu0 0.0
    %1587 = vmatprep.subr.mxu0 0.0
    %1588 = vmatpush2.msra.mxu0 0.0
    %1589 = vmatprep.subr.mxu0 0.0
    %1590 = vmatpush2.msra.mxu0 0.0
    %1591 = vmatprep.subr.mxu0 0.0
    %1592 = vmatpush2.msra.mxu0 0.0
    %1593 = vmatprep.subr.mxu0 0.0
    %1594 = vmatpush2.msra.mxu0 0.0
    %1595 = vmatprep.subr.mxu0 0.0
    %1596 = vmatpush2.msra.mxu0 0.0
    %1597 = vmatprep.subr.mxu0 0.0
    %1598 = vmatpush2.msra.mxu0 0.0
    %1599 = vmatprep.subr.mxu0 0.0
    %1600 = vmatpush2.msra.mxu0 0.0
    %1601 = vmatprep.subr.mxu0 0.0
    %1602 = vmatpush2.msra.mxu0 0.0
    %1603 = vmatprep.subr.mxu0 0.0
    %1604 = vmatpush2.msra.mxu0 0.0
    %1605 = vmatprep.subr.mxu0 0.0
    %1606 = vmatpush2.msra.mxu0 0.0
    %1607 = vmatprep.subr.mxu0 0.0
    %1608 = vmatpush2.msra.mxu0 0.0
    %1609 = vmatprep.subr.mxu0 0.0
    %1610 = vmatpush2.msra.mxu0 0.0
    %1611 = vmatprep.subr.mxu0 0.0
    %1612 = vmatpush2.msra.mxu0 0.0
    %1613 = vmatprep.mubr.f32.mxu0 0.0
    %1614 = vmatmul.mubr.f32.gmra.mxu0 %v1547
    %v1615 = vpop.f32.mrf.mxu0
    %v1616 = vadd.f32 %v1543, %v1615
    %v1617 = vpop.f32.mrf.mxu0
    %1618 = vdwg.mxu0
    %1619 = vrot.lane.b32.xlu0 %v187, 112
    %v1620 = vpop.permute.xlu0 %1619
    %1621 = vrot.lane.b32.xlu0 %v187, 80
    %v1622 = vpop.permute.xlu0 %1621
    %v1623 = vsel %vm193, %v1620, 0
    %v1625 = vsel %vm193, %v1622, 0
    %1627 = vmatprep.subr.mxu0 0.0
    %1628 = vmatpush1.xpose.msra.mxu0 0.0
    %1629 = vmatprep.subr.mxu0 0.0
    %1630 = vmatpush1.xpose.msra.mxu0 0.0
    %1631 = vmatprep.subr.mxu0 0.0
    %1632 = vmatpush1.xpose.msra.mxu0 0.0
    %1633 = vmatprep.subr.mxu0 0.0
    %1634 = vmatpush1.xpose.msra.mxu0 0.0
    %1635 = vmatprep.subr.mxu0 0.0
    %1636 = vmatpush1.xpose.msra.mxu0 0.0
    %1637 = vmatprep.subr.mxu0 0.0
    %1638 = vmatpush1.xpose.msra.mxu0 0.0
    %1639 = vmatprep.subr.mxu0 0.0
    %1640 = vmatpush1.xpose.msra.mxu0 0.0
    %1641 = vmatprep.subr.mxu0 0.0
    %1642 = vmatpush1.xpose.msra.mxu0 0.0
    %1643 = vmatprep.subr.mxu0 0.0
    %1644 = vmatpush1.xpose.msra.mxu0 0.0
    %1645 = vmatprep.subr.mxu0 0.0
    %1646 = vmatpush1.xpose.msra.mxu0 0.0
    %1647 = vmatprep.subr.mxu0 0.0
    %1648 = vmatpush1.xpose.msra.mxu0 0.0
    %1649 = vmatprep.subr.mxu0 0.0
    %1650 = vmatpush1.xpose.msra.mxu0 0.0
    %1651 = vmatprep.subr.mxu0 0.0
    %1652 = vmatpush1.xpose.msra.mxu0 0.0
    %1653 = vmatprep.subr.mxu0 0.0
    %1654 = vmatpush1.xpose.msra.mxu0 0.0
    %1655 = vmatprep.subr.mxu0 0.0
    %1656 = vmatpush1.xpose.msra.mxu0 0.0
    %1657 = vmatprep.subr.mxu0 0.0
    %1658 = vmatpush1.xpose.msra.mxu0 %v1625
    %1659 = vmatprep.subr.mxu0 0.0
    %1660 = vmatpush2.xpose.msra.mxu0 0.0
    %1661 = vmatprep.subr.mxu0 0.0
    %1662 = vmatpush2.xpose.msra.mxu0 0.0
    %1663 = vmatprep.subr.mxu0 0.0
    %1664 = vmatpush2.xpose.msra.mxu0 0.0
    %1665 = vmatprep.subr.mxu0 0.0
    %1666 = vmatpush2.xpose.msra.mxu0 0.0
    %1667 = vmatprep.subr.mxu0 0.0
    %1668 = vmatpush2.xpose.msra.mxu0 0.0
    %1669 = vmatprep.subr.mxu0 0.0
    %1670 = vmatpush2.xpose.msra.mxu0 0.0
    %1671 = vmatprep.subr.mxu0 0.0
    %1672 = vmatpush2.xpose.msra.mxu0 0.0
    %1673 = vmatprep.subr.mxu0 0.0
    %1674 = vmatpush2.xpose.msra.mxu0 0.0
    %1675 = vmatprep.subr.mxu0 0.0
    %1676 = vmatpush2.xpose.msra.mxu0 0.0
    %1677 = vmatprep.subr.mxu0 0.0
    %1678 = vmatpush2.xpose.msra.mxu0 0.0
    %1679 = vmatprep.subr.mxu0 0.0
    %1680 = vmatpush2.xpose.msra.mxu0 0.0
    %1681 = vmatprep.subr.mxu0 0.0
    %1682 = vmatpush2.xpose.msra.mxu0 0.0
    %1683 = vmatprep.subr.mxu0 0.0
    %1684 = vmatpush2.xpose.msra.mxu0 0.0
    %1685 = vmatprep.subr.mxu0 0.0
    %1686 = vmatpush2.xpose.msra.mxu0 0.0
    %1687 = vmatprep.subr.mxu0 0.0
    %1688 = vmatpush2.xpose.msra.mxu0 0.0
    %1689 = vmatprep.subr.mxu0 0.0
    %1690 = vmatpush2.xpose.msra.mxu0 0.0
    %1691 = vmatprep.mubr.f32.mxu0 0.0
    %1692 = vmatmul.mubr.f32.gmra.mxu0 %v1623
    %v1693 = vpop.f32.mrf.mxu0
    %v1694 = vadd.f32 %v68, %v1693
    %v1695 = vpop.f32.mrf.mxu0
    %1696 = vdwg.mxu0
    %v1697 = vsel %vm193, %v1694, -inf
    %1698 = vmax.xlane.f32.xlu0 %v1697
    %v1699 = vpop.xlane.xlu0 %1698
    %v1700 = vsub.f32 %v1694, %v1699
    %v1701 = vmul.f32 %v1700, 1.442695
    %v1702 = vpow.pop %v1701
    %v1703 = vsel %vm193, %v1702, 0.0
    %1704 = vadd.xlane.f32.xlu0 %v1703
    %v1705 = vpop.xlane.xlu0 %1704
    %v1706 = vrcp.pop %v1705
    %v1707 = vmul.f32 %v1702, %v1706
    %1708 = vrot.lane.b32.xlu0 %v187, 48
    %v1709 = vpop.permute.xlu0 %1708
    %v1712 = vsel %vm193, %v1707, 0
    %1714 = vmatprep.subr.mxu0 0.0
    %1715 = vmatpush1.msra.mxu0 0.0
    %1716 = vmatprep.subr.mxu0 0.0
    %1717 = vmatpush1.msra.mxu0 0.0
    %1718 = vmatprep.subr.mxu0 0.0
    %1719 = vmatpush1.msra.mxu0 0.0
    %1720 = vmatprep.subr.mxu0 0.0
    %1721 = vmatpush1.msra.mxu0 0.0
    %1722 = vmatprep.subr.mxu0 0.0
    %1723 = vmatpush1.msra.mxu0 0.0
    %1724 = vmatprep.subr.mxu0 0.0
    %1725 = vmatpush1.msra.mxu0 0.0
    %1726 = vmatprep.subr.mxu0 0.0
    %1727 = vmatpush1.msra.mxu0 0.0
    %1728 = vmatprep.subr.mxu0 0.0
    %1729 = vmatpush1.msra.mxu0 0.0
    %1730 = vmatprep.subr.mxu0 0.0
    %1731 = vmatpush1.msra.mxu0 0.0
    %1732 = vmatprep.subr.mxu0 0.0
    %1733 = vmatpush1.msra.mxu0 0.0
    %1734 = vmatprep.subr.mxu0 0.0
    %1735 = vmatpush1.msra.mxu0 0.0
    %1736 = vmatprep.subr.mxu0 0.0
    %1737 = vmatpush1.msra.mxu0 0.0
    %1738 = vmatprep.subr.mxu0 0.0
    %1739 = vmatpush1.msra.mxu0 0.0
    %1740 = vmatprep.subr.mxu0 0.0
    %1741 = vmatpush1.msra.mxu0 0.0
    %1742 = vmatprep.subr.mxu0 0.0
    %1743 = vmatpush1.msra.mxu0 0.0
    %1744 = vmatprep.subr.mxu0 0.0
    %1745 = vmatpush1.msra.mxu0 %v1709
    %1746 = vmatprep.subr.mxu0 0.0
    %1747 = vmatpush2.msra.mxu0 0.0
    %1748 = vmatprep.subr.mxu0 0.0
    %1749 = vmatpush2.msra.mxu0 0.0
    %1750 = vmatprep.subr.mxu0 0.0
    %1751 = vmatpush2.msra.mxu0 0.0
    %1752 = vmatprep.subr.mxu0 0.0
    %1753 = vmatpush2.msra.mxu0 0.0
    %1754 = vmatprep.subr.mxu0 0.0
    %1755 = vmatpush2.msra.mxu0 0.0
    %1756 = vmatprep.subr.mxu0 0.0
    %1757 = vmatpush2.msra.mxu0 0.0
    %1758 = vmatprep.subr.mxu0 0.0
    %1759 = vmatpush2.msra.mxu0 0.0
    %1760 = vmatprep.subr.mxu0 0.0
    %1761 = vmatpush2.msra.mxu0 0.0
    %1762 = vmatprep.subr.mxu0 0.0
    %1763 = vmatpush2.msra.mxu0 0.0
    %1764 = vmatprep.subr.mxu0 0.0
    %1765 = vmatpush2.msra.mxu0 0.0
    %1766 = vmatprep.subr.mxu0 0.0
    %1767 = vmatpush2.msra.mxu0 0.0
    %1768 = vmatprep.subr.mxu0 0.0
    %1769 = vmatpush2.msra.mxu0 0.0
    %1770 = vmatprep.subr.mxu0 0.0
    %1771 = vmatpush2.msra.mxu0 0.0
    %1772 = vmatprep.subr.mxu0 0.0
    %1773 = vmatpush2.msra.mxu0 0.0
    %1774 = vmatprep.subr.mxu0 0.0
    %1775 = vmatpush2.msra.mxu0 0.0
    %1776 = vmatprep.subr.mxu0 0.0
    %1777 = vmatpush2.msra.mxu0 0.0
    %1778 = vmatprep.mubr.f32.mxu0 0.0
    %1779 = vmatmul.mubr.f32.gmra.mxu0 %v1712
    %v1780 = vpop.f32.mrf.mxu0
    %v1781 = vadd.f32 0.0, %v1780
    %v1782 = vpop.f32.mrf.mxu0
    %1783 = vdwg.mxu0
    %v1785 = vsel %vm193, %v1781, 0
    %1787 = vmatprep.subr.mxu0 0.0
    %1788 = vmatpush1.msra.mxu0 0.0
    %1789 = vmatprep.subr.mxu0 0.0
    %1790 = vmatpush1.msra.mxu0 0.0
    %1791 = vmatprep.subr.mxu0 0.0
    %1792 = vmatpush1.msra.mxu0 0.0
    %1793 = vmatprep.subr.mxu0 0.0
    %1794 = vmatpush1.msra.mxu0 0.0
    %1795 = vmatprep.subr.mxu0 0.0
    %1796 = vmatpush1.msra.mxu0 0.0
    %1797 = vmatprep.subr.mxu0 0.0
    %1798 = vmatpush1.msra.mxu0 0.0
    %1799 = vmatprep.subr.mxu0 0.0
    %1800 = vmatpush1.msra.mxu0 0.0
    %1801 = vmatprep.subr.mxu0 0.0
    %1802 = vmatpush1.msra.mxu0 0.0
    %1803 = vmatprep.subr.mxu0 0.0
    %1804 = vmatpush1.msra.mxu0 0.0
    %1805 = vmatprep.subr.mxu0 0.0
    %1806 = vmatpush1.msra.mxu0 0.0
    %1807 = vmatprep.subr.mxu0 0.0
    %1808 = vmatpush1.msra.mxu0 0.0
    %1809 = vmatprep.subr.mxu0 0.0
    %1810 = vmatpush1.msra.mxu0 0.0
    %1811 = vmatprep.subr.mxu0 0.0
    %1812 = vmatpush1.msra.mxu0 0.0
    %1813 = vmatprep.subr.mxu0 0.0
    %1814 = vmatpush1.msra.mxu0 0.0
    %1815 = vmatprep.subr.mxu0 0.0
    %1816 = vmatpush1.msra.mxu0 0.0
    %1817 = vmatprep.subr.mxu0 0.0
    %1818 = vmatpush1.msra.mxu0 %v74
    %1819 = vmatprep.subr.mxu0 0.0
    %1820 = vmatpush2.msra.mxu0 0.0
    %1821 = vmatprep.subr.mxu0 0.0
    %1822 = vmatpush2.msra.mxu0 0.0
    %1823 = vmatprep.subr.mxu0 0.0
    %1824 = vmatpush2.msra.mxu0 0.0
    %1825 = vmatprep.subr.mxu0 0.0
    %1826 = vmatpush2.msra.mxu0 0.0
    %1827 = vmatprep.subr.mxu0 0.0
    %1828 = vmatpush2.msra.mxu0 0.0
    %1829 = vmatprep.subr.mxu0 0.0
    %1830 = vmatpush2.msra.mxu0 0.0
    %1831 = vmatprep.subr.mxu0 0.0
    %1832 = vmatpush2.msra.mxu0 0.0
    %1833 = vmatprep.subr.mxu0 0.0
    %1834 = vmatpush2.msra.mxu0 0.0
    %1835 = vmatprep.subr.mxu0 0.0
    %1836 = vmatpush2.msra.mxu0 0.0
    %1837 = vmatprep.subr.mxu0 0.0
    %1838 = vmatpush2.msra.mxu0 0.0
    %1839 = vmatprep.subr.mxu0 0.0
    %1840 = vmatpush2.msra.mxu0 0.0
    %1841 = vmatprep.subr.mxu0 0.0
    %1842 = vmatpush2.msra.mxu0 0.0
    %1843 = vmatprep.subr.mxu0 0.0
    %1844 = vmatpush2.msra.mxu0 0.0
    %1845 = vmatprep.subr.mxu0 0.0
    %1846 = vmatpush2.msra.mxu0 0.0
    %1847 = vmatprep.subr.mxu0 0.0
    %1848 = vmatpush2.msra.mxu0 0.0
    %1849 = vmatprep.subr.mxu0 0.0
    %1850 = vmatpush2.msra.mxu0 0.0
    %1851 = vmatprep.mubr.f32.mxu0 0.0
    %1852 = vmatmul.mubr.f32.gmra.mxu0 %v1785
    %v1853 = vpop.f32.mrf.mxu0
    %v1854 = vadd.f32 0.0, %v1853
    %v1855 = vpop.f32.mrf.mxu0
    %1856 = vdwg.mxu0
    %v1857 = vadd.f32 %v1616, %v1854
    %1858 = vrot.lane.b32.xlu0 %v187, 104
    %v1859 = vpop.permute.xlu0 %1858
    %1860 = vrot.lane.b32.xlu0 %v187, 72
    %v1861 = vpop.permute.xlu0 %1860
    %v1862 = vsel %vm193, %v1859, 0
    %v1864 = vsel %vm193, %v1861, 0
    %1866 = vmatprep.subr.mxu0 0.0
    %1867 = vmatpush1.xpose.msra.mxu0 0.0
    %1868 = vmatprep.subr.mxu0 0.0
    %1869 = vmatpush1.xpose.msra.mxu0 0.0
    %1870 = vmatprep.subr.mxu0 0.0
    %1871 = vmatpush1.xpose.msra.mxu0 0.0
    %1872 = vmatprep.subr.mxu0 0.0
    %1873 = vmatpush1.xpose.msra.mxu0 0.0
    %1874 = vmatprep.subr.mxu0 0.0
    %1875 = vmatpush1.xpose.msra.mxu0 0.0
    %1876 = vmatprep.subr.mxu0 0.0
    %1877 = vmatpush1.xpose.msra.mxu0 0.0
    %1878 = vmatprep.subr.mxu0 0.0
    %1879 = vmatpush1.xpose.msra.mxu0 0.0
    %1880 = vmatprep.subr.mxu0 0.0
    %1881 = vmatpush1.xpose.msra.mxu0 0.0
    %1882 = vmatprep.subr.mxu0 0.0
    %1883 = vmatpush1.xpose.msra.mxu0 0.0
    %1884 = vmatprep.subr.mxu0 0.0
    %1885 = vmatpush1.xpose.msra.mxu0 0.0
    %1886 = vmatprep.subr.mxu0 0.0
    %1887 = vmatpush1.xpose.msra.mxu0 0.0
    %1888 = vmatprep.subr.mxu0 0.0
    %1889 = vmatpush1.xpose.msra.mxu0 0.0
    %1890 = vmatprep.subr.mxu0 0.0
    %1891 = vmatpush1.xpose.msra.mxu0 0.0
    %1892 = vmatprep.subr.mxu0 0.0
    %1893 = vmatpush1.xpose.msra.mxu0 0.0
    %1894 = vmatprep.subr.mxu0 0.0
    %1895 = vmatpush1.xpose.msra.mxu0 0.0
    %1896 = vmatprep.subr.mxu0 0.0
    %1897 = vmatpush1.xpose.msra.mxu0 %v1864
    %1898 = vmatprep.subr.mxu0 0.0
    %1899 = vmatpush2.xpose.msra.mxu0 0.0
    %1900 = vmatprep.subr.mxu0 0.0
    %1901 = vmatpush2.xpose.msra.mxu0 0.0
    %1902 = vmatprep.subr.mxu0 0.0
    %1903 = vmatpush2.xpose.msra.mxu0 0.0
    %1904 = vmatprep.subr.mxu0 0.0
    %1905 = vmatpush2.xpose.msra.mxu0 0.0
    %1906 = vmatprep.subr.mxu0 0.0
    %1907 = vmatpush2.xpose.msra.mxu0 0.0
    %1908 = vmatprep.subr.mxu0 0.0
    %1909 = vmatpush2.xpose.msra.mxu0 0.0
    %1910 = vmatprep.subr.mxu0 0.0
    %1911 = vmatpush2.xpose.msra.mxu0 0.0
    %1912 = vmatprep.subr.mxu0 0.0
    %1913 = vmatpush2.xpose.msra.mxu0 0.0
    %1914 = vmatprep.subr.mxu0 0.0
    %1915 = vmatpush2.xpose.msra.mxu0 0.0
    %1916 = vmatprep.subr.mxu0 0.0
    %1917 = vmatpush2.xpose.msra.mxu0 0.0
    %1918 = vmatprep.subr.mxu0 0.0
    %1919 = vmatpush2.xpose.msra.mxu0 0.0
    %1920 = vmatprep.subr.mxu0 0.0
    %1921 = vmatpush2.xpose.msra.mxu0 0.0
    %1922 = vmatprep.subr.mxu0 0.0
    %1923 = vmatpush2.xpose.msra.mxu0 0.0
    %1924 = vmatprep.subr.mxu0 0.0
    %1925 = vmatpush2.xpose.msra.mxu0 0.0
    %1926 = vmatprep.subr.mxu0 0.0
    %1927 = vmatpush2.xpose.msra.mxu0 0.0
    %1928 = vmatprep.subr.mxu0 0.0
    %1929 = vmatpush2.xpose.msra.mxu0 0.0
    %1930 = vmatprep.mubr.f32.mxu0 0.0
    %1931 = vmatmul.mubr.f32.gmra.mxu0 %v1862
    %v1932 = vpop.f32.mrf.mxu0
    %v1933 = vadd.f32 %v68, %v1932
    %v1934 = vpop.f32.mrf.mxu0
    %1935 = vdwg.mxu0
    %v1936 = vsel %vm193, %v1933, -inf
    %1937 = vmax.xlane.f32.xlu0 %v1936
    %v1938 = vpop.xlane.xlu0 %1937
    %v1939 = vsub.f32 %v1933, %v1938
    %v1940 = vmul.f32 %v1939, 1.442695
    %v1941 = vpow.pop %v1940
    %v1942 = vsel %vm193, %v1941, 0.0
    %1943 = vadd.xlane.f32.xlu0 %v1942
    %v1944 = vpop.xlane.xlu0 %1943
    %v1945 = vrcp.pop %v1944
    %v1946 = vmul.f32 %v1941, %v1945
    %1947 = vrot.lane.b32.xlu0 %v187, 40
    %v1948 = vpop.permute.xlu0 %1947
    %v1951 = vsel %vm193, %v1946, 0
    %1953 = vmatprep.subr.mxu0 0.0
    %1954 = vmatpush1.msra.mxu0 0.0
    %1955 = vmatprep.subr.mxu0 0.0
    %1956 = vmatpush1.msra.mxu0 0.0
    %1957 = vmatprep.subr.mxu0 0.0
    %1958 = vmatpush1.msra.mxu0 0.0
    %1959 = vmatprep.subr.mxu0 0.0
    %1960 = vmatpush1.msra.mxu0 0.0
    %1961 = vmatprep.subr.mxu0 0.0
    %1962 = vmatpush1.msra.mxu0 0.0
    %1963 = vmatprep.subr.mxu0 0.0
    %1964 = vmatpush1.msra.mxu0 0.0
    %1965 = vmatprep.subr.mxu0 0.0
    %1966 = vmatpush1.msra.mxu0 0.0
    %1967 = vmatprep.subr.mxu0 0.0
    %1968 = vmatpush1.msra.mxu0 0.0
    %1969 = vmatprep.subr.mxu0 0.0
    %1970 = vmatpush1.msra.mxu0 0.0
    %1971 = vmatprep.subr.mxu0 0.0
    %1972 = vmatpush1.msra.mxu0 0.0
    %1973 = vmatprep.subr.mxu0 0.0
    %1974 = vmatpush1.msra.mxu0 0.0
    %1975 = vmatprep.subr.mxu0 0.0
    %1976 = vmatpush1.msra.mxu0 0.0
    %1977 = vmatprep.subr.mxu0 0.0
    %1978 = vmatpush1.msra.mxu0 0.0
    %1979 = vmatprep.subr.mxu0 0.0
    %1980 = vmatpush1.msra.mxu0 0.0
    %1981 = vmatprep.subr.mxu0 0.0
    %1982 = vmatpush1.msra.mxu0 0.0
    %1983 = vmatprep.subr.mxu0 0.0
    %1984 = vmatpush1.msra.mxu0 %v1948
    %1985 = vmatprep.subr.mxu0 0.0
    %1986 = vmatpush2.msra.mxu0 0.0
    %1987 = vmatprep.subr.mxu0 0.0
    %1988 = vmatpush2.msra.mxu0 0.0
    %1989 = vmatprep.subr.mxu0 0.0
    %1990 = vmatpush2.msra.mxu0 0.0
    %1991 = vmatprep.subr.mxu0 0.0
    %1992 = vmatpush2.msra.mxu0 0.0
    %1993 = vmatprep.subr.mxu0 0.0
    %1994 = vmatpush2.msra.mxu0 0.0
    %1995 = vmatprep.subr.mxu0 0.0
    %1996 = vmatpush2.msra.mxu0 0.0
    %1997 = vmatprep.subr.mxu0 0.0
    %1998 = vmatpush2.msra.mxu0 0.0
    %1999 = vmatprep.subr.mxu0 0.0
    %2000 = vmatpush2.msra.mxu0 0.0
    %2001 = vmatprep.subr.mxu0 0.0
    %2002 = vmatpush2.msra.mxu0 0.0
    %2003 = vmatprep.subr.mxu0 0.0
    %2004 = vmatpush2.msra.mxu0 0.0
    %2005 = vmatprep.subr.mxu0 0.0
    %2006 = vmatpush2.msra.mxu0 0.0
    %2007 = vmatprep.subr.mxu0 0.0
    %2008 = vmatpush2.msra.mxu0 0.0
    %2009 = vmatprep.subr.mxu0 0.0
    %2010 = vmatpush2.msra.mxu0 0.0
    %2011 = vmatprep.subr.mxu0 0.0
    %2012 = vmatpush2.msra.mxu0 0.0
    %2013 = vmatprep.subr.mxu0 0.0
    %2014 = vmatpush2.msra.mxu0 0.0
    %2015 = vmatprep.subr.mxu0 0.0
    %2016 = vmatpush2.msra.mxu0 0.0
    %2017 = vmatprep.mubr.f32.mxu0 0.0
    %2018 = vmatmul.mubr.f32.gmra.mxu0 %v1951
    %v2019 = vpop.f32.mrf.mxu0
    %v2020 = vadd.f32 0.0, %v2019
    %v2021 = vpop.f32.mrf.mxu0
    %2022 = vdwg.mxu0
    %v2024 = vsel %vm193, %v2020, 0
    %2026 = vmatprep.subr.mxu0 0.0
    %2027 = vmatpush1.msra.mxu0 0.0
    %2028 = vmatprep.subr.mxu0 0.0
    %2029 = vmatpush1.msra.mxu0 0.0
    %2030 = vmatprep.subr.mxu0 0.0
    %2031 = vmatpush1.msra.mxu0 0.0
    %2032 = vmatprep.subr.mxu0 0.0
    %2033 = vmatpush1.msra.mxu0 0.0
    %2034 = vmatprep.subr.mxu0 0.0
    %2035 = vmatpush1.msra.mxu0 0.0
    %2036 = vmatprep.subr.mxu0 0.0
    %2037 = vmatpush1.msra.mxu0 0.0
    %2038 = vmatprep.subr.mxu0 0.0
    %2039 = vmatpush1.msra.mxu0 0.0
    %2040 = vmatprep.subr.mxu0 0.0
    %2041 = vmatpush1.msra.mxu0 0.0
    %2042 = vmatprep.subr.mxu0 0.0
    %2043 = vmatpush1.msra.mxu0 0.0
    %2044 = vmatprep.subr.mxu0 0.0
    %2045 = vmatpush1.msra.mxu0 0.0
    %2046 = vmatprep.subr.mxu0 0.0
    %2047 = vmatpush1.msra.mxu0 0.0
    %2048 = vmatprep.subr.mxu0 0.0
    %2049 = vmatpush1.msra.mxu0 0.0
    %2050 = vmatprep.subr.mxu0 0.0
    %2051 = vmatpush1.msra.mxu0 0.0
    %2052 = vmatprep.subr.mxu0 0.0
    %2053 = vmatpush1.msra.mxu0 0.0
    %2054 = vmatprep.subr.mxu0 0.0
    %2055 = vmatpush1.msra.mxu0 0.0
    %2056 = vmatprep.subr.mxu0 0.0
    %2057 = vmatpush1.msra.mxu0 %v75
    %2058 = vmatprep.subr.mxu0 0.0
    %2059 = vmatpush2.msra.mxu0 0.0
    %2060 = vmatprep.subr.mxu0 0.0
    %2061 = vmatpush2.msra.mxu0 0.0
    %2062 = vmatprep.subr.mxu0 0.0
    %2063 = vmatpush2.msra.mxu0 0.0
    %2064 = vmatprep.subr.mxu0 0.0
    %2065 = vmatpush2.msra.mxu0 0.0
    %2066 = vmatprep.subr.mxu0 0.0
    %2067 = vmatpush2.msra.mxu0 0.0
    %2068 = vmatprep.subr.mxu0 0.0
    %2069 = vmatpush2.msra.mxu0 0.0
    %2070 = vmatprep.subr.mxu0 0.0
    %2071 = vmatpush2.msra.mxu0 0.0
    %2072 = vmatprep.subr.mxu0 0.0
    %2073 = vmatpush2.msra.mxu0 0.0
    %2074 = vmatprep.subr.mxu0 0.0
    %2075 = vmatpush2.msra.mxu0 0.0
    %2076 = vmatprep.subr.mxu0 0.0
    %2077 = vmatpush2.msra.mxu0 0.0
    %2078 = vmatprep.subr.mxu0 0.0
    %2079 = vmatpush2.msra.mxu0 0.0
    %2080 = vmatprep.subr.mxu0 0.0
    %2081 = vmatpush2.msra.mxu0 0.0
    %2082 = vmatprep.subr.mxu0 0.0
    %2083 = vmatpush2.msra.mxu0 0.0
    %2084 = vmatprep.subr.mxu0 0.0
    %2085 = vmatpush2.msra.mxu0 0.0
    %2086 = vmatprep.subr.mxu0 0.0
    %2087 = vmatpush2.msra.mxu0 0.0
    %2088 = vmatprep.subr.mxu0 0.0
    %2089 = vmatpush2.msra.mxu0 0.0
    %2090 = vmatprep.mubr.f32.mxu0 0.0
    %2091 = vmatmul.mubr.f32.gmra.mxu0 %v2024
    %v2092 = vpop.f32.mrf.mxu0
    %v2093 = vadd.f32 0.0, %v2092
    %v2094 = vpop.f32.mrf.mxu0
    %2095 = vdwg.mxu0
    %v2096 = vadd.f32 %v1857, %v2093
    %v2097 = vlaneseq
    %v2098 = vshrl.u32 %v2097, 7
    %v2099 = vsub.s32 0, %v2098
    %v2100 = vrot.slane %v80, %v2099
    %v2101 = vadd.f32 %v1143, %v2100
    %v2102 = vadd.f32 %v2096, %v2100
    %v2103 = vadd.f32 %v61, %v2101
    %v2104 = vadd.f32 %v62, %v2102
    %v2105 = vsel %vm85, %v2103, 0.0
    %2106 = vadd.xlane.f32.xlu0 %v2105
    %v2107 = vpop.xlane.xlu0 %2106
    %v2108 = vsel %vm85, %v2104, 0.0
    %2109 = vadd.xlane.f32.xlu0 %v2108
    %v2110 = vpop.xlane.xlu0 %2109
    %v2111 = vmul.f32 %v2107, %v92
    %v2112 = vmul.f32 %v2110, %v92
    %v2113 = vsub.f32 %v2103, %v2111
    %v2114 = vsub.f32 %v2104, %v2112
    %v2115 = vmul.f32 %v2113, %v2113
    %v2116 = vmul.f32 %v2114, %v2114
    %v2117 = vsel %vm85, %v2115, 0.0
    %2118 = vadd.xlane.f32.xlu0 %v2117
    %v2119 = vpop.xlane.xlu0 %2118
    %v2120 = vsel %vm85, %v2116, 0.0
    %2121 = vadd.xlane.f32.xlu0 %v2120
    %v2122 = vpop.xlane.xlu0 %2121
    %v2123 = vmul.f32 %v2119, %v92
    %v2124 = vmul.f32 %v2122, %v92
    %v2125 = vadd.f32 %v2123, 1e-05
    %v2126 = vadd.f32 %v2124, 1e-05
    %v2127 = vrsqrt.pop %v2125
    %v2128 = vrsqrt.pop %v2126
    %v2129 = vmul.f32 %v2113, %v2127
    %v2130 = vmul.f32 %v2114, %v2128
    %v2131 = vlaneseq
    %v2132 = vshrl.u32 %v2131, 7
    %v2133 = vsub.s32 0, %v2132
    %v2134 = vrot.slane %v81, %v2133
    %v2135 = vmul.f32 %v2129, %v2134
    %v2136 = vmul.f32 %v2130, %v2134
    %v2137 = vlaneseq
    %v2138 = vshrl.u32 %v2137, 7
    %v2139 = vsub.s32 0, %v2138
    %v2140 = vrot.slane %v82, %v2139
    %v2141 = vadd.f32 %v2135, %v2140
    %v2142 = vadd.f32 %v2136, %v2140
    %v2143 = vpack.c.bf16 %v2142, %v2141
    %v2144 = vld [vmem:[%s10] sm:$0xf]
    %v2145 = vld [vmem:[%s10 + $0x4] sm:$0xf]
    %v2146 = vld [vmem:[%s10 + $0x8] sm:$0xf]
    %v2147 = vld [vmem:[%s10 + $0xc] sm:$0xf]
    %v2148 = vlaneseq
    %v2149 = vshrl.u32 %v2148, 7
    %v2150 = vsub.s32 0, %v2149
    %v2151 = vrot.slane %v83, %v2150
    %v2156 = vunpack.c.l.b16 %v2144
    %v2157 = vunpack.c.l.b16 %v2145
    %v2158 = vunpack.c.l.b16 %v2146
    %v2159 = vunpack.c.l.b16 %v2147
    %v2160 = vpack.c.b16 %v2157, %v2156
    %v2161 = vpack.c.b16 %v2159, %v2158
    %v2165 = vsel %vm85, %v2143, 0
    %2167 = vmatprep.subr.bf16.mxu0 0
    %2168 = vmatpush1.bf16.msra.mxu0 0
    %2169 = vmatprep.subr.bf16.mxu0 0
    %2170 = vmatpush1.bf16.msra.mxu0 0
    %2171 = vmatprep.subr.bf16.mxu0 0
    %2172 = vmatpush1.bf16.msra.mxu0 0
    %2173 = vmatprep.subr.bf16.mxu0 0
    %2174 = vmatpush1.bf16.msra.mxu0 0
    %2175 = vmatprep.subr.bf16.mxu0 0
    %2176 = vmatpush1.bf16.msra.mxu0 0
    %2177 = vmatprep.subr.bf16.mxu0 0
    %2178 = vmatpush1.bf16.msra.mxu0 0
    %2179 = vmatprep.subr.bf16.mxu0 0
    %2180 = vmatpush1.bf16.msra.mxu0 %v2161
    %2181 = vmatprep.subr.bf16.mxu0 0
    %2182 = vmatpush1.bf16.msra.mxu0 %v2160
    %2183 = vmatprep.subr.bf16.mxu0 0
    %2184 = vmatpush2.bf16.msra.mxu0 0
    %2185 = vmatprep.subr.bf16.mxu0 0
    %2186 = vmatpush2.bf16.msra.mxu0 0
    %2187 = vmatprep.subr.bf16.mxu0 0
    %2188 = vmatpush2.bf16.msra.mxu0 0
    %2189 = vmatprep.subr.bf16.mxu0 0
    %2190 = vmatpush2.bf16.msra.mxu0 0
    %2191 = vmatprep.subr.bf16.mxu0 0
    %2192 = vmatpush2.bf16.msra.mxu0 0
    %2193 = vmatprep.subr.bf16.mxu0 0
    %2194 = vmatpush2.bf16.msra.mxu0 0
    %2195 = vmatprep.subr.bf16.mxu0 0
    %2196 = vmatpush2.bf16.msra.mxu0 0
    %2197 = vmatprep.subr.bf16.mxu0 0
    %2198 = vmatpush2.bf16.msra.mxu0 0
    %2199 = vmatprep.mubr.bf16.mxu0 0
    %2200 = vmatmul.mubr.bf16.gmra.mxu0 %v2165
    %v2201 = vpop.f32.mrf.mxu0
    %v2202 = vadd.f32 %v2151, %v2201
    %v2203 = vpop.f32.mrf.mxu0
    %v2204 = vpop.f32.mrf.mxu0
    %v2205 = vadd.f32 %v2151, %v2204
    %v2206 = vpop.f32.mrf.mxu0
    %2207 = vdwg.mxu0
    %v2208 = vmul.f32 %v2202, 1.702
    %v2209 = vmul.f32 %v2205, 1.702
    %v2210 = vxor.u32 %v2208, 2147483648
    %v2211 = vxor.u32 %v2209, 2147483648
    %v2212 = vmul.f32 %v2210, 1.442695
    %v2213 = vpow.pop %v2212
    %v2214 = vmul.f32 %v2211, 1.442695
    %v2215 = vpow.pop %v2214
    %v2216 = vadd.f32 %v2213, 1.0
    %v2217 = vadd.f32 %v2215, 1.0
    %v2218 = vrcp.pop %v2216
    %v2219 = vmul.f32 1.0, %v2218
    %v2220 = vrcp.pop %v2217
    %v2221 = vmul.f32 1.0, %v2220
    %v2222 = vmul.f32 %v2202, %v2219
    %v2223 = vmul.f32 %v2205, %v2221
    %v2224 = vpack.c.bf16 %v2223, %v2222
    %v2225 = vld [vmem:[%s12] sm:$0xf]
    %v2226 = vld [vmem:[%s12 + $0x4] sm:$0xf]
    %v2227 = vld [vmem:[%s12 + $0x8] sm:$0xf]
    %v2228 = vld [vmem:[%s12 + $0xc] sm:$0xf]
    %v2229 = vld [vmem:[%s12 + $0x10] sm:$0xf]
    %v2230 = vld [vmem:[%s12 + $0x14] sm:$0xf]
    %v2231 = vld [vmem:[%s12 + $0x18] sm:$0xf]
    %v2232 = vld [vmem:[%s12 + $0x1c] sm:$0xf]
    %v2233 = vld [vmem:[%s12 + $0x20] sm:$0xf]
    %v2234 = vld [vmem:[%s12 + $0x24] sm:$0xf]
    %v2235 = vld [vmem:[%s12 + $0x28] sm:$0xf]
    %v2236 = vld [vmem:[%s12 + $0x2c] sm:$0xf]
    %v2237 = vld [vmem:[%s12 + $0x30] sm:$0xf]
    %v2238 = vld [vmem:[%s12 + $0x34] sm:$0xf]
    %v2239 = vld [vmem:[%s12 + $0x38] sm:$0xf]
    %v2240 = vld [vmem:[%s12 + $0x3c] sm:$0xf]
    %v2241 = vlaneseq
    %v2242 = vshrl.u32 %v2241, 7
    %v2243 = vsub.s32 0, %v2242
    %v2244 = vrot.slane %v84, %v2243
    %v2261 = vunpack.c.l.b16 %v2225
    %v2262 = vunpack.c.l.b16 %v2226
    %v2263 = vunpack.c.l.b16 %v2227
    %v2264 = vunpack.c.l.b16 %v2228
    %v2265 = vunpack.c.l.b16 %v2229
    %v2266 = vunpack.c.l.b16 %v2230
    %v2267 = vunpack.c.l.b16 %v2231
    %v2268 = vunpack.c.l.b16 %v2232
    %v2269 = vunpack.c.l.b16 %v2233
    %v2270 = vunpack.c.l.b16 %v2234
    %v2271 = vunpack.c.l.b16 %v2235
    %v2272 = vunpack.c.l.b16 %v2236
    %v2273 = vunpack.c.l.b16 %v2237
    %v2274 = vunpack.c.l.b16 %v2238
    %v2275 = vunpack.c.l.b16 %v2239
    %v2276 = vunpack.c.l.b16 %v2240
    %v2277 = vpack.c.b16 %v2262, %v2261
    %v2278 = vpack.c.b16 %v2264, %v2263
    %v2279 = vpack.c.b16 %v2266, %v2265
    %v2280 = vpack.c.b16 %v2268, %v2267
    %v2281 = vpack.c.b16 %v2270, %v2269
    %v2282 = vpack.c.b16 %v2272, %v2271
    %v2283 = vpack.c.b16 %v2274, %v2273
    %v2284 = vpack.c.b16 %v2276, %v2275
    %2293 = vmatprep.subr.bf16.mxu0 0
    %2294 = vmatpush1.bf16.msra.mxu0 %v2284
    %2295 = vmatprep.subr.bf16.mxu0 0
    %2296 = vmatpush1.bf16.msra.mxu0 %v2283
    %2297 = vmatprep.subr.bf16.mxu0 0
    %2298 = vmatpush1.bf16.msra.mxu0 %v2282
    %2299 = vmatprep.subr.bf16.mxu0 0
    %2300 = vmatpush1.bf16.msra.mxu0 %v2281
    %2301 = vmatprep.subr.bf16.mxu0 0
    %2302 = vmatpush1.bf16.msra.mxu0 %v2280
    %2303 = vmatprep.subr.bf16.mxu0 0
    %2304 = vmatpush1.bf16.msra.mxu0 %v2279
    %2305 = vmatprep.subr.bf16.mxu0 0
    %2306 = vmatpush1.bf16.msra.mxu0 %v2278
    %2307 = vmatprep.subr.bf16.mxu0 0
    %2308 = vmatpush1.bf16.msra.mxu0 %v2277
    %2309 = vmatprep.subr.bf16.mxu0 0
    %2310 = vmatpush2.bf16.msra.mxu0 0
    %2311 = vmatprep.subr.bf16.mxu0 0
    %2312 = vmatpush2.bf16.msra.mxu0 0
    %2313 = vmatprep.subr.bf16.mxu0 0
    %2314 = vmatpush2.bf16.msra.mxu0 0
    %2315 = vmatprep.subr.bf16.mxu0 0
    %2316 = vmatpush2.bf16.msra.mxu0 0
    %2317 = vmatprep.subr.bf16.mxu0 0
    %2318 = vmatpush2.bf16.msra.mxu0 0
    %2319 = vmatprep.subr.bf16.mxu0 0
    %2320 = vmatpush2.bf16.msra.mxu0 0
    %2321 = vmatprep.subr.bf16.mxu0 0
    %2322 = vmatpush2.bf16.msra.mxu0 0
    %2323 = vmatprep.subr.bf16.mxu0 0
    %2324 = vmatpush2.bf16.msra.mxu0 0
    %2325 = vmatprep.mubr.bf16.mxu0 0
    %2326 = vmatmul.mubr.bf16.gmra.mxu0 %v2224
    %v2327 = vpop.f32.mrf.mxu0
    %v2328 = vadd.f32 %v2244, %v2327
    %v2329 = vpop.f32.mrf.mxu0
    %v2330 = vpop.f32.mrf.mxu0
    %v2331 = vadd.f32 %v2244, %v2330
    %v2332 = vpop.f32.mrf.mxu0
    %2333 = vdwg.mxu0
    %v2334 = vadd.f32 %v2103, %v2328
    %v2335 = vadd.f32 %v2104, %v2331
    %v2336 = vsel %vm85, %v2334, 0.0
    %2337 = vadd.xlane.f32.xlu0 %v2336
    %v2338 = vpop.xlane.xlu0 %2337
    %v2339 = vsel %vm85, %v2335, 0.0
    %2340 = vadd.xlane.f32.xlu0 %v2339
    %v2341 = vpop.xlane.xlu0 %2340
    %v2342 = vmul.f32 %v2338, %v92
    %v2343 = vmul.f32 %v2341, %v92
    %v2344 = vsub.f32 %v2334, %v2342
    %v2345 = vsub.f32 %v2335, %v2343
    %v2346 = vmul.f32 %v2344, %v2344
    %v2347 = vmul.f32 %v2345, %v2345
    %v2348 = vsel %vm85, %v2346, 0.0
    %2349 = vadd.xlane.f32.xlu0 %v2348
    %v2350 = vpop.xlane.xlu0 %2349
    %v2351 = vsel %vm85, %v2347, 0.0
    %2352 = vadd.xlane.f32.xlu0 %v2351
    %v2353 = vpop.xlane.xlu0 %2352
    %v2354 = vmul.f32 %v2350, %v92
    %v2355 = vmul.f32 %v2353, %v92
    %v2356 = vadd.f32 %v2354, 1e-05
    %v2357 = vadd.f32 %v2355, 1e-05
    %v2358 = vrsqrt.pop %v2356
    %v2359 = vrsqrt.pop %v2357
    %v2360 = vmul.f32 %v2344, %v2358
    %v2361 = vmul.f32 %v2345, %v2359
    %v2362 = vlaneseq
    %v2363 = vshrl.u32 %v2362, 7
    %v2364 = vsub.s32 1, %v2363
    %v2365 = vrot.slane %v69, %v2364
    %v2366 = vmul.f32 %v2360, %v2365
    %v2367 = vmul.f32 %v2361, %v2365
    %v2368 = vlaneseq
    %v2369 = vshrl.u32 %v2368, 7
    %v2370 = vsub.s32 1, %v2369
    %v2371 = vrot.slane %v70, %v2370
    %v2372 = vadd.f32 %v2366, %v2371
    %v2373 = vadd.f32 %v2367, %v2371
    %v2374 = vpack.c.bf16 %v2373, %v2372
    %s2375 = scalar_lea.vmem %s4, 16
    %v2376 = vld [vmem:[%s2375] sm:$0xf]
    %v2377 = vld [vmem:[%s2375 + $0x4] sm:$0xf]
    %v2378 = vld [vmem:[%s2375 + $0x8] sm:$0xf]
    %v2379 = vld [vmem:[%s2375 + $0xc] sm:$0xf]
    %v2380 = vlaneseq
    %v2381 = vshrl.u32 %v2380, 7
    %v2382 = vsub.s32 1, %v2381
    %v2383 = vrot.slane %v71, %v2382
    %v2388 = vunpack.c.l.b16 %v2376
    %v2389 = vunpack.c.l.b16 %v2377
    %v2390 = vunpack.c.l.b16 %v2378
    %v2391 = vunpack.c.l.b16 %v2379
    %v2392 = vpack.c.b16 %v2389, %v2388
    %v2393 = vpack.c.b16 %v2391, %v2390
    %v2397 = vsel %vm85, %v2374, 0
    %2399 = vmatprep.subr.bf16.mxu0 0
    %2400 = vmatpush1.bf16.msra.mxu0 0
    %2401 = vmatprep.subr.bf16.mxu0 0
    %2402 = vmatpush1.bf16.msra.mxu0 0
    %2403 = vmatprep.subr.bf16.mxu0 0
    %2404 = vmatpush1.bf16.msra.mxu0 0
    %2405 = vmatprep.subr.bf16.mxu0 0
    %2406 = vmatpush1.bf16.msra.mxu0 0
    %2407 = vmatprep.subr.bf16.mxu0 0
    %2408 = vmatpush1.bf16.msra.mxu0 0
    %2409 = vmatprep.subr.bf16.mxu0 0
    %2410 = vmatpush1.bf16.msra.mxu0 0
    %2411 = vmatprep.subr.bf16.mxu0 0
    %2412 = vmatpush1.bf16.msra.mxu0 %v2393
    %2413 = vmatprep.subr.bf16.mxu0 0
    %2414 = vmatpush1.bf16.msra.mxu0 %v2392
    %2415 = vmatprep.subr.bf16.mxu0 0
    %2416 = vmatpush2.bf16.msra.mxu0 0
    %2417 = vmatprep.subr.bf16.mxu0 0
    %2418 = vmatpush2.bf16.msra.mxu0 0
    %2419 = vmatprep.subr.bf16.mxu0 0
    %2420 = vmatpush2.bf16.msra.mxu0 0
    %2421 = vmatprep.subr.bf16.mxu0 0
    %2422 = vmatpush2.bf16.msra.mxu0 0
    %2423 = vmatprep.subr.bf16.mxu0 0
    %2424 = vmatpush2.bf16.msra.mxu0 0
    %2425 = vmatprep.subr.bf16.mxu0 0
    %2426 = vmatpush2.bf16.msra.mxu0 0
    %2427 = vmatprep.subr.bf16.mxu0 0
    %2428 = vmatpush2.bf16.msra.mxu0 0
    %2429 = vmatprep.subr.bf16.mxu0 0
    %2430 = vmatpush2.bf16.msra.mxu0 0
    %2431 = vmatprep.mubr.bf16.mxu0 0
    %2432 = vmatmul.mubr.bf16.gmra.mxu0 %v2397
    %v2433 = vpop.f32.mrf.mxu0
    %v2434 = vadd.f32 %v2383, %v2433
    %v2435 = vpop.f32.mrf.mxu0
    %v2436 = vpop.f32.mrf.mxu0
    %v2437 = vadd.f32 %v2383, %v2436
    %v2438 = vpop.f32.mrf.mxu0
    %2439 = vdwg.mxu0
    %2441 = vrot.lane.b32.xlu0 %v2434, 96
    %v2442 = vpop.permute.xlu0 %2441
    %v2443 = vsel %vm193, %v2434, 0
    %v2445 = vsel %vm193, %v2442, 0
    %2447 = vmatprep.subr.mxu0 0.0
    %2448 = vmatpush1.xpose.msra.mxu0 0.0
    %2449 = vmatprep.subr.mxu0 0.0
    %2450 = vmatpush1.xpose.msra.mxu0 0.0
    %2451 = vmatprep.subr.mxu0 0.0
    %2452 = vmatpush1.xpose.msra.mxu0 0.0
    %2453 = vmatprep.subr.mxu0 0.0
    %2454 = vmatpush1.xpose.msra.mxu0 0.0
    %2455 = vmatprep.subr.mxu0 0.0
    %2456 = vmatpush1.xpose.msra.mxu0 0.0
    %2457 = vmatprep.subr.mxu0 0.0
    %2458 = vmatpush1.xpose.msra.mxu0 0.0
    %2459 = vmatprep.subr.mxu0 0.0
    %2460 = vmatpush1.xpose.msra.mxu0 0.0
    %2461 = vmatprep.subr.mxu0 0.0
    %2462 = vmatpush1.xpose.msra.mxu0 0.0
    %2463 = vmatprep.subr.mxu0 0.0
    %2464 = vmatpush1.xpose.msra.mxu0 0.0
    %2465 = vmatprep.subr.mxu0 0.0
    %2466 = vmatpush1.xpose.msra.mxu0 0.0
    %2467 = vmatprep.subr.mxu0 0.0
    %2468 = vmatpush1.xpose.msra.mxu0 0.0
    %2469 = vmatprep.subr.mxu0 0.0
    %2470 = vmatpush1.xpose.msra.mxu0 0.0
    %2471 = vmatprep.subr.mxu0 0.0
    %2472 = vmatpush1.xpose.msra.mxu0 0.0
    %2473 = vmatprep.subr.mxu0 0.0
    %2474 = vmatpush1.xpose.msra.mxu0 0.0
    %2475 = vmatprep.subr.mxu0 0.0
    %2476 = vmatpush1.xpose.msra.mxu0 0.0
    %2477 = vmatprep.subr.mxu0 0.0
    %2478 = vmatpush1.xpose.msra.mxu0 %v2445
    %2479 = vmatprep.subr.mxu0 0.0
    %2480 = vmatpush2.xpose.msra.mxu0 0.0
    %2481 = vmatprep.subr.mxu0 0.0
    %2482 = vmatpush2.xpose.msra.mxu0 0.0
    %2483 = vmatprep.subr.mxu0 0.0
    %2484 = vmatpush2.xpose.msra.mxu0 0.0
    %2485 = vmatprep.subr.mxu0 0.0
    %2486 = vmatpush2.xpose.msra.mxu0 0.0
    %2487 = vmatprep.subr.mxu0 0.0
    %2488 = vmatpush2.xpose.msra.mxu0 0.0
    %2489 = vmatprep.subr.mxu0 0.0
    %2490 = vmatpush2.xpose.msra.mxu0 0.0
    %2491 = vmatprep.subr.mxu0 0.0
    %2492 = vmatpush2.xpose.msra.mxu0 0.0
    %2493 = vmatprep.subr.mxu0 0.0
    %2494 = vmatpush2.xpose.msra.mxu0 0.0
    %2495 = vmatprep.subr.mxu0 0.0
    %2496 = vmatpush2.xpose.msra.mxu0 0.0
    %2497 = vmatprep.subr.mxu0 0.0
    %2498 = vmatpush2.xpose.msra.mxu0 0.0
    %2499 = vmatprep.subr.mxu0 0.0
    %2500 = vmatpush2.xpose.msra.mxu0 0.0
    %2501 = vmatprep.subr.mxu0 0.0
    %2502 = vmatpush2.xpose.msra.mxu0 0.0
    %2503 = vmatprep.subr.mxu0 0.0
    %2504 = vmatpush2.xpose.msra.mxu0 0.0
    %2505 = vmatprep.subr.mxu0 0.0
    %2506 = vmatpush2.xpose.msra.mxu0 0.0
    %2507 = vmatprep.subr.mxu0 0.0
    %2508 = vmatpush2.xpose.msra.mxu0 0.0
    %2509 = vmatprep.subr.mxu0 0.0
    %2510 = vmatpush2.xpose.msra.mxu0 0.0
    %2511 = vmatprep.mubr.f32.mxu0 0.0
    %2512 = vmatmul.mubr.f32.gmra.mxu0 %v2443
    %v2513 = vpop.f32.mrf.mxu0
    %v2514 = vadd.f32 %v68, %v2513
    %v2515 = vpop.f32.mrf.mxu0
    %2516 = vdwg.mxu0
    %v2517 = vsel %vm193, %v2514, -inf
    %2518 = vmax.xlane.f32.xlu0 %v2517
    %v2519 = vpop.xlane.xlu0 %2518
    %v2520 = vsub.f32 %v2514, %v2519
    %v2521 = vmul.f32 %v2520, 1.442695
    %v2522 = vpow.pop %v2521
    %v2523 = vsel %vm193, %v2522, 0.0
    %2524 = vadd.xlane.f32.xlu0 %v2523
    %v2525 = vpop.xlane.xlu0 %2524
    %v2526 = vrcp.pop %v2525
    %v2527 = vmul.f32 %v2522, %v2526
    %2528 = vrot.lane.b32.xlu0 %v2434, 64
    %v2529 = vpop.permute.xlu0 %2528
    %v2532 = vsel %vm193, %v2527, 0
    %2534 = vmatprep.subr.mxu0 0.0
    %2535 = vmatpush1.msra.mxu0 0.0
    %2536 = vmatprep.subr.mxu0 0.0
    %2537 = vmatpush1.msra.mxu0 0.0
    %2538 = vmatprep.subr.mxu0 0.0
    %2539 = vmatpush1.msra.mxu0 0.0
    %2540 = vmatprep.subr.mxu0 0.0
    %2541 = vmatpush1.msra.mxu0 0.0
    %2542 = vmatprep.subr.mxu0 0.0
    %2543 = vmatpush1.msra.mxu0 0.0
    %2544 = vmatprep.subr.mxu0 0.0
    %2545 = vmatpush1.msra.mxu0 0.0
    %2546 = vmatprep.subr.mxu0 0.0
    %2547 = vmatpush1.msra.mxu0 0.0
    %2548 = vmatprep.subr.mxu0 0.0
    %2549 = vmatpush1.msra.mxu0 0.0
    %2550 = vmatprep.subr.mxu0 0.0
    %2551 = vmatpush1.msra.mxu0 0.0
    %2552 = vmatprep.subr.mxu0 0.0
    %2553 = vmatpush1.msra.mxu0 0.0
    %2554 = vmatprep.subr.mxu0 0.0
    %2555 = vmatpush1.msra.mxu0 0.0
    %2556 = vmatprep.subr.mxu0 0.0
    %2557 = vmatpush1.msra.mxu0 0.0
    %2558 = vmatprep.subr.mxu0 0.0
    %2559 = vmatpush1.msra.mxu0 0.0
    %2560 = vmatprep.subr.mxu0 0.0
    %2561 = vmatpush1.msra.mxu0 0.0
    %2562 = vmatprep.subr.mxu0 0.0
    %2563 = vmatpush1.msra.mxu0 0.0
    %2564 = vmatprep.subr.mxu0 0.0
    %2565 = vmatpush1.msra.mxu0 %v2529
    %2566 = vmatprep.subr.mxu0 0.0
    %2567 = vmatpush2.msra.mxu0 0.0
    %2568 = vmatprep.subr.mxu0 0.0
    %2569 = vmatpush2.msra.mxu0 0.0
    %2570 = vmatprep.subr.mxu0 0.0
    %2571 = vmatpush2.msra.mxu0 0.0
    %2572 = vmatprep.subr.mxu0 0.0
    %2573 = vmatpush2.msra.mxu0 0.0
    %2574 = vmatprep.subr.mxu0 0.0
    %2575 = vmatpush2.msra.mxu0 0.0
    %2576 = vmatprep.subr.mxu0 0.0
    %2577 = vmatpush2.msra.mxu0 0.0
    %2578 = vmatprep.subr.mxu0 0.0
    %2579 = vmatpush2.msra.mxu0 0.0
    %2580 = vmatprep.subr.mxu0 0.0
    %2581 = vmatpush2.msra.mxu0 0.0
    %2582 = vmatprep.subr.mxu0 0.0
    %2583 = vmatpush2.msra.mxu0 0.0
    %2584 = vmatprep.subr.mxu0 0.0
    %2585 = vmatpush2.msra.mxu0 0.0
    %2586 = vmatprep.subr.mxu0 0.0
    %2587 = vmatpush2.msra.mxu0 0.0
    %2588 = vmatprep.subr.mxu0 0.0
    %2589 = vmatpush2.msra.mxu0 0.0
    %2590 = vmatprep.subr.mxu0 0.0
    %2591 = vmatpush2.msra.mxu0 0.0
    %2592 = vmatprep.subr.mxu0 0.0
    %2593 = vmatpush2.msra.mxu0 0.0
    %2594 = vmatprep.subr.mxu0 0.0
    %2595 = vmatpush2.msra.mxu0 0.0
    %2596 = vmatprep.subr.mxu0 0.0
    %2597 = vmatpush2.msra.mxu0 0.0
    %2598 = vmatprep.mubr.f32.mxu0 0.0
    %2599 = vmatmul.mubr.f32.gmra.mxu0 %v2532
    %v2600 = vpop.f32.mrf.mxu0
    %v2601 = vadd.f32 0.0, %v2600
    %v2602 = vpop.f32.mrf.mxu0
    %2603 = vdwg.mxu0
    %2604 = vrot.lane.b32.xlu0 %v2434, 120
    %v2605 = vpop.permute.xlu0 %2604
    %2606 = vrot.lane.b32.xlu0 %v2434, 88
    %v2607 = vpop.permute.xlu0 %2606
    %v2608 = vsel %vm193, %v2605, 0
    %v2610 = vsel %vm193, %v2607, 0
    %2612 = vmatprep.subr.mxu0 0.0
    %2613 = vmatpush1.xpose.msra.mxu0 0.0
    %2614 = vmatprep.subr.mxu0 0.0
    %2615 = vmatpush1.xpose.msra.mxu0 0.0
    %2616 = vmatprep.subr.mxu0 0.0
    %2617 = vmatpush1.xpose.msra.mxu0 0.0
    %2618 = vmatprep.subr.mxu0 0.0
    %2619 = vmatpush1.xpose.msra.mxu0 0.0
    %2620 = vmatprep.subr.mxu0 0.0
    %2621 = vmatpush1.xpose.msra.mxu0 0.0
    %2622 = vmatprep.subr.mxu0 0.0
    %2623 = vmatpush1.xpose.msra.mxu0 0.0
    %2624 = vmatprep.subr.mxu0 0.0
    %2625 = vmatpush1.xpose.msra.mxu0 0.0
    %2626 = vmatprep.subr.mxu0 0.0
    %2627 = vmatpush1.xpose.msra.mxu0 0.0
    %2628 = vmatprep.subr.mxu0 0.0
    %2629 = vmatpush1.xpose.msra.mxu0 0.0
    %2630 = vmatprep.subr.mxu0 0.0
    %2631 = vmatpush1.xpose.msra.mxu0 0.0
    %2632 = vmatprep.subr.mxu0 0.0
    %2633 = vmatpush1.xpose.msra.mxu0 0.0
    %2634 = vmatprep.subr.mxu0 0.0
    %2635 = vmatpush1.xpose.msra.mxu0 0.0
    %2636 = vmatprep.subr.mxu0 0.0
    %2637 = vmatpush1.xpose.msra.mxu0 0.0
    %2638 = vmatprep.subr.mxu0 0.0
    %2639 = vmatpush1.xpose.msra.mxu0 0.0
    %2640 = vmatprep.subr.mxu0 0.0
    %2641 = vmatpush1.xpose.msra.mxu0 0.0
    %2642 = vmatprep.subr.mxu0 0.0
    %2643 = vmatpush1.xpose.msra.mxu0 %v2610
    %2644 = vmatprep.subr.mxu0 0.0
    %2645 = vmatpush2.xpose.msra.mxu0 0.0
    %2646 = vmatprep.subr.mxu0 0.0
    %2647 = vmatpush2.xpose.msra.mxu0 0.0
    %2648 = vmatprep.subr.mxu0 0.0
    %2649 = vmatpush2.xpose.msra.mxu0 0.0
    %2650 = vmatprep.subr.mxu0 0.0
    %2651 = vmatpush2.xpose.msra.mxu0 0.0
    %2652 = vmatprep.subr.mxu0 0.0
    %2653 = vmatpush2.xpose.msra.mxu0 0.0
    %2654 = vmatprep.subr.mxu0 0.0
    %2655 = vmatpush2.xpose.msra.mxu0 0.0
    %2656 = vmatprep.subr.mxu0 0.0
    %2657 = vmatpush2.xpose.msra.mxu0 0.0
    %2658 = vmatprep.subr.mxu0 0.0
    %2659 = vmatpush2.xpose.msra.mxu0 0.0
    %2660 = vmatprep.subr.mxu0 0.0
    %2661 = vmatpush2.xpose.msra.mxu0 0.0
    %2662 = vmatprep.subr.mxu0 0.0
    %2663 = vmatpush2.xpose.msra.mxu0 0.0
    %2664 = vmatprep.subr.mxu0 0.0
    %2665 = vmatpush2.xpose.msra.mxu0 0.0
    %2666 = vmatprep.subr.mxu0 0.0
    %2667 = vmatpush2.xpose.msra.mxu0 0.0
    %2668 = vmatprep.subr.mxu0 0.0
    %2669 = vmatpush2.xpose.msra.mxu0 0.0
    %2670 = vmatprep.subr.mxu0 0.0
    %2671 = vmatpush2.xpose.msra.mxu0 0.0
    %2672 = vmatprep.subr.mxu0 0.0
    %2673 = vmatpush2.xpose.msra.mxu0 0.0
    %2674 = vmatprep.subr.mxu0 0.0
    %2675 = vmatpush2.xpose.msra.mxu0 0.0
    %2676 = vmatprep.mubr.f32.mxu0 0.0
    %2677 = vmatmul.mubr.f32.gmra.mxu0 %v2608
    %v2678 = vpop.f32.mrf.mxu0
    %v2679 = vadd.f32 %v68, %v2678
    %v2680 = vpop.f32.mrf.mxu0
    %2681 = vdwg.mxu0
    %v2682 = vsel %vm193, %v2679, -inf
    %2683 = vmax.xlane.f32.xlu0 %v2682
    %v2684 = vpop.xlane.xlu0 %2683
    %v2685 = vsub.f32 %v2679, %v2684
    %v2686 = vmul.f32 %v2685, 1.442695
    %v2687 = vpow.pop %v2686
    %v2688 = vsel %vm193, %v2687, 0.0
    %2689 = vadd.xlane.f32.xlu0 %v2688
    %v2690 = vpop.xlane.xlu0 %2689
    %v2691 = vrcp.pop %v2690
    %v2692 = vmul.f32 %v2687, %v2691
    %2693 = vrot.lane.b32.xlu0 %v2434, 56
    %v2694 = vpop.permute.xlu0 %2693
    %v2697 = vsel %vm193, %v2692, 0
    %2699 = vmatprep.subr.mxu0 0.0
    %2700 = vmatpush1.msra.mxu0 0.0
    %2701 = vmatprep.subr.mxu0 0.0
    %2702 = vmatpush1.msra.mxu0 0.0
    %2703 = vmatprep.subr.mxu0 0.0
    %2704 = vmatpush1.msra.mxu0 0.0
    %2705 = vmatprep.subr.mxu0 0.0
    %2706 = vmatpush1.msra.mxu0 0.0
    %2707 = vmatprep.subr.mxu0 0.0
    %2708 = vmatpush1.msra.mxu0 0.0
    %2709 = vmatprep.subr.mxu0 0.0
    %2710 = vmatpush1.msra.mxu0 0.0
    %2711 = vmatprep.subr.mxu0 0.0
    %2712 = vmatpush1.msra.mxu0 0.0
    %2713 = vmatprep.subr.mxu0 0.0
    %2714 = vmatpush1.msra.mxu0 0.0
    %2715 = vmatprep.subr.mxu0 0.0
    %2716 = vmatpush1.msra.mxu0 0.0
    %2717 = vmatprep.subr.mxu0 0.0
    %2718 = vmatpush1.msra.mxu0 0.0
    %2719 = vmatprep.subr.mxu0 0.0
    %2720 = vmatpush1.msra.mxu0 0.0
    %2721 = vmatprep.subr.mxu0 0.0
    %2722 = vmatpush1.msra.mxu0 0.0
    %2723 = vmatprep.subr.mxu0 0.0
    %2724 = vmatpush1.msra.mxu0 0.0
    %2725 = vmatprep.subr.mxu0 0.0
    %2726 = vmatpush1.msra.mxu0 0.0
    %2727 = vmatprep.subr.mxu0 0.0
    %2728 = vmatpush1.msra.mxu0 0.0
    %2729 = vmatprep.subr.mxu0 0.0
    %2730 = vmatpush1.msra.mxu0 %v2694
    %2731 = vmatprep.subr.mxu0 0.0
    %2732 = vmatpush2.msra.mxu0 0.0
    %2733 = vmatprep.subr.mxu0 0.0
    %2734 = vmatpush2.msra.mxu0 0.0
    %2735 = vmatprep.subr.mxu0 0.0
    %2736 = vmatpush2.msra.mxu0 0.0
    %2737 = vmatprep.subr.mxu0 0.0
    %2738 = vmatpush2.msra.mxu0 0.0
    %2739 = vmatprep.subr.mxu0 0.0
    %2740 = vmatpush2.msra.mxu0 0.0
    %2741 = vmatprep.subr.mxu0 0.0
    %2742 = vmatpush2.msra.mxu0 0.0
    %2743 = vmatprep.subr.mxu0 0.0
    %2744 = vmatpush2.msra.mxu0 0.0
    %2745 = vmatprep.subr.mxu0 0.0
    %2746 = vmatpush2.msra.mxu0 0.0
    %2747 = vmatprep.subr.mxu0 0.0
    %2748 = vmatpush2.msra.mxu0 0.0
    %2749 = vmatprep.subr.mxu0 0.0
    %2750 = vmatpush2.msra.mxu0 0.0
    %2751 = vmatprep.subr.mxu0 0.0
    %2752 = vmatpush2.msra.mxu0 0.0
    %2753 = vmatprep.subr.mxu0 0.0
    %2754 = vmatpush2.msra.mxu0 0.0
    %2755 = vmatprep.subr.mxu0 0.0
    %2756 = vmatpush2.msra.mxu0 0.0
    %2757 = vmatprep.subr.mxu0 0.0
    %2758 = vmatpush2.msra.mxu0 0.0
    %2759 = vmatprep.subr.mxu0 0.0
    %2760 = vmatpush2.msra.mxu0 0.0
    %2761 = vmatprep.subr.mxu0 0.0
    %2762 = vmatpush2.msra.mxu0 0.0
    %2763 = vmatprep.mubr.f32.mxu0 0.0
    %2764 = vmatmul.mubr.f32.gmra.mxu0 %v2697
    %v2765 = vpop.f32.mrf.mxu0
    %v2766 = vadd.f32 0.0, %v2765
    %v2767 = vpop.f32.mrf.mxu0
    %2768 = vdwg.mxu0
    %v2770 = vsel %vm193, %v2766, 0
    %2772 = vmatprep.subr.mxu0 0.0
    %2773 = vmatpush1.msra.mxu0 0.0
    %2774 = vmatprep.subr.mxu0 0.0
    %2775 = vmatpush1.msra.mxu0 0.0
    %2776 = vmatprep.subr.mxu0 0.0
    %2777 = vmatpush1.msra.mxu0 0.0
    %2778 = vmatprep.subr.mxu0 0.0
    %2779 = vmatpush1.msra.mxu0 0.0
    %2780 = vmatprep.subr.mxu0 0.0
    %2781 = vmatpush1.msra.mxu0 0.0
    %2782 = vmatprep.subr.mxu0 0.0
    %2783 = vmatpush1.msra.mxu0 0.0
    %2784 = vmatprep.subr.mxu0 0.0
    %2785 = vmatpush1.msra.mxu0 0.0
    %2786 = vmatprep.subr.mxu0 0.0
    %2787 = vmatpush1.msra.mxu0 0.0
    %2788 = vmatprep.subr.mxu0 0.0
    %2789 = vmatpush1.msra.mxu0 0.0
    %2790 = vmatprep.subr.mxu0 0.0
    %2791 = vmatpush1.msra.mxu0 0.0
    %2792 = vmatprep.subr.mxu0 0.0
    %2793 = vmatpush1.msra.mxu0 0.0
    %2794 = vmatprep.subr.mxu0 0.0
    %2795 = vmatpush1.msra.mxu0 0.0
    %2796 = vmatprep.subr.mxu0 0.0
    %2797 = vmatpush1.msra.mxu0 0.0
    %2798 = vmatprep.subr.mxu0 0.0
    %2799 = vmatpush1.msra.mxu0 0.0
    %2800 = vmatprep.subr.mxu0 0.0
    %2801 = vmatpush1.msra.mxu0 0.0
    %2802 = vmatprep.subr.mxu0 0.0
    %2803 = vmatpush1.msra.mxu0 %v77
    %2804 = vmatprep.subr.mxu0 0.0
    %2805 = vmatpush2.msra.mxu0 0.0
    %2806 = vmatprep.subr.mxu0 0.0
    %2807 = vmatpush2.msra.mxu0 0.0
    %2808 = vmatprep.subr.mxu0 0.0
    %2809 = vmatpush2.msra.mxu0 0.0
    %2810 = vmatprep.subr.mxu0 0.0
    %2811 = vmatpush2.msra.mxu0 0.0
    %2812 = vmatprep.subr.mxu0 0.0
    %2813 = vmatpush2.msra.mxu0 0.0
    %2814 = vmatprep.subr.mxu0 0.0
    %2815 = vmatpush2.msra.mxu0 0.0
    %2816 = vmatprep.subr.mxu0 0.0
    %2817 = vmatpush2.msra.mxu0 0.0
    %2818 = vmatprep.subr.mxu0 0.0
    %2819 = vmatpush2.msra.mxu0 0.0
    %2820 = vmatprep.subr.mxu0 0.0
    %2821 = vmatpush2.msra.mxu0 0.0
    %2822 = vmatprep.subr.mxu0 0.0
    %2823 = vmatpush2.msra.mxu0 0.0
    %2824 = vmatprep.subr.mxu0 0.0
    %2825 = vmatpush2.msra.mxu0 0.0
    %2826 = vmatprep.subr.mxu0 0.0
    %2827 = vmatpush2.msra.mxu0 0.0
    %2828 = vmatprep.subr.mxu0 0.0
    %2829 = vmatpush2.msra.mxu0 0.0
    %2830 = vmatprep.subr.mxu0 0.0
    %2831 = vmatpush2.msra.mxu0 0.0
    %2832 = vmatprep.subr.mxu0 0.0
    %2833 = vmatpush2.msra.mxu0 0.0
    %2834 = vmatprep.subr.mxu0 0.0
    %2835 = vmatpush2.msra.mxu0 0.0
    %2836 = vmatprep.mubr.f32.mxu0 0.0
    %2837 = vmatmul.mubr.f32.gmra.mxu0 %v2770
    %v2838 = vpop.f32.mrf.mxu0
    %v2839 = vadd.f32 0.0, %v2838
    %v2840 = vpop.f32.mrf.mxu0
    %2841 = vdwg.mxu0
    %v2843 = vsel %vm193, %v2601, 0
    %2845 = vmatprep.subr.mxu0 0.0
    %2846 = vmatpush1.msra.mxu0 0.0
    %2847 = vmatprep.subr.mxu0 0.0
    %2848 = vmatpush1.msra.mxu0 0.0
    %2849 = vmatprep.subr.mxu0 0.0
    %2850 = vmatpush1.msra.mxu0 0.0
    %2851 = vmatprep.subr.mxu0 0.0
    %2852 = vmatpush1.msra.mxu0 0.0
    %2853 = vmatprep.subr.mxu0 0.0
    %2854 = vmatpush1.msra.mxu0 0.0
    %2855 = vmatprep.subr.mxu0 0.0
    %2856 = vmatpush1.msra.mxu0 0.0
    %2857 = vmatprep.subr.mxu0 0.0
    %2858 = vmatpush1.msra.mxu0 0.0
    %2859 = vmatprep.subr.mxu0 0.0
    %2860 = vmatpush1.msra.mxu0 0.0
    %2861 = vmatprep.subr.mxu0 0.0
    %2862 = vmatpush1.msra.mxu0 0.0
    %2863 = vmatprep.subr.mxu0 0.0
    %2864 = vmatpush1.msra.mxu0 0.0
    %2865 = vmatprep.subr.mxu0 0.0
    %2866 = vmatpush1.msra.mxu0 0.0
    %2867 = vmatprep.subr.mxu0 0.0
    %2868 = vmatpush1.msra.mxu0 0.0
    %2869 = vmatprep.subr.mxu0 0.0
    %2870 = vmatpush1.msra.mxu0 0.0
    %2871 = vmatprep.subr.mxu0 0.0
    %2872 = vmatpush1.msra.mxu0 0.0
    %2873 = vmatprep.subr.mxu0 0.0
    %2874 = vmatpush1.msra.mxu0 0.0
    %2875 = vmatprep.subr.mxu0 0.0
    %2876 = vmatpush1.msra.mxu0 %v76
    %2877 = vmatprep.subr.mxu0 0.0
    %2878 = vmatpush2.msra.mxu0 0.0
    %2879 = vmatprep.subr.mxu0 0.0
    %2880 = vmatpush2.msra.mxu0 0.0
    %2881 = vmatprep.subr.mxu0 0.0
    %2882 = vmatpush2.msra.mxu0 0.0
    %2883 = vmatprep.subr.mxu0 0.0
    %2884 = vmatpush2.msra.mxu0 0.0
    %2885 = vmatprep.subr.mxu0 0.0
    %2886 = vmatpush2.msra.mxu0 0.0
    %2887 = vmatprep.subr.mxu0 0.0
    %2888 = vmatpush2.msra.mxu0 0.0
    %2889 = vmatprep.subr.mxu0 0.0
    %2890 = vmatpush2.msra.mxu0 0.0
    %2891 = vmatprep.subr.mxu0 0.0
    %2892 = vmatpush2.msra.mxu0 0.0
    %2893 = vmatprep.subr.mxu0 0.0
    %2894 = vmatpush2.msra.mxu0 0.0
    %2895 = vmatprep.subr.mxu0 0.0
    %2896 = vmatpush2.msra.mxu0 0.0
    %2897 = vmatprep.subr.mxu0 0.0
    %2898 = vmatpush2.msra.mxu0 0.0
    %2899 = vmatprep.subr.mxu0 0.0
    %2900 = vmatpush2.msra.mxu0 0.0
    %2901 = vmatprep.subr.mxu0 0.0
    %2902 = vmatpush2.msra.mxu0 0.0
    %2903 = vmatprep.subr.mxu0 0.0
    %2904 = vmatpush2.msra.mxu0 0.0
    %2905 = vmatprep.subr.mxu0 0.0
    %2906 = vmatpush2.msra.mxu0 0.0
    %2907 = vmatprep.subr.mxu0 0.0
    %2908 = vmatpush2.msra.mxu0 0.0
    %2909 = vmatprep.mubr.f32.mxu0 0.0
    %2910 = vmatmul.mubr.f32.gmra.mxu0 %v2843
    %v2911 = vpop.f32.mrf.mxu0
    %v2912 = vadd.f32 %v2839, %v2911
    %v2913 = vpop.f32.mrf.mxu0
    %2914 = vdwg.mxu0
    %2915 = vrot.lane.b32.xlu0 %v2434, 112
    %v2916 = vpop.permute.xlu0 %2915
    %2917 = vrot.lane.b32.xlu0 %v2434, 80
    %v2918 = vpop.permute.xlu0 %2917
    %v2919 = vsel %vm193, %v2916, 0
    %v2921 = vsel %vm193, %v2918, 0
    %2923 = vmatprep.subr.mxu0 0.0
    %2924 = vmatpush1.xpose.msra.mxu0 0.0
    %2925 = vmatprep.subr.mxu0 0.0
    %2926 = vmatpush1.xpose.msra.mxu0 0.0
    %2927 = vmatprep.subr.mxu0 0.0
    %2928 = vmatpush1.xpose.msra.mxu0 0.0
    %2929 = vmatprep.subr.mxu0 0.0
    %2930 = vmatpush1.xpose.msra.mxu0 0.0
    %2931 = vmatprep.subr.mxu0 0.0
    %2932 = vmatpush1.xpose.msra.mxu0 0.0
    %2933 = vmatprep.subr.mxu0 0.0
    %2934 = vmatpush1.xpose.msra.mxu0 0.0
    %2935 = vmatprep.subr.mxu0 0.0
    %2936 = vmatpush1.xpose.msra.mxu0 0.0
    %2937 = vmatprep.subr.mxu0 0.0
    %2938 = vmatpush1.xpose.msra.mxu0 0.0
    %2939 = vmatprep.subr.mxu0 0.0
    %2940 = vmatpush1.xpose.msra.mxu0 0.0
    %2941 = vmatprep.subr.mxu0 0.0
    %2942 = vmatpush1.xpose.msra.mxu0 0.0
    %2943 = vmatprep.subr.mxu0 0.0
    %2944 = vmatpush1.xpose.msra.mxu0 0.0
    %2945 = vmatprep.subr.mxu0 0.0
    %2946 = vmatpush1.xpose.msra.mxu0 0.0
    %2947 = vmatprep.subr.mxu0 0.0
    %2948 = vmatpush1.xpose.msra.mxu0 0.0
    %2949 = vmatprep.subr.mxu0 0.0
    %2950 = vmatpush1.xpose.msra.mxu0 0.0
    %2951 = vmatprep.subr.mxu0 0.0
    %2952 = vmatpush1.xpose.msra.mxu0 0.0
    %2953 = vmatprep.subr.mxu0 0.0
    %2954 = vmatpush1.xpose.msra.mxu0 %v2921
    %2955 = vmatprep.subr.mxu0 0.0
    %2956 = vmatpush2.xpose.msra.mxu0 0.0
    %2957 = vmatprep.subr.mxu0 0.0
    %2958 = vmatpush2.xpose.msra.mxu0 0.0
    %2959 = vmatprep.subr.mxu0 0.0
    %2960 = vmatpush2.xpose.msra.mxu0 0.0
    %2961 = vmatprep.subr.mxu0 0.0
    %2962 = vmatpush2.xpose.msra.mxu0 0.0
    %2963 = vmatprep.subr.mxu0 0.0
    %2964 = vmatpush2.xpose.msra.mxu0 0.0
    %2965 = vmatprep.subr.mxu0 0.0
    %2966 = vmatpush2.xpose.msra.mxu0 0.0
    %2967 = vmatprep.subr.mxu0 0.0
    %2968 = vmatpush2.xpose.msra.mxu0 0.0
    %2969 = vmatprep.subr.mxu0 0.0
    %2970 = vmatpush2.xpose.msra.mxu0 0.0
    %2971 = vmatprep.subr.mxu0 0.0
    %2972 = vmatpush2.xpose.msra.mxu0 0.0
    %2973 = vmatprep.subr.mxu0 0.0
    %2974 = vmatpush2.xpose.msra.mxu0 0.0
    %2975 = vmatprep.subr.mxu0 0.0
    %2976 = vmatpush2.xpose.msra.mxu0 0.0
    %2977 = vmatprep.subr.mxu0 0.0
    %2978 = vmatpush2.xpose.msra.mxu0 0.0
    %2979 = vmatprep.subr.mxu0 0.0
    %2980 = vmatpush2.xpose.msra.mxu0 0.0
    %2981 = vmatprep.subr.mxu0 0.0
    %2982 = vmatpush2.xpose.msra.mxu0 0.0
    %2983 = vmatprep.subr.mxu0 0.0
    %2984 = vmatpush2.xpose.msra.mxu0 0.0
    %2985 = vmatprep.subr.mxu0 0.0
    %2986 = vmatpush2.xpose.msra.mxu0 0.0
    %2987 = vmatprep.mubr.f32.mxu0 0.0
    %2988 = vmatmul.mubr.f32.gmra.mxu0 %v2919
    %v2989 = vpop.f32.mrf.mxu0
    %v2990 = vadd.f32 %v68, %v2989
    %v2991 = vpop.f32.mrf.mxu0
    %2992 = vdwg.mxu0
    %v2993 = vsel %vm193, %v2990, -inf
    %2994 = vmax.xlane.f32.xlu0 %v2993
    %v2995 = vpop.xlane.xlu0 %2994
    %v2996 = vsub.f32 %v2990, %v2995
    %v2997 = vmul.f32 %v2996, 1.442695
    %v2998 = vpow.pop %v2997
    %v2999 = vsel %vm193, %v2998, 0.0
    %3000 = vadd.xlane.f32.xlu0 %v2999
    %v3001 = vpop.xlane.xlu0 %3000
    %v3002 = vrcp.pop %v3001
    %v3003 = vmul.f32 %v2998, %v3002
    %3004 = vrot.lane.b32.xlu0 %v2434, 48
    %v3005 = vpop.permute.xlu0 %3004
    %v3008 = vsel %vm193, %v3003, 0
    %3010 = vmatprep.subr.mxu0 0.0
    %3011 = vmatpush1.msra.mxu0 0.0
    %3012 = vmatprep.subr.mxu0 0.0
    %3013 = vmatpush1.msra.mxu0 0.0
    %3014 = vmatprep.subr.mxu0 0.0
    %3015 = vmatpush1.msra.mxu0 0.0
    %3016 = vmatprep.subr.mxu0 0.0
    %3017 = vmatpush1.msra.mxu0 0.0
    %3018 = vmatprep.subr.mxu0 0.0
    %3019 = vmatpush1.msra.mxu0 0.0
    %3020 = vmatprep.subr.mxu0 0.0
    %3021 = vmatpush1.msra.mxu0 0.0
    %3022 = vmatprep.subr.mxu0 0.0
    %3023 = vmatpush1.msra.mxu0 0.0
    %3024 = vmatprep.subr.mxu0 0.0
    %3025 = vmatpush1.msra.mxu0 0.0
    %3026 = vmatprep.subr.mxu0 0.0
    %3027 = vmatpush1.msra.mxu0 0.0
    %3028 = vmatprep.subr.mxu0 0.0
    %3029 = vmatpush1.msra.mxu0 0.0
    %3030 = vmatprep.subr.mxu0 0.0
    %3031 = vmatpush1.msra.mxu0 0.0
    %3032 = vmatprep.subr.mxu0 0.0
    %3033 = vmatpush1.msra.mxu0 0.0
    %3034 = vmatprep.subr.mxu0 0.0
    %3035 = vmatpush1.msra.mxu0 0.0
    %3036 = vmatprep.subr.mxu0 0.0
    %3037 = vmatpush1.msra.mxu0 0.0
    %3038 = vmatprep.subr.mxu0 0.0
    %3039 = vmatpush1.msra.mxu0 0.0
    %3040 = vmatprep.subr.mxu0 0.0
    %3041 = vmatpush1.msra.mxu0 %v3005
    %3042 = vmatprep.subr.mxu0 0.0
    %3043 = vmatpush2.msra.mxu0 0.0
    %3044 = vmatprep.subr.mxu0 0.0
    %3045 = vmatpush2.msra.mxu0 0.0
    %3046 = vmatprep.subr.mxu0 0.0
    %3047 = vmatpush2.msra.mxu0 0.0
    %3048 = vmatprep.subr.mxu0 0.0
    %3049 = vmatpush2.msra.mxu0 0.0
    %3050 = vmatprep.subr.mxu0 0.0
    %3051 = vmatpush2.msra.mxu0 0.0
    %3052 = vmatprep.subr.mxu0 0.0
    %3053 = vmatpush2.msra.mxu0 0.0
    %3054 = vmatprep.subr.mxu0 0.0
    %3055 = vmatpush2.msra.mxu0 0.0
    %3056 = vmatprep.subr.mxu0 0.0
    %3057 = vmatpush2.msra.mxu0 0.0
    %3058 = vmatprep.subr.mxu0 0.0
    %3059 = vmatpush2.msra.mxu0 0.0
    %3060 = vmatprep.subr.mxu0 0.0
    %3061 = vmatpush2.msra.mxu0 0.0
    %3062 = vmatprep.subr.mxu0 0.0
    %3063 = vmatpush2.msra.mxu0 0.0
    %3064 = vmatprep.subr.mxu0 0.0
    %3065 = vmatpush2.msra.mxu0 0.0
    %3066 = vmatprep.subr.mxu0 0.0
    %3067 = vmatpush2.msra.mxu0 0.0
    %3068 = vmatprep.subr.mxu0 0.0
    %3069 = vmatpush2.msra.mxu0 0.0
    %3070 = vmatprep.subr.mxu0 0.0
    %3071 = vmatpush2.msra.mxu0 0.0
    %3072 = vmatprep.subr.mxu0 0.0
    %3073 = vmatpush2.msra.mxu0 0.0
    %3074 = vmatprep.mubr.f32.mxu0 0.0
    %3075 = vmatmul.mubr.f32.gmra.mxu0 %v3008
    %v3076 = vpop.f32.mrf.mxu0
    %v3077 = vadd.f32 0.0, %v3076
    %v3078 = vpop.f32.mrf.mxu0
    %3079 = vdwg.mxu0
    %v3081 = vsel %vm193, %v3077, 0
    %3083 = vmatprep.subr.mxu0 0.0
    %3084 = vmatpush1.msra.mxu0 0.0
    %3085 = vmatprep.subr.mxu0 0.0
    %3086 = vmatpush1.msra.mxu0 0.0
    %3087 = vmatprep.subr.mxu0 0.0
    %3088 = vmatpush1.msra.mxu0 0.0
    %3089 = vmatprep.subr.mxu0 0.0
    %3090 = vmatpush1.msra.mxu0 0.0
    %3091 = vmatprep.subr.mxu0 0.0
    %3092 = vmatpush1.msra.mxu0 0.0
    %3093 = vmatprep.subr.mxu0 0.0
    %3094 = vmatpush1.msra.mxu0 0.0
    %3095 = vmatprep.subr.mxu0 0.0
    %3096 = vmatpush1.msra.mxu0 0.0
    %3097 = vmatprep.subr.mxu0 0.0
    %3098 = vmatpush1.msra.mxu0 0.0
    %3099 = vmatprep.subr.mxu0 0.0
    %3100 = vmatpush1.msra.mxu0 0.0
    %3101 = vmatprep.subr.mxu0 0.0
    %3102 = vmatpush1.msra.mxu0 0.0
    %3103 = vmatprep.subr.mxu0 0.0
    %3104 = vmatpush1.msra.mxu0 0.0
    %3105 = vmatprep.subr.mxu0 0.0
    %3106 = vmatpush1.msra.mxu0 0.0
    %3107 = vmatprep.subr.mxu0 0.0
    %3108 = vmatpush1.msra.mxu0 0.0
    %3109 = vmatprep.subr.mxu0 0.0
    %3110 = vmatpush1.msra.mxu0 0.0
    %3111 = vmatprep.subr.mxu0 0.0
    %3112 = vmatpush1.msra.mxu0 0.0
    %3113 = vmatprep.subr.mxu0 0.0
    %3114 = vmatpush1.msra.mxu0 %v78
    %3115 = vmatprep.subr.mxu0 0.0
    %3116 = vmatpush2.msra.mxu0 0.0
    %3117 = vmatprep.subr.mxu0 0.0
    %3118 = vmatpush2.msra.mxu0 0.0
    %3119 = vmatprep.subr.mxu0 0.0
    %3120 = vmatpush2.msra.mxu0 0.0
    %3121 = vmatprep.subr.mxu0 0.0
    %3122 = vmatpush2.msra.mxu0 0.0
    %3123 = vmatprep.subr.mxu0 0.0
    %3124 = vmatpush2.msra.mxu0 0.0
    %3125 = vmatprep.subr.mxu0 0.0
    %3126 = vmatpush2.msra.mxu0 0.0
    %3127 = vmatprep.subr.mxu0 0.0
    %3128 = vmatpush2.msra.mxu0 0.0
    %3129 = vmatprep.subr.mxu0 0.0
    %3130 = vmatpush2.msra.mxu0 0.0
    %3131 = vmatprep.subr.mxu0 0.0
    %3132 = vmatpush2.msra.mxu0 0.0
    %3133 = vmatprep.subr.mxu0 0.0
    %3134 = vmatpush2.msra.mxu0 0.0
    %3135 = vmatprep.subr.mxu0 0.0
    %3136 = vmatpush2.msra.mxu0 0.0
    %3137 = vmatprep.subr.mxu0 0.0
    %3138 = vmatpush2.msra.mxu0 0.0
    %3139 = vmatprep.subr.mxu0 0.0
    %3140 = vmatpush2.msra.mxu0 0.0
    %3141 = vmatprep.subr.mxu0 0.0
    %3142 = vmatpush2.msra.mxu0 0.0
    %3143 = vmatprep.subr.mxu0 0.0
    %3144 = vmatpush2.msra.mxu0 0.0
    %3145 = vmatprep.subr.mxu0 0.0
    %3146 = vmatpush2.msra.mxu0 0.0
    %3147 = vmatprep.mubr.f32.mxu0 0.0
    %3148 = vmatmul.mubr.f32.gmra.mxu0 %v3081
    %v3149 = vpop.f32.mrf.mxu0
    %v3150 = vadd.f32 0.0, %v3149
    %v3151 = vpop.f32.mrf.mxu0
    %3152 = vdwg.mxu0
    %v3153 = vadd.f32 %v2912, %v3150
    %3154 = vrot.lane.b32.xlu0 %v2434, 104
    %v3155 = vpop.permute.xlu0 %3154
    %3156 = vrot.lane.b32.xlu0 %v2434, 72
    %v3157 = vpop.permute.xlu0 %3156
    %v3158 = vsel %vm193, %v3155, 0
    %v3160 = vsel %vm193, %v3157, 0
    %3162 = vmatprep.subr.mxu0 0.0
    %3163 = vmatpush1.xpose.msra.mxu0 0.0
    %3164 = vmatprep.subr.mxu0 0.0
    %3165 = vmatpush1.xpose.msra.mxu0 0.0
    %3166 = vmatprep.subr.mxu0 0.0
    %3167 = vmatpush1.xpose.msra.mxu0 0.0
    %3168 = vmatprep.subr.mxu0 0.0
    %3169 = vmatpush1.xpose.msra.mxu0 0.0
    %3170 = vmatprep.subr.mxu0 0.0
    %3171 = vmatpush1.xpose.msra.mxu0 0.0
    %3172 = vmatprep.subr.mxu0 0.0
    %3173 = vmatpush1.xpose.msra.mxu0 0.0
    %3174 = vmatprep.subr.mxu0 0.0
    %3175 = vmatpush1.xpose.msra.mxu0 0.0
    %3176 = vmatprep.subr.mxu0 0.0
    %3177 = vmatpush1.xpose.msra.mxu0 0.0
    %3178 = vmatprep.subr.mxu0 0.0
    %3179 = vmatpush1.xpose.msra.mxu0 0.0
    %3180 = vmatprep.subr.mxu0 0.0
    %3181 = vmatpush1.xpose.msra.mxu0 0.0
    %3182 = vmatprep.subr.mxu0 0.0
    %3183 = vmatpush1.xpose.msra.mxu0 0.0
    %3184 = vmatprep.subr.mxu0 0.0
    %3185 = vmatpush1.xpose.msra.mxu0 0.0
    %3186 = vmatprep.subr.mxu0 0.0
    %3187 = vmatpush1.xpose.msra.mxu0 0.0
    %3188 = vmatprep.subr.mxu0 0.0
    %3189 = vmatpush1.xpose.msra.mxu0 0.0
    %3190 = vmatprep.subr.mxu0 0.0
    %3191 = vmatpush1.xpose.msra.mxu0 0.0
    %3192 = vmatprep.subr.mxu0 0.0
    %3193 = vmatpush1.xpose.msra.mxu0 %v3160
    %3194 = vmatprep.subr.mxu0 0.0
    %3195 = vmatpush2.xpose.msra.mxu0 0.0
    %3196 = vmatprep.subr.mxu0 0.0
    %3197 = vmatpush2.xpose.msra.mxu0 0.0
    %3198 = vmatprep.subr.mxu0 0.0
    %3199 = vmatpush2.xpose.msra.mxu0 0.0
    %3200 = vmatprep.subr.mxu0 0.0
    %3201 = vmatpush2.xpose.msra.mxu0 0.0
    %3202 = vmatprep.subr.mxu0 0.0
    %3203 = vmatpush2.xpose.msra.mxu0 0.0
    %3204 = vmatprep.subr.mxu0 0.0
    %3205 = vmatpush2.xpose.msra.mxu0 0.0
    %3206 = vmatprep.subr.mxu0 0.0
    %3207 = vmatpush2.xpose.msra.mxu0 0.0
    %3208 = vmatprep.subr.mxu0 0.0
    %3209 = vmatpush2.xpose.msra.mxu0 0.0
    %3210 = vmatprep.subr.mxu0 0.0
    %3211 = vmatpush2.xpose.msra.mxu0 0.0
    %3212 = vmatprep.subr.mxu0 0.0
    %3213 = vmatpush2.xpose.msra.mxu0 0.0
    %3214 = vmatprep.subr.mxu0 0.0
    %3215 = vmatpush2.xpose.msra.mxu0 0.0
    %3216 = vmatprep.subr.mxu0 0.0
    %3217 = vmatpush2.xpose.msra.mxu0 0.0
    %3218 = vmatprep.subr.mxu0 0.0
    %3219 = vmatpush2.xpose.msra.mxu0 0.0
    %3220 = vmatprep.subr.mxu0 0.0
    %3221 = vmatpush2.xpose.msra.mxu0 0.0
    %3222 = vmatprep.subr.mxu0 0.0
    %3223 = vmatpush2.xpose.msra.mxu0 0.0
    %3224 = vmatprep.subr.mxu0 0.0
    %3225 = vmatpush2.xpose.msra.mxu0 0.0
    %3226 = vmatprep.mubr.f32.mxu0 0.0
    %3227 = vmatmul.mubr.f32.gmra.mxu0 %v3158
    %v3228 = vpop.f32.mrf.mxu0
    %v3229 = vadd.f32 %v68, %v3228
    %v3230 = vpop.f32.mrf.mxu0
    %3231 = vdwg.mxu0
    %v3232 = vsel %vm193, %v3229, -inf
    %3233 = vmax.xlane.f32.xlu0 %v3232
    %v3234 = vpop.xlane.xlu0 %3233
    %v3235 = vsub.f32 %v3229, %v3234
    %v3236 = vmul.f32 %v3235, 1.442695
    %v3237 = vpow.pop %v3236
    %v3238 = vsel %vm193, %v3237, 0.0
    %3239 = vadd.xlane.f32.xlu0 %v3238
    %v3240 = vpop.xlane.xlu0 %3239
    %v3241 = vrcp.pop %v3240
    %v3242 = vmul.f32 %v3237, %v3241
    %3243 = vrot.lane.b32.xlu0 %v2434, 40
    %v3244 = vpop.permute.xlu0 %3243
    %v3247 = vsel %vm193, %v3242, 0
    %3249 = vmatprep.subr.mxu0 0.0
    %3250 = vmatpush1.msra.mxu0 0.0
    %3251 = vmatprep.subr.mxu0 0.0
    %3252 = vmatpush1.msra.mxu0 0.0
    %3253 = vmatprep.subr.mxu0 0.0
    %3254 = vmatpush1.msra.mxu0 0.0
    %3255 = vmatprep.subr.mxu0 0.0
    %3256 = vmatpush1.msra.mxu0 0.0
    %3257 = vmatprep.subr.mxu0 0.0
    %3258 = vmatpush1.msra.mxu0 0.0
    %3259 = vmatprep.subr.mxu0 0.0
    %3260 = vmatpush1.msra.mxu0 0.0
    %3261 = vmatprep.subr.mxu0 0.0
    %3262 = vmatpush1.msra.mxu0 0.0
    %3263 = vmatprep.subr.mxu0 0.0
    %3264 = vmatpush1.msra.mxu0 0.0
    %3265 = vmatprep.subr.mxu0 0.0
    %3266 = vmatpush1.msra.mxu0 0.0
    %3267 = vmatprep.subr.mxu0 0.0
    %3268 = vmatpush1.msra.mxu0 0.0
    %3269 = vmatprep.subr.mxu0 0.0
    %3270 = vmatpush1.msra.mxu0 0.0
    %3271 = vmatprep.subr.mxu0 0.0
    %3272 = vmatpush1.msra.mxu0 0.0
    %3273 = vmatprep.subr.mxu0 0.0
    %3274 = vmatpush1.msra.mxu0 0.0
    %3275 = vmatprep.subr.mxu0 0.0
    %3276 = vmatpush1.msra.mxu0 0.0
    %3277 = vmatprep.subr.mxu0 0.0
    %3278 = vmatpush1.msra.mxu0 0.0
    %3279 = vmatprep.subr.mxu0 0.0
    %3280 = vmatpush1.msra.mxu0 %v3244
    %3281 = vmatprep.subr.mxu0 0.0
    %3282 = vmatpush2.msra.mxu0 0.0
    %3283 = vmatprep.subr.mxu0 0.0
    %3284 = vmatpush2.msra.mxu0 0.0
    %3285 = vmatprep.subr.mxu0 0.0
    %3286 = vmatpush2.msra.mxu0 0.0
    %3287 = vmatprep.subr.mxu0 0.0
    %3288 = vmatpush2.msra.mxu0 0.0
    %3289 = vmatprep.subr.mxu0 0.0
    %3290 = vmatpush2.msra.mxu0 0.0
    %3291 = vmatprep.subr.mxu0 0.0
    %3292 = vmatpush2.msra.mxu0 0.0
    %3293 = vmatprep.subr.mxu0 0.0
    %3294 = vmatpush2.msra.mxu0 0.0
    %3295 = vmatprep.subr.mxu0 0.0
    %3296 = vmatpush2.msra.mxu0 0.0
    %3297 = vmatprep.subr.mxu0 0.0
    %3298 = vmatpush2.msra.mxu0 0.0
    %3299 = vmatprep.subr.mxu0 0.0
    %3300 = vmatpush2.msra.mxu0 0.0
    %3301 = vmatprep.subr.mxu0 0.0
    %3302 = vmatpush2.msra.mxu0 0.0
    %3303 = vmatprep.subr.mxu0 0.0
    %3304 = vmatpush2.msra.mxu0 0.0
    %3305 = vmatprep.subr.mxu0 0.0
    %3306 = vmatpush2.msra.mxu0 0.0
    %3307 = vmatprep.subr.mxu0 0.0
    %3308 = vmatpush2.msra.mxu0 0.0
    %3309 = vmatprep.subr.mxu0 0.0
    %3310 = vmatpush2.msra.mxu0 0.0
    %3311 = vmatprep.subr.mxu0 0.0
    %3312 = vmatpush2.msra.mxu0 0.0
    %3313 = vmatprep.mubr.f32.mxu0 0.0
    %3314 = vmatmul.mubr.f32.gmra.mxu0 %v3247
    %v3315 = vpop.f32.mrf.mxu0
    %v3316 = vadd.f32 0.0, %v3315
    %v3317 = vpop.f32.mrf.mxu0
    %3318 = vdwg.mxu0
    %v3320 = vsel %vm193, %v3316, 0
    %3322 = vmatprep.subr.mxu0 0.0
    %3323 = vmatpush1.msra.mxu0 0.0
    %3324 = vmatprep.subr.mxu0 0.0
    %3325 = vmatpush1.msra.mxu0 0.0
    %3326 = vmatprep.subr.mxu0 0.0
    %3327 = vmatpush1.msra.mxu0 0.0
    %3328 = vmatprep.subr.mxu0 0.0
    %3329 = vmatpush1.msra.mxu0 0.0
    %3330 = vmatprep.subr.mxu0 0.0
    %3331 = vmatpush1.msra.mxu0 0.0
    %3332 = vmatprep.subr.mxu0 0.0
    %3333 = vmatpush1.msra.mxu0 0.0
    %3334 = vmatprep.subr.mxu0 0.0
    %3335 = vmatpush1.msra.mxu0 0.0
    %3336 = vmatprep.subr.mxu0 0.0
    %3337 = vmatpush1.msra.mxu0 0.0
    %3338 = vmatprep.subr.mxu0 0.0
    %3339 = vmatpush1.msra.mxu0 0.0
    %3340 = vmatprep.subr.mxu0 0.0
    %3341 = vmatpush1.msra.mxu0 0.0
    %3342 = vmatprep.subr.mxu0 0.0
    %3343 = vmatpush1.msra.mxu0 0.0
    %3344 = vmatprep.subr.mxu0 0.0
    %3345 = vmatpush1.msra.mxu0 0.0
    %3346 = vmatprep.subr.mxu0 0.0
    %3347 = vmatpush1.msra.mxu0 0.0
    %3348 = vmatprep.subr.mxu0 0.0
    %3349 = vmatpush1.msra.mxu0 0.0
    %3350 = vmatprep.subr.mxu0 0.0
    %3351 = vmatpush1.msra.mxu0 0.0
    %3352 = vmatprep.subr.mxu0 0.0
    %3353 = vmatpush1.msra.mxu0 %v79
    %3354 = vmatprep.subr.mxu0 0.0
    %3355 = vmatpush2.msra.mxu0 0.0
    %3356 = vmatprep.subr.mxu0 0.0
    %3357 = vmatpush2.msra.mxu0 0.0
    %3358 = vmatprep.subr.mxu0 0.0
    %3359 = vmatpush2.msra.mxu0 0.0
    %3360 = vmatprep.subr.mxu0 0.0
    %3361 = vmatpush2.msra.mxu0 0.0
    %3362 = vmatprep.subr.mxu0 0.0
    %3363 = vmatpush2.msra.mxu0 0.0
    %3364 = vmatprep.subr.mxu0 0.0
    %3365 = vmatpush2.msra.mxu0 0.0
    %3366 = vmatprep.subr.mxu0 0.0
    %3367 = vmatpush2.msra.mxu0 0.0
    %3368 = vmatprep.subr.mxu0 0.0
    %3369 = vmatpush2.msra.mxu0 0.0
    %3370 = vmatprep.subr.mxu0 0.0
    %3371 = vmatpush2.msra.mxu0 0.0
    %3372 = vmatprep.subr.mxu0 0.0
    %3373 = vmatpush2.msra.mxu0 0.0
    %3374 = vmatprep.subr.mxu0 0.0
    %3375 = vmatpush2.msra.mxu0 0.0
    %3376 = vmatprep.subr.mxu0 0.0
    %3377 = vmatpush2.msra.mxu0 0.0
    %3378 = vmatprep.subr.mxu0 0.0
    %3379 = vmatpush2.msra.mxu0 0.0
    %3380 = vmatprep.subr.mxu0 0.0
    %3381 = vmatpush2.msra.mxu0 0.0
    %3382 = vmatprep.subr.mxu0 0.0
    %3383 = vmatpush2.msra.mxu0 0.0
    %3384 = vmatprep.subr.mxu0 0.0
    %3385 = vmatpush2.msra.mxu0 0.0
    %3386 = vmatprep.mubr.f32.mxu0 0.0
    %3387 = vmatmul.mubr.f32.gmra.mxu0 %v3320
    %v3388 = vpop.f32.mrf.mxu0
    %v3389 = vadd.f32 0.0, %v3388
    %v3390 = vpop.f32.mrf.mxu0
    %3391 = vdwg.mxu0
    %v3392 = vadd.f32 %v3153, %v3389
    %3394 = vrot.lane.b32.xlu0 %v2437, 96
    %v3395 = vpop.permute.xlu0 %3394
    %v3396 = vsel %vm193, %v2437, 0
    %v3398 = vsel %vm193, %v3395, 0
    %3400 = vmatprep.subr.mxu0 0.0
    %3401 = vmatpush1.xpose.msra.mxu0 0.0
    %3402 = vmatprep.subr.mxu0 0.0
    %3403 = vmatpush1.xpose.msra.mxu0 0.0
    %3404 = vmatprep.subr.mxu0 0.0
    %3405 = vmatpush1.xpose.msra.mxu0 0.0
    %3406 = vmatprep.subr.mxu0 0.0
    %3407 = vmatpush1.xpose.msra.mxu0 0.0
    %3408 = vmatprep.subr.mxu0 0.0
    %3409 = vmatpush1.xpose.msra.mxu0 0.0
    %3410 = vmatprep.subr.mxu0 0.0
    %3411 = vmatpush1.xpose.msra.mxu0 0.0
    %3412 = vmatprep.subr.mxu0 0.0
    %3413 = vmatpush1.xpose.msra.mxu0 0.0
    %3414 = vmatprep.subr.mxu0 0.0
    %3415 = vmatpush1.xpose.msra.mxu0 0.0
    %3416 = vmatprep.subr.mxu0 0.0
    %3417 = vmatpush1.xpose.msra.mxu0 0.0
    %3418 = vmatprep.subr.mxu0 0.0
    %3419 = vmatpush1.xpose.msra.mxu0 0.0
    %3420 = vmatprep.subr.mxu0 0.0
    %3421 = vmatpush1.xpose.msra.mxu0 0.0
    %3422 = vmatprep.subr.mxu0 0.0
    %3423 = vmatpush1.xpose.msra.mxu0 0.0
    %3424 = vmatprep.subr.mxu0 0.0
    %3425 = vmatpush1.xpose.msra.mxu0 0.0
    %3426 = vmatprep.subr.mxu0 0.0
    %3427 = vmatpush1.xpose.msra.mxu0 0.0
    %3428 = vmatprep.subr.mxu0 0.0
    %3429 = vmatpush1.xpose.msra.mxu0 0.0
    %3430 = vmatprep.subr.mxu0 0.0
    %3431 = vmatpush1.xpose.msra.mxu0 %v3398
    %3432 = vmatprep.subr.mxu0 0.0
    %3433 = vmatpush2.xpose.msra.mxu0 0.0
    %3434 = vmatprep.subr.mxu0 0.0
    %3435 = vmatpush2.xpose.msra.mxu0 0.0
    %3436 = vmatprep.subr.mxu0 0.0
    %3437 = vmatpush2.xpose.msra.mxu0 0.0
    %3438 = vmatprep.subr.mxu0 0.0
    %3439 = vmatpush2.xpose.msra.mxu0 0.0
    %3440 = vmatprep.subr.mxu0 0.0
    %3441 = vmatpush2.xpose.msra.mxu0 0.0
    %3442 = vmatprep.subr.mxu0 0.0
    %3443 = vmatpush2.xpose.msra.mxu0 0.0
    %3444 = vmatprep.subr.mxu0 0.0
    %3445 = vmatpush2.xpose.msra.mxu0 0.0
    %3446 = vmatprep.subr.mxu0 0.0
    %3447 = vmatpush2.xpose.msra.mxu0 0.0
    %3448 = vmatprep.subr.mxu0 0.0
    %3449 = vmatpush2.xpose.msra.mxu0 0.0
    %3450 = vmatprep.subr.mxu0 0.0
    %3451 = vmatpush2.xpose.msra.mxu0 0.0
    %3452 = vmatprep.subr.mxu0 0.0
    %3453 = vmatpush2.xpose.msra.mxu0 0.0
    %3454 = vmatprep.subr.mxu0 0.0
    %3455 = vmatpush2.xpose.msra.mxu0 0.0
    %3456 = vmatprep.subr.mxu0 0.0
    %3457 = vmatpush2.xpose.msra.mxu0 0.0
    %3458 = vmatprep.subr.mxu0 0.0
    %3459 = vmatpush2.xpose.msra.mxu0 0.0
    %3460 = vmatprep.subr.mxu0 0.0
    %3461 = vmatpush2.xpose.msra.mxu0 0.0
    %3462 = vmatprep.subr.mxu0 0.0
    %3463 = vmatpush2.xpose.msra.mxu0 0.0
    %3464 = vmatprep.mubr.f32.mxu0 0.0
    %3465 = vmatmul.mubr.f32.gmra.mxu0 %v3396
    %v3466 = vpop.f32.mrf.mxu0
    %v3467 = vadd.f32 %v68, %v3466
    %v3468 = vpop.f32.mrf.mxu0
    %3469 = vdwg.mxu0
    %v3470 = vsel %vm193, %v3467, -inf
    %3471 = vmax.xlane.f32.xlu0 %v3470
    %v3472 = vpop.xlane.xlu0 %3471
    %v3473 = vsub.f32 %v3467, %v3472
    %v3474 = vmul.f32 %v3473, 1.442695
    %v3475 = vpow.pop %v3474
    %v3476 = vsel %vm193, %v3475, 0.0
    %3477 = vadd.xlane.f32.xlu0 %v3476
    %v3478 = vpop.xlane.xlu0 %3477
    %v3479 = vrcp.pop %v3478
    %v3480 = vmul.f32 %v3475, %v3479
    %3481 = vrot.lane.b32.xlu0 %v2437, 64
    %v3482 = vpop.permute.xlu0 %3481
    %v3485 = vsel %vm193, %v3480, 0
    %3487 = vmatprep.subr.mxu0 0.0
    %3488 = vmatpush1.msra.mxu0 0.0
    %3489 = vmatprep.subr.mxu0 0.0
    %3490 = vmatpush1.msra.mxu0 0.0
    %3491 = vmatprep.subr.mxu0 0.0
    %3492 = vmatpush1.msra.mxu0 0.0
    %3493 = vmatprep.subr.mxu0 0.0
    %3494 = vmatpush1.msra.mxu0 0.0
    %3495 = vmatprep.subr.mxu0 0.0
    %3496 = vmatpush1.msra.mxu0 0.0
    %3497 = vmatprep.subr.mxu0 0.0
    %3498 = vmatpush1.msra.mxu0 0.0
    %3499 = vmatprep.subr.mxu0 0.0
    %3500 = vmatpush1.msra.mxu0 0.0
    %3501 = vmatprep.subr.mxu0 0.0
    %3502 = vmatpush1.msra.mxu0 0.0
    %3503 = vmatprep.subr.mxu0 0.0
    %3504 = vmatpush1.msra.mxu0 0.0
    %3505 = vmatprep.subr.mxu0 0.0
    %3506 = vmatpush1.msra.mxu0 0.0
    %3507 = vmatprep.subr.mxu0 0.0
    %3508 = vmatpush1.msra.mxu0 0.0
    %3509 = vmatprep.subr.mxu0 0.0
    %3510 = vmatpush1.msra.mxu0 0.0
    %3511 = vmatprep.subr.mxu0 0.0
    %3512 = vmatpush1.msra.mxu0 0.0
    %3513 = vmatprep.subr.mxu0 0.0
    %3514 = vmatpush1.msra.mxu0 0.0
    %3515 = vmatprep.subr.mxu0 0.0
    %3516 = vmatpush1.msra.mxu0 0.0
    %3517 = vmatprep.subr.mxu0 0.0
    %3518 = vmatpush1.msra.mxu0 %v3482
    %3519 = vmatprep.subr.mxu0 0.0
    %3520 = vmatpush2.msra.mxu0 0.0
    %3521 = vmatprep.subr.mxu0 0.0
    %3522 = vmatpush2.msra.mxu0 0.0
    %3523 = vmatprep.subr.mxu0 0.0
    %3524 = vmatpush2.msra.mxu0 0.0
    %3525 = vmatprep.subr.mxu0 0.0
    %3526 = vmatpush2.msra.mxu0 0.0
    %3527 = vmatprep.subr.mxu0 0.0
    %3528 = vmatpush2.msra.mxu0 0.0
    %3529 = vmatprep.subr.mxu0 0.0
    %3530 = vmatpush2.msra.mxu0 0.0
    %3531 = vmatprep.subr.mxu0 0.0
    %3532 = vmatpush2.msra.mxu0 0.0
    %3533 = vmatprep.subr.mxu0 0.0
    %3534 = vmatpush2.msra.mxu0 0.0
    %3535 = vmatprep.subr.mxu0 0.0
    %3536 = vmatpush2.msra.mxu0 0.0
    %3537 = vmatprep.subr.mxu0 0.0
    %3538 = vmatpush2.msra.mxu0 0.0
    %3539 = vmatprep.subr.mxu0 0.0
    %3540 = vmatpush2.msra.mxu0 0.0
    %3541 = vmatprep.subr.mxu0 0.0
    %3542 = vmatpush2.msra.mxu0 0.0
    %3543 = vmatprep.subr.mxu0 0.0
    %3544 = vmatpush2.msra.mxu0 0.0
    %3545 = vmatprep.subr.mxu0 0.0
    %3546 = vmatpush2.msra.mxu0 0.0
    %3547 = vmatprep.subr.mxu0 0.0
    %3548 = vmatpush2.msra.mxu0 0.0
    %3549 = vmatprep.subr.mxu0 0.0
    %3550 = vmatpush2.msra.mxu0 0.0
    %3551 = vmatprep.mubr.f32.mxu0 0.0
    %3552 = vmatmul.mubr.f32.gmra.mxu0 %v3485
    %v3553 = vpop.f32.mrf.mxu0
    %v3554 = vadd.f32 0.0, %v3553
    %v3555 = vpop.f32.mrf.mxu0
    %3556 = vdwg.mxu0
    %3557 = vrot.lane.b32.xlu0 %v2437, 120
    %v3558 = vpop.permute.xlu0 %3557
    %3559 = vrot.lane.b32.xlu0 %v2437, 88
    %v3560 = vpop.permute.xlu0 %3559
    %v3561 = vsel %vm193, %v3558, 0
    %v3563 = vsel %vm193, %v3560, 0
    %3565 = vmatprep.subr.mxu0 0.0
    %3566 = vmatpush1.xpose.msra.mxu0 0.0
    %3567 = vmatprep.subr.mxu0 0.0
    %3568 = vmatpush1.xpose.msra.mxu0 0.0
    %3569 = vmatprep.subr.mxu0 0.0
    %3570 = vmatpush1.xpose.msra.mxu0 0.0
    %3571 = vmatprep.subr.mxu0 0.0
    %3572 = vmatpush1.xpose.msra.mxu0 0.0
    %3573 = vmatprep.subr.mxu0 0.0
    %3574 = vmatpush1.xpose.msra.mxu0 0.0
    %3575 = vmatprep.subr.mxu0 0.0
    %3576 = vmatpush1.xpose.msra.mxu0 0.0
    %3577 = vmatprep.subr.mxu0 0.0
    %3578 = vmatpush1.xpose.msra.mxu0 0.0
    %3579 = vmatprep.subr.mxu0 0.0
    %3580 = vmatpush1.xpose.msra.mxu0 0.0
    %3581 = vmatprep.subr.mxu0 0.0
    %3582 = vmatpush1.xpose.msra.mxu0 0.0
    %3583 = vmatprep.subr.mxu0 0.0
    %3584 = vmatpush1.xpose.msra.mxu0 0.0
    %3585 = vmatprep.subr.mxu0 0.0
    %3586 = vmatpush1.xpose.msra.mxu0 0.0
    %3587 = vmatprep.subr.mxu0 0.0
    %3588 = vmatpush1.xpose.msra.mxu0 0.0
    %3589 = vmatprep.subr.mxu0 0.0
    %3590 = vmatpush1.xpose.msra.mxu0 0.0
    %3591 = vmatprep.subr.mxu0 0.0
    %3592 = vmatpush1.xpose.msra.mxu0 0.0
    %3593 = vmatprep.subr.mxu0 0.0
    %3594 = vmatpush1.xpose.msra.mxu0 0.0
    %3595 = vmatprep.subr.mxu0 0.0
    %3596 = vmatpush1.xpose.msra.mxu0 %v3563
    %3597 = vmatprep.subr.mxu0 0.0
    %3598 = vmatpush2.xpose.msra.mxu0 0.0
    %3599 = vmatprep.subr.mxu0 0.0
    %3600 = vmatpush2.xpose.msra.mxu0 0.0
    %3601 = vmatprep.subr.mxu0 0.0
    %3602 = vmatpush2.xpose.msra.mxu0 0.0
    %3603 = vmatprep.subr.mxu0 0.0
    %3604 = vmatpush2.xpose.msra.mxu0 0.0
    %3605 = vmatprep.subr.mxu0 0.0
    %3606 = vmatpush2.xpose.msra.mxu0 0.0
    %3607 = vmatprep.subr.mxu0 0.0
    %3608 = vmatpush2.xpose.msra.mxu0 0.0
    %3609 = vmatprep.subr.mxu0 0.0
    %3610 = vmatpush2.xpose.msra.mxu0 0.0
    %3611 = vmatprep.subr.mxu0 0.0
    %3612 = vmatpush2.xpose.msra.mxu0 0.0
    %3613 = vmatprep.subr.mxu0 0.0
    %3614 = vmatpush2.xpose.msra.mxu0 0.0
    %3615 = vmatprep.subr.mxu0 0.0
    %3616 = vmatpush2.xpose.msra.mxu0 0.0
    %3617 = vmatprep.subr.mxu0 0.0
    %3618 = vmatpush2.xpose.msra.mxu0 0.0
    %3619 = vmatprep.subr.mxu0 0.0
    %3620 = vmatpush2.xpose.msra.mxu0 0.0
    %3621 = vmatprep.subr.mxu0 0.0
    %3622 = vmatpush2.xpose.msra.mxu0 0.0
    %3623 = vmatprep.subr.mxu0 0.0
    %3624 = vmatpush2.xpose.msra.mxu0 0.0
    %3625 = vmatprep.subr.mxu0 0.0
    %3626 = vmatpush2.xpose.msra.mxu0 0.0
    %3627 = vmatprep.subr.mxu0 0.0
    %3628 = vmatpush2.xpose.msra.mxu0 0.0
    %3629 = vmatprep.mubr.f32.mxu0 0.0
    %3630 = vmatmul.mubr.f32.gmra.mxu0 %v3561
    %v3631 = vpop.f32.mrf.mxu0
    %v3632 = vadd.f32 %v68, %v3631
    %v3633 = vpop.f32.mrf.mxu0
    %3634 = vdwg.mxu0
    %v3635 = vsel %vm193, %v3632, -inf
    %3636 = vmax.xlane.f32.xlu0 %v3635
    %v3637 = vpop.xlane.xlu0 %3636
    %v3638 = vsub.f32 %v3632, %v3637
    %v3639 = vmul.f32 %v3638, 1.442695
    %v3640 = vpow.pop %v3639
    %v3641 = vsel %vm193, %v3640, 0.0
    %3642 = vadd.xlane.f32.xlu0 %v3641
    %v3643 = vpop.xlane.xlu0 %3642
    %v3644 = vrcp.pop %v3643
    %v3645 = vmul.f32 %v3640, %v3644
    %3646 = vrot.lane.b32.xlu0 %v2437, 56
    %v3647 = vpop.permute.xlu0 %3646
    %v3650 = vsel %vm193, %v3645, 0
    %3652 = vmatprep.subr.mxu0 0.0
    %3653 = vmatpush1.msra.mxu0 0.0
    %3654 = vmatprep.subr.mxu0 0.0
    %3655 = vmatpush1.msra.mxu0 0.0
    %3656 = vmatprep.subr.mxu0 0.0
    %3657 = vmatpush1.msra.mxu0 0.0
    %3658 = vmatprep.subr.mxu0 0.0
    %3659 = vmatpush1.msra.mxu0 0.0
    %3660 = vmatprep.subr.mxu0 0.0
    %3661 = vmatpush1.msra.mxu0 0.0
    %3662 = vmatprep.subr.mxu0 0.0
    %3663 = vmatpush1.msra.mxu0 0.0
    %3664 = vmatprep.subr.mxu0 0.0
    %3665 = vmatpush1.msra.mxu0 0.0
    %3666 = vmatprep.subr.mxu0 0.0
    %3667 = vmatpush1.msra.mxu0 0.0
    %3668 = vmatprep.subr.mxu0 0.0
    %3669 = vmatpush1.msra.mxu0 0.0
    %3670 = vmatprep.subr.mxu0 0.0
    %3671 = vmatpush1.msra.mxu0 0.0
    %3672 = vmatprep.subr.mxu0 0.0
    %3673 = vmatpush1.msra.mxu0 0.0
    %3674 = vmatprep.subr.mxu0 0.0
    %3675 = vmatpush1.msra.mxu0 0.0
    %3676 = vmatprep.subr.mxu0 0.0
    %3677 = vmatpush1.msra.mxu0 0.0
    %3678 = vmatprep.subr.mxu0 0.0
    %3679 = vmatpush1.msra.mxu0 0.0
    %3680 = vmatprep.subr.mxu0 0.0
    %3681 = vmatpush1.msra.mxu0 0.0
    %3682 = vmatprep.subr.mxu0 0.0
    %3683 = vmatpush1.msra.mxu0 %v3647
    %3684 = vmatprep.subr.mxu0 0.0
    %3685 = vmatpush2.msra.mxu0 0.0
    %3686 = vmatprep.subr.mxu0 0.0
    %3687 = vmatpush2.msra.mxu0 0.0
    %3688 = vmatprep.subr.mxu0 0.0
    %3689 = vmatpush2.msra.mxu0 0.0
    %3690 = vmatprep.subr.mxu0 0.0
    %3691 = vmatpush2.msra.mxu0 0.0
    %3692 = vmatprep.subr.mxu0 0.0
    %3693 = vmatpush2.msra.mxu0 0.0
    %3694 = vmatprep.subr.mxu0 0.0
    %3695 = vmatpush2.msra.mxu0 0.0
    %3696 = vmatprep.subr.mxu0 0.0
    %3697 = vmatpush2.msra.mxu0 0.0
    %3698 = vmatprep.subr.mxu0 0.0
    %3699 = vmatpush2.msra.mxu0 0.0
    %3700 = vmatprep.subr.mxu0 0.0
    %3701 = vmatpush2.msra.mxu0 0.0
    %3702 = vmatprep.subr.mxu0 0.0
    %3703 = vmatpush2.msra.mxu0 0.0
    %3704 = vmatprep.subr.mxu0 0.0
    %3705 = vmatpush2.msra.mxu0 0.0
    %3706 = vmatprep.subr.mxu0 0.0
    %3707 = vmatpush2.msra.mxu0 0.0
    %3708 = vmatprep.subr.mxu0 0.0
    %3709 = vmatpush2.msra.mxu0 0.0
    %3710 = vmatprep.subr.mxu0 0.0
    %3711 = vmatpush2.msra.mxu0 0.0
    %3712 = vmatprep.subr.mxu0 0.0
    %3713 = vmatpush2.msra.mxu0 0.0
    %3714 = vmatprep.subr.mxu0 0.0
    %3715 = vmatpush2.msra.mxu0 0.0
    %3716 = vmatprep.mubr.f32.mxu0 0.0
    %3717 = vmatmul.mubr.f32.gmra.mxu0 %v3650
    %v3718 = vpop.f32.mrf.mxu0
    %v3719 = vadd.f32 0.0, %v3718
    %v3720 = vpop.f32.mrf.mxu0
    %3721 = vdwg.mxu0
    %v3723 = vsel %vm193, %v3719, 0
    %3725 = vmatprep.subr.mxu0 0.0
    %3726 = vmatpush1.msra.mxu0 0.0
    %3727 = vmatprep.subr.mxu0 0.0
    %3728 = vmatpush1.msra.mxu0 0.0
    %3729 = vmatprep.subr.mxu0 0.0
    %3730 = vmatpush1.msra.mxu0 0.0
    %3731 = vmatprep.subr.mxu0 0.0
    %3732 = vmatpush1.msra.mxu0 0.0
    %3733 = vmatprep.subr.mxu0 0.0
    %3734 = vmatpush1.msra.mxu0 0.0
    %3735 = vmatprep.subr.mxu0 0.0
    %3736 = vmatpush1.msra.mxu0 0.0
    %3737 = vmatprep.subr.mxu0 0.0
    %3738 = vmatpush1.msra.mxu0 0.0
    %3739 = vmatprep.subr.mxu0 0.0
    %3740 = vmatpush1.msra.mxu0 0.0
    %3741 = vmatprep.subr.mxu0 0.0
    %3742 = vmatpush1.msra.mxu0 0.0
    %3743 = vmatprep.subr.mxu0 0.0
    %3744 = vmatpush1.msra.mxu0 0.0
    %3745 = vmatprep.subr.mxu0 0.0
    %3746 = vmatpush1.msra.mxu0 0.0
    %3747 = vmatprep.subr.mxu0 0.0
    %3748 = vmatpush1.msra.mxu0 0.0
    %3749 = vmatprep.subr.mxu0 0.0
    %3750 = vmatpush1.msra.mxu0 0.0
    %3751 = vmatprep.subr.mxu0 0.0
    %3752 = vmatpush1.msra.mxu0 0.0
    %3753 = vmatprep.subr.mxu0 0.0
    %3754 = vmatpush1.msra.mxu0 0.0
    %3755 = vmatprep.subr.mxu0 0.0
    %3756 = vmatpush1.msra.mxu0 %v77
    %3757 = vmatprep.subr.mxu0 0.0
    %3758 = vmatpush2.msra.mxu0 0.0
    %3759 = vmatprep.subr.mxu0 0.0
    %3760 = vmatpush2.msra.mxu0 0.0
    %3761 = vmatprep.subr.mxu0 0.0
    %3762 = vmatpush2.msra.mxu0 0.0
    %3763 = vmatprep.subr.mxu0 0.0
    %3764 = vmatpush2.msra.mxu0 0.0
    %3765 = vmatprep.subr.mxu0 0.0
    %3766 = vmatpush2.msra.mxu0 0.0
    %3767 = vmatprep.subr.mxu0 0.0
    %3768 = vmatpush2.msra.mxu0 0.0
    %3769 = vmatprep.subr.mxu0 0.0
    %3770 = vmatpush2.msra.mxu0 0.0
    %3771 = vmatprep.subr.mxu0 0.0
    %3772 = vmatpush2.msra.mxu0 0.0
    %3773 = vmatprep.subr.mxu0 0.0
    %3774 = vmatpush2.msra.mxu0 0.0
    %3775 = vmatprep.subr.mxu0 0.0
    %3776 = vmatpush2.msra.mxu0 0.0
    %3777 = vmatprep.subr.mxu0 0.0
    %3778 = vmatpush2.msra.mxu0 0.0
    %3779 = vmatprep.subr.mxu0 0.0
    %3780 = vmatpush2.msra.mxu0 0.0
    %3781 = vmatprep.subr.mxu0 0.0
    %3782 = vmatpush2.msra.mxu0 0.0
    %3783 = vmatprep.subr.mxu0 0.0
    %3784 = vmatpush2.msra.mxu0 0.0
    %3785 = vmatprep.subr.mxu0 0.0
    %3786 = vmatpush2.msra.mxu0 0.0
    %3787 = vmatprep.subr.mxu0 0.0
    %3788 = vmatpush2.msra.mxu0 0.0
    %3789 = vmatprep.mubr.f32.mxu0 0.0
    %3790 = vmatmul.mubr.f32.gmra.mxu0 %v3723
    %v3791 = vpop.f32.mrf.mxu0
    %v3792 = vadd.f32 0.0, %v3791
    %v3793 = vpop.f32.mrf.mxu0
    %3794 = vdwg.mxu0
    %v3796 = vsel %vm193, %v3554, 0
    %3798 = vmatprep.subr.mxu0 0.0
    %3799 = vmatpush1.msra.mxu0 0.0
    %3800 = vmatprep.subr.mxu0 0.0
    %3801 = vmatpush1.msra.mxu0 0.0
    %3802 = vmatprep.subr.mxu0 0.0
    %3803 = vmatpush1.msra.mxu0 0.0
    %3804 = vmatprep.subr.mxu0 0.0
    %3805 = vmatpush1.msra.mxu0 0.0
    %3806 = vmatprep.subr.mxu0 0.0
    %3807 = vmatpush1.msra.mxu0 0.0
    %3808 = vmatprep.subr.mxu0 0.0
    %3809 = vmatpush1.msra.mxu0 0.0
    %3810 = vmatprep.subr.mxu0 0.0
    %3811 = vmatpush1.msra.mxu0 0.0
    %3812 = vmatprep.subr.mxu0 0.0
    %3813 = vmatpush1.msra.mxu0 0.0
    %3814 = vmatprep.subr.mxu0 0.0
    %3815 = vmatpush1.msra.mxu0 0.0
    %3816 = vmatprep.subr.mxu0 0.0
    %3817 = vmatpush1.msra.mxu0 0.0
    %3818 = vmatprep.subr.mxu0 0.0
    %3819 = vmatpush1.msra.mxu0 0.0
    %3820 = vmatprep.subr.mxu0 0.0
    %3821 = vmatpush1.msra.mxu0 0.0
    %3822 = vmatprep.subr.mxu0 0.0
    %3823 = vmatpush1.msra.mxu0 0.0
    %3824 = vmatprep.subr.mxu0 0.0
    %3825 = vmatpush1.msra.mxu0 0.0
    %3826 = vmatprep.subr.mxu0 0.0
    %3827 = vmatpush1.msra.mxu0 0.0
    %3828 = vmatprep.subr.mxu0 0.0
    %3829 = vmatpush1.msra.mxu0 %v76
    %3830 = vmatprep.subr.mxu0 0.0
    %3831 = vmatpush2.msra.mxu0 0.0
    %3832 = vmatprep.subr.mxu0 0.0
    %3833 = vmatpush2.msra.mxu0 0.0
    %3834 = vmatprep.subr.mxu0 0.0
    %3835 = vmatpush2.msra.mxu0 0.0
    %3836 = vmatprep.subr.mxu0 0.0
    %3837 = vmatpush2.msra.mxu0 0.0
    %3838 = vmatprep.subr.mxu0 0.0
    %3839 = vmatpush2.msra.mxu0 0.0
    %3840 = vmatprep.subr.mxu0 0.0
    %3841 = vmatpush2.msra.mxu0 0.0
    %3842 = vmatprep.subr.mxu0 0.0
    %3843 = vmatpush2.msra.mxu0 0.0
    %3844 = vmatprep.subr.mxu0 0.0
    %3845 = vmatpush2.msra.mxu0 0.0
    %3846 = vmatprep.subr.mxu0 0.0
    %3847 = vmatpush2.msra.mxu0 0.0
    %3848 = vmatprep.subr.mxu0 0.0
    %3849 = vmatpush2.msra.mxu0 0.0
    %3850 = vmatprep.subr.mxu0 0.0
    %3851 = vmatpush2.msra.mxu0 0.0
    %3852 = vmatprep.subr.mxu0 0.0
    %3853 = vmatpush2.msra.mxu0 0.0
    %3854 = vmatprep.subr.mxu0 0.0
    %3855 = vmatpush2.msra.mxu0 0.0
    %3856 = vmatprep.subr.mxu0 0.0
    %3857 = vmatpush2.msra.mxu0 0.0
    %3858 = vmatprep.subr.mxu0 0.0
    %3859 = vmatpush2.msra.mxu0 0.0
    %3860 = vmatprep.subr.mxu0 0.0
    %3861 = vmatpush2.msra.mxu0 0.0
    %3862 = vmatprep.mubr.f32.mxu0 0.0
    %3863 = vmatmul.mubr.f32.gmra.mxu0 %v3796
    %v3864 = vpop.f32.mrf.mxu0
    %v3865 = vadd.f32 %v3792, %v3864
    %v3866 = vpop.f32.mrf.mxu0
    %3867 = vdwg.mxu0
    %3868 = vrot.lane.b32.xlu0 %v2437, 112
    %v3869 = vpop.permute.xlu0 %3868
    %3870 = vrot.lane.b32.xlu0 %v2437, 80
    %v3871 = vpop.permute.xlu0 %3870
    %v3872 = vsel %vm193, %v3869, 0
    %v3874 = vsel %vm193, %v3871, 0
    %3876 = vmatprep.subr.mxu0 0.0
    %3877 = vmatpush1.xpose.msra.mxu0 0.0
    %3878 = vmatprep.subr.mxu0 0.0
    %3879 = vmatpush1.xpose.msra.mxu0 0.0
    %3880 = vmatprep.subr.mxu0 0.0
    %3881 = vmatpush1.xpose.msra.mxu0 0.0
    %3882 = vmatprep.subr.mxu0 0.0
    %3883 = vmatpush1.xpose.msra.mxu0 0.0
    %3884 = vmatprep.subr.mxu0 0.0
    %3885 = vmatpush1.xpose.msra.mxu0 0.0
    %3886 = vmatprep.subr.mxu0 0.0
    %3887 = vmatpush1.xpose.msra.mxu0 0.0
    %3888 = vmatprep.subr.mxu0 0.0
    %3889 = vmatpush1.xpose.msra.mxu0 0.0
    %3890 = vmatprep.subr.mxu0 0.0
    %3891 = vmatpush1.xpose.msra.mxu0 0.0
    %3892 = vmatprep.subr.mxu0 0.0
    %3893 = vmatpush1.xpose.msra.mxu0 0.0
    %3894 = vmatprep.subr.mxu0 0.0
    %3895 = vmatpush1.xpose.msra.mxu0 0.0
    %3896 = vmatprep.subr.mxu0 0.0
    %3897 = vmatpush1.xpose.msra.mxu0 0.0
    %3898 = vmatprep.subr.mxu0 0.0
    %3899 = vmatpush1.xpose.msra.mxu0 0.0
    %3900 = vmatprep.subr.mxu0 0.0
    %3901 = vmatpush1.xpose.msra.mxu0 0.0
    %3902 = vmatprep.subr.mxu0 0.0
    %3903 = vmatpush1.xpose.msra.mxu0 0.0
    %3904 = vmatprep.subr.mxu0 0.0
    %3905 = vmatpush1.xpose.msra.mxu0 0.0
    %3906 = vmatprep.subr.mxu0 0.0
    %3907 = vmatpush1.xpose.msra.mxu0 %v3874
    %3908 = vmatprep.subr.mxu0 0.0
    %3909 = vmatpush2.xpose.msra.mxu0 0.0
    %3910 = vmatprep.subr.mxu0 0.0
    %3911 = vmatpush2.xpose.msra.mxu0 0.0
    %3912 = vmatprep.subr.mxu0 0.0
    %3913 = vmatpush2.xpose.msra.mxu0 0.0
    %3914 = vmatprep.subr.mxu0 0.0
    %3915 = vmatpush2.xpose.msra.mxu0 0.0
    %3916 = vmatprep.subr.mxu0 0.0
    %3917 = vmatpush2.xpose.msra.mxu0 0.0
    %3918 = vmatprep.subr.mxu0 0.0
    %3919 = vmatpush2.xpose.msra.mxu0 0.0
    %3920 = vmatprep.subr.mxu0 0.0
    %3921 = vmatpush2.xpose.msra.mxu0 0.0
    %3922 = vmatprep.subr.mxu0 0.0
    %3923 = vmatpush2.xpose.msra.mxu0 0.0
    %3924 = vmatprep.subr.mxu0 0.0
    %3925 = vmatpush2.xpose.msra.mxu0 0.0
    %3926 = vmatprep.subr.mxu0 0.0
    %3927 = vmatpush2.xpose.msra.mxu0 0.0
    %3928 = vmatprep.subr.mxu0 0.0
    %3929 = vmatpush2.xpose.msra.mxu0 0.0
    %3930 = vmatprep.subr.mxu0 0.0
    %3931 = vmatpush2.xpose.msra.mxu0 0.0
    %3932 = vmatprep.subr.mxu0 0.0
    %3933 = vmatpush2.xpose.msra.mxu0 0.0
    %3934 = vmatprep.subr.mxu0 0.0
    %3935 = vmatpush2.xpose.msra.mxu0 0.0
    %3936 = vmatprep.subr.mxu0 0.0
    %3937 = vmatpush2.xpose.msra.mxu0 0.0
    %3938 = vmatprep.subr.mxu0 0.0
    %3939 = vmatpush2.xpose.msra.mxu0 0.0
    %3940 = vmatprep.mubr.f32.mxu0 0.0
    %3941 = vmatmul.mubr.f32.gmra.mxu0 %v3872
    %v3942 = vpop.f32.mrf.mxu0
    %v3943 = vadd.f32 %v68, %v3942
    %v3944 = vpop.f32.mrf.mxu0
    %3945 = vdwg.mxu0
    %v3946 = vsel %vm193, %v3943, -inf
    %3947 = vmax.xlane.f32.xlu0 %v3946
    %v3948 = vpop.xlane.xlu0 %3947
    %v3949 = vsub.f32 %v3943, %v3948
    %v3950 = vmul.f32 %v3949, 1.442695
    %v3951 = vpow.pop %v3950
    %v3952 = vsel %vm193, %v3951, 0.0
    %3953 = vadd.xlane.f32.xlu0 %v3952
    %v3954 = vpop.xlane.xlu0 %3953
    %v3955 = vrcp.pop %v3954
    %v3956 = vmul.f32 %v3951, %v3955
    %3957 = vrot.lane.b32.xlu0 %v2437, 48
    %v3958 = vpop.permute.xlu0 %3957
    %v3961 = vsel %vm193, %v3956, 0
    %3963 = vmatprep.subr.mxu0 0.0
    %3964 = vmatpush1.msra.mxu0 0.0
    %3965 = vmatprep.subr.mxu0 0.0
    %3966 = vmatpush1.msra.mxu0 0.0
    %3967 = vmatprep.subr.mxu0 0.0
    %3968 = vmatpush1.msra.mxu0 0.0
    %3969 = vmatprep.subr.mxu0 0.0
    %3970 = vmatpush1.msra.mxu0 0.0
    %3971 = vmatprep.subr.mxu0 0.0
    %3972 = vmatpush1.msra.mxu0 0.0
    %3973 = vmatprep.subr.mxu0 0.0
    %3974 = vmatpush1.msra.mxu0 0.0
    %3975 = vmatprep.subr.mxu0 0.0
    %3976 = vmatpush1.msra.mxu0 0.0
    %3977 = vmatprep.subr.mxu0 0.0
    %3978 = vmatpush1.msra.mxu0 0.0
    %3979 = vmatprep.subr.mxu0 0.0
    %3980 = vmatpush1.msra.mxu0 0.0
    %3981 = vmatprep.subr.mxu0 0.0
    %3982 = vmatpush1.msra.mxu0 0.0
    %3983 = vmatprep.subr.mxu0 0.0
    %3984 = vmatpush1.msra.mxu0 0.0
    %3985 = vmatprep.subr.mxu0 0.0
    %3986 = vmatpush1.msra.mxu0 0.0
    %3987 = vmatprep.subr.mxu0 0.0
    %3988 = vmatpush1.msra.mxu0 0.0
    %3989 = vmatprep.subr.mxu0 0.0
    %3990 = vmatpush1.msra.mxu0 0.0
    %3991 = vmatprep.subr.mxu0 0.0
    %3992 = vmatpush1.msra.mxu0 0.0
    %3993 = vmatprep.subr.mxu0 0.0
    %3994 = vmatpush1.msra.mxu0 %v3958
    %3995 = vmatprep.subr.mxu0 0.0
    %3996 = vmatpush2.msra.mxu0 0.0
    %3997 = vmatprep.subr.mxu0 0.0
    %3998 = vmatpush2.msra.mxu0 0.0
    %3999 = vmatprep.subr.mxu0 0.0
    %4000 = vmatpush2.msra.mxu0 0.0
    %4001 = vmatprep.subr.mxu0 0.0
    %4002 = vmatpush2.msra.mxu0 0.0
    %4003 = vmatprep.subr.mxu0 0.0
    %4004 = vmatpush2.msra.mxu0 0.0
    %4005 = vmatprep.subr.mxu0 0.0
    %4006 = vmatpush2.msra.mxu0 0.0
    %4007 = vmatprep.subr.mxu0 0.0
    %4008 = vmatpush2.msra.mxu0 0.0
    %4009 = vmatprep.subr.mxu0 0.0
    %4010 = vmatpush2.msra.mxu0 0.0
    %4011 = vmatprep.subr.mxu0 0.0
    %4012 = vmatpush2.msra.mxu0 0.0
    %4013 = vmatprep.subr.mxu0 0.0
    %4014 = vmatpush2.msra.mxu0 0.0
    %4015 = vmatprep.subr.mxu0 0.0
    %4016 = vmatpush2.msra.mxu0 0.0
    %4017 = vmatprep.subr.mxu0 0.0
    %4018 = vmatpush2.msra.mxu0 0.0
    %4019 = vmatprep.subr.mxu0 0.0
    %4020 = vmatpush2.msra.mxu0 0.0
    %4021 = vmatprep.subr.mxu0 0.0
    %4022 = vmatpush2.msra.mxu0 0.0
    %4023 = vmatprep.subr.mxu0 0.0
    %4024 = vmatpush2.msra.mxu0 0.0
    %4025 = vmatprep.subr.mxu0 0.0
    %4026 = vmatpush2.msra.mxu0 0.0
    %4027 = vmatprep.mubr.f32.mxu0 0.0
    %4028 = vmatmul.mubr.f32.gmra.mxu0 %v3961
    %v4029 = vpop.f32.mrf.mxu0
    %v4030 = vadd.f32 0.0, %v4029
    %v4031 = vpop.f32.mrf.mxu0
    %4032 = vdwg.mxu0
    %v4034 = vsel %vm193, %v4030, 0
    %4036 = vmatprep.subr.mxu0 0.0
    %4037 = vmatpush1.msra.mxu0 0.0
    %4038 = vmatprep.subr.mxu0 0.0
    %4039 = vmatpush1.msra.mxu0 0.0
    %4040 = vmatprep.subr.mxu0 0.0
    %4041 = vmatpush1.msra.mxu0 0.0
    %4042 = vmatprep.subr.mxu0 0.0
    %4043 = vmatpush1.msra.mxu0 0.0
    %4044 = vmatprep.subr.mxu0 0.0
    %4045 = vmatpush1.msra.mxu0 0.0
    %4046 = vmatprep.subr.mxu0 0.0
    %4047 = vmatpush1.msra.mxu0 0.0
    %4048 = vmatprep.subr.mxu0 0.0
    %4049 = vmatpush1.msra.mxu0 0.0
    %4050 = vmatprep.subr.mxu0 0.0
    %4051 = vmatpush1.msra.mxu0 0.0
    %4052 = vmatprep.subr.mxu0 0.0
    %4053 = vmatpush1.msra.mxu0 0.0
    %4054 = vmatprep.subr.mxu0 0.0
    %4055 = vmatpush1.msra.mxu0 0.0
    %4056 = vmatprep.subr.mxu0 0.0
    %4057 = vmatpush1.msra.mxu0 0.0
    %4058 = vmatprep.subr.mxu0 0.0
    %4059 = vmatpush1.msra.mxu0 0.0
    %4060 = vmatprep.subr.mxu0 0.0
    %4061 = vmatpush1.msra.mxu0 0.0
    %4062 = vmatprep.subr.mxu0 0.0
    %4063 = vmatpush1.msra.mxu0 0.0
    %4064 = vmatprep.subr.mxu0 0.0
    %4065 = vmatpush1.msra.mxu0 0.0
    %4066 = vmatprep.subr.mxu0 0.0
    %4067 = vmatpush1.msra.mxu0 %v78
    %4068 = vmatprep.subr.mxu0 0.0
    %4069 = vmatpush2.msra.mxu0 0.0
    %4070 = vmatprep.subr.mxu0 0.0
    %4071 = vmatpush2.msra.mxu0 0.0
    %4072 = vmatprep.subr.mxu0 0.0
    %4073 = vmatpush2.msra.mxu0 0.0
    %4074 = vmatprep.subr.mxu0 0.0
    %4075 = vmatpush2.msra.mxu0 0.0
    %4076 = vmatprep.subr.mxu0 0.0
    %4077 = vmatpush2.msra.mxu0 0.0
    %4078 = vmatprep.subr.mxu0 0.0
    %4079 = vmatpush2.msra.mxu0 0.0
    %4080 = vmatprep.subr.mxu0 0.0
    %4081 = vmatpush2.msra.mxu0 0.0
    %4082 = vmatprep.subr.mxu0 0.0
    %4083 = vmatpush2.msra.mxu0 0.0
    %4084 = vmatprep.subr.mxu0 0.0
    %4085 = vmatpush2.msra.mxu0 0.0
    %4086 = vmatprep.subr.mxu0 0.0
    %4087 = vmatpush2.msra.mxu0 0.0
    %4088 = vmatprep.subr.mxu0 0.0
    %4089 = vmatpush2.msra.mxu0 0.0
    %4090 = vmatprep.subr.mxu0 0.0
    %4091 = vmatpush2.msra.mxu0 0.0
    %4092 = vmatprep.subr.mxu0 0.0
    %4093 = vmatpush2.msra.mxu0 0.0
    %4094 = vmatprep.subr.mxu0 0.0
    %4095 = vmatpush2.msra.mxu0 0.0
    %4096 = vmatprep.subr.mxu0 0.0
    %4097 = vmatpush2.msra.mxu0 0.0
    %4098 = vmatprep.subr.mxu0 0.0
    %4099 = vmatpush2.msra.mxu0 0.0
    %4100 = vmatprep.mubr.f32.mxu0 0.0
    %4101 = vmatmul.mubr.f32.gmra.mxu0 %v4034
    %v4102 = vpop.f32.mrf.mxu0
    %v4103 = vadd.f32 0.0, %v4102
    %v4104 = vpop.f32.mrf.mxu0
    %4105 = vdwg.mxu0
    %v4106 = vadd.f32 %v3865, %v4103
    %4107 = vrot.lane.b32.xlu0 %v2437, 104
    %v4108 = vpop.permute.xlu0 %4107
    %4109 = vrot.lane.b32.xlu0 %v2437, 72
    %v4110 = vpop.permute.xlu0 %4109
    %v4111 = vsel %vm193, %v4108, 0
    %v4113 = vsel %vm193, %v4110, 0
    %4115 = vmatprep.subr.mxu0 0.0
    %4116 = vmatpush1.xpose.msra.mxu0 0.0
    %4117 = vmatprep.subr.mxu0 0.0
    %4118 = vmatpush1.xpose.msra.mxu0 0.0
    %4119 = vmatprep.subr.mxu0 0.0
    %4120 = vmatpush1.xpose.msra.mxu0 0.0
    %4121 = vmatprep.subr.mxu0 0.0
    %4122 = vmatpush1.xpose.msra.mxu0 0.0
    %4123 = vmatprep.subr.mxu0 0.0
    %4124 = vmatpush1.xpose.msra.mxu0 0.0
    %4125 = vmatprep.subr.mxu0 0.0
    %4126 = vmatpush1.xpose.msra.mxu0 0.0
    %4127 = vmatprep.subr.mxu0 0.0
    %4128 = vmatpush1.xpose.msra.mxu0 0.0
    %4129 = vmatprep.subr.mxu0 0.0
    %4130 = vmatpush1.xpose.msra.mxu0 0.0
    %4131 = vmatprep.subr.mxu0 0.0
    %4132 = vmatpush1.xpose.msra.mxu0 0.0
    %4133 = vmatprep.subr.mxu0 0.0
    %4134 = vmatpush1.xpose.msra.mxu0 0.0
    %4135 = vmatprep.subr.mxu0 0.0
    %4136 = vmatpush1.xpose.msra.mxu0 0.0
    %4137 = vmatprep.subr.mxu0 0.0
    %4138 = vmatpush1.xpose.msra.mxu0 0.0
    %4139 = vmatprep.subr.mxu0 0.0
    %4140 = vmatpush1.xpose.msra.mxu0 0.0
    %4141 = vmatprep.subr.mxu0 0.0
    %4142 = vmatpush1.xpose.msra.mxu0 0.0
    %4143 = vmatprep.subr.mxu0 0.0
    %4144 = vmatpush1.xpose.msra.mxu0 0.0
    %4145 = vmatprep.subr.mxu0 0.0
    %4146 = vmatpush1.xpose.msra.mxu0 %v4113
    %4147 = vmatprep.subr.mxu0 0.0
    %4148 = vmatpush2.xpose.msra.mxu0 0.0
    %4149 = vmatprep.subr.mxu0 0.0
    %4150 = vmatpush2.xpose.msra.mxu0 0.0
    %4151 = vmatprep.subr.mxu0 0.0
    %4152 = vmatpush2.xpose.msra.mxu0 0.0
    %4153 = vmatprep.subr.mxu0 0.0
    %4154 = vmatpush2.xpose.msra.mxu0 0.0
    %4155 = vmatprep.subr.mxu0 0.0
    %4156 = vmatpush2.xpose.msra.mxu0 0.0
    %4157 = vmatprep.subr.mxu0 0.0
    %4158 = vmatpush2.xpose.msra.mxu0 0.0
    %4159 = vmatprep.subr.mxu0 0.0
    %4160 = vmatpush2.xpose.msra.mxu0 0.0
    %4161 = vmatprep.subr.mxu0 0.0
    %4162 = vmatpush2.xpose.msra.mxu0 0.0
    %4163 = vmatprep.subr.mxu0 0.0
    %4164 = vmatpush2.xpose.msra.mxu0 0.0
    %4165 = vmatprep.subr.mxu0 0.0
    %4166 = vmatpush2.xpose.msra.mxu0 0.0
    %4167 = vmatprep.subr.mxu0 0.0
    %4168 = vmatpush2.xpose.msra.mxu0 0.0
    %4169 = vmatprep.subr.mxu0 0.0
    %4170 = vmatpush2.xpose.msra.mxu0 0.0
    %4171 = vmatprep.subr.mxu0 0.0
    %4172 = vmatpush2.xpose.msra.mxu0 0.0
    %4173 = vmatprep.subr.mxu0 0.0
    %4174 = vmatpush2.xpose.msra.mxu0 0.0
    %4175 = vmatprep.subr.mxu0 0.0
    %4176 = vmatpush2.xpose.msra.mxu0 0.0
    %4177 = vmatprep.subr.mxu0 0.0
    %4178 = vmatpush2.xpose.msra.mxu0 0.0
    %4179 = vmatprep.mubr.f32.mxu0 0.0
    %4180 = vmatmul.mubr.f32.gmra.mxu0 %v4111
    %v4181 = vpop.f32.mrf.mxu0
    %v4182 = vadd.f32 %v68, %v4181
    %v4183 = vpop.f32.mrf.mxu0
    %4184 = vdwg.mxu0
    %v4185 = vsel %vm193, %v4182, -inf
    %4186 = vmax.xlane.f32.xlu0 %v4185
    %v4187 = vpop.xlane.xlu0 %4186
    %v4188 = vsub.f32 %v4182, %v4187
    %v4189 = vmul.f32 %v4188, 1.442695
    %v4190 = vpow.pop %v4189
    %v4191 = vsel %vm193, %v4190, 0.0
    %4192 = vadd.xlane.f32.xlu0 %v4191
    %v4193 = vpop.xlane.xlu0 %4192
    %v4194 = vrcp.pop %v4193
    %v4195 = vmul.f32 %v4190, %v4194
    %4196 = vrot.lane.b32.xlu0 %v2437, 40
    %v4197 = vpop.permute.xlu0 %4196
    %v4200 = vsel %vm193, %v4195, 0
    %4202 = vmatprep.subr.mxu0 0.0
    %4203 = vmatpush1.msra.mxu0 0.0
    %4204 = vmatprep.subr.mxu0 0.0
    %4205 = vmatpush1.msra.mxu0 0.0
    %4206 = vmatprep.subr.mxu0 0.0
    %4207 = vmatpush1.msra.mxu0 0.0
    %4208 = vmatprep.subr.mxu0 0.0
    %4209 = vmatpush1.msra.mxu0 0.0
    %4210 = vmatprep.subr.mxu0 0.0
    %4211 = vmatpush1.msra.mxu0 0.0
    %4212 = vmatprep.subr.mxu0 0.0
    %4213 = vmatpush1.msra.mxu0 0.0
    %4214 = vmatprep.subr.mxu0 0.0
    %4215 = vmatpush1.msra.mxu0 0.0
    %4216 = vmatprep.subr.mxu0 0.0
    %4217 = vmatpush1.msra.mxu0 0.0
    %4218 = vmatprep.subr.mxu0 0.0
    %4219 = vmatpush1.msra.mxu0 0.0
    %4220 = vmatprep.subr.mxu0 0.0
    %4221 = vmatpush1.msra.mxu0 0.0
    %4222 = vmatprep.subr.mxu0 0.0
    %4223 = vmatpush1.msra.mxu0 0.0
    %4224 = vmatprep.subr.mxu0 0.0
    %4225 = vmatpush1.msra.mxu0 0.0
    %4226 = vmatprep.subr.mxu0 0.0
    %4227 = vmatpush1.msra.mxu0 0.0
    %4228 = vmatprep.subr.mxu0 0.0
    %4229 = vmatpush1.msra.mxu0 0.0
    %4230 = vmatprep.subr.mxu0 0.0
    %4231 = vmatpush1.msra.mxu0 0.0
    %4232 = vmatprep.subr.mxu0 0.0
    %4233 = vmatpush1.msra.mxu0 %v4197
    %4234 = vmatprep.subr.mxu0 0.0
    %4235 = vmatpush2.msra.mxu0 0.0
    %4236 = vmatprep.subr.mxu0 0.0
    %4237 = vmatpush2.msra.mxu0 0.0
    %4238 = vmatprep.subr.mxu0 0.0
    %4239 = vmatpush2.msra.mxu0 0.0
    %4240 = vmatprep.subr.mxu0 0.0
    %4241 = vmatpush2.msra.mxu0 0.0
    %4242 = vmatprep.subr.mxu0 0.0
    %4243 = vmatpush2.msra.mxu0 0.0
    %4244 = vmatprep.subr.mxu0 0.0
    %4245 = vmatpush2.msra.mxu0 0.0
    %4246 = vmatprep.subr.mxu0 0.0
    %4247 = vmatpush2.msra.mxu0 0.0
    %4248 = vmatprep.subr.mxu0 0.0
    %4249 = vmatpush2.msra.mxu0 0.0
    %4250 = vmatprep.subr.mxu0 0.0
    %4251 = vmatpush2.msra.mxu0 0.0
    %4252 = vmatprep.subr.mxu0 0.0
    %4253 = vmatpush2.msra.mxu0 0.0
    %4254 = vmatprep.subr.mxu0 0.0
    %4255 = vmatpush2.msra.mxu0 0.0
    %4256 = vmatprep.subr.mxu0 0.0
    %4257 = vmatpush2.msra.mxu0 0.0
    %4258 = vmatprep.subr.mxu0 0.0
    %4259 = vmatpush2.msra.mxu0 0.0
    %4260 = vmatprep.subr.mxu0 0.0
    %4261 = vmatpush2.msra.mxu0 0.0
    %4262 = vmatprep.subr.mxu0 0.0
    %4263 = vmatpush2.msra.mxu0 0.0
    %4264 = vmatprep.subr.mxu0 0.0
    %4265 = vmatpush2.msra.mxu0 0.0
    %4266 = vmatprep.mubr.f32.mxu0 0.0
    %4267 = vmatmul.mubr.f32.gmra.mxu0 %v4200
    %v4268 = vpop.f32.mrf.mxu0
    %v4269 = vadd.f32 0.0, %v4268
    %v4270 = vpop.f32.mrf.mxu0
    %4271 = vdwg.mxu0
    %v4273 = vsel %vm193, %v4269, 0
    %4275 = vmatprep.subr.mxu0 0.0
    %4276 = vmatpush1.msra.mxu0 0.0
    %4277 = vmatprep.subr.mxu0 0.0
    %4278 = vmatpush1.msra.mxu0 0.0
    %4279 = vmatprep.subr.mxu0 0.0
    %4280 = vmatpush1.msra.mxu0 0.0
    %4281 = vmatprep.subr.mxu0 0.0
    %4282 = vmatpush1.msra.mxu0 0.0
    %4283 = vmatprep.subr.mxu0 0.0
    %4284 = vmatpush1.msra.mxu0 0.0
    %4285 = vmatprep.subr.mxu0 0.0
    %4286 = vmatpush1.msra.mxu0 0.0
    %4287 = vmatprep.subr.mxu0 0.0
    %4288 = vmatpush1.msra.mxu0 0.0
    %4289 = vmatprep.subr.mxu0 0.0
    %4290 = vmatpush1.msra.mxu0 0.0
    %4291 = vmatprep.subr.mxu0 0.0
    %4292 = vmatpush1.msra.mxu0 0.0
    %4293 = vmatprep.subr.mxu0 0.0
    %4294 = vmatpush1.msra.mxu0 0.0
    %4295 = vmatprep.subr.mxu0 0.0
    %4296 = vmatpush1.msra.mxu0 0.0
    %4297 = vmatprep.subr.mxu0 0.0
    %4298 = vmatpush1.msra.mxu0 0.0
    %4299 = vmatprep.subr.mxu0 0.0
    %4300 = vmatpush1.msra.mxu0 0.0
    %4301 = vmatprep.subr.mxu0 0.0
    %4302 = vmatpush1.msra.mxu0 0.0
    %4303 = vmatprep.subr.mxu0 0.0
    %4304 = vmatpush1.msra.mxu0 0.0
    %4305 = vmatprep.subr.mxu0 0.0
    %4306 = vmatpush1.msra.mxu0 %v79
    %4307 = vmatprep.subr.mxu0 0.0
    %4308 = vmatpush2.msra.mxu0 0.0
    %4309 = vmatprep.subr.mxu0 0.0
    %4310 = vmatpush2.msra.mxu0 0.0
    %4311 = vmatprep.subr.mxu0 0.0
    %4312 = vmatpush2.msra.mxu0 0.0
    %4313 = vmatprep.subr.mxu0 0.0
    %4314 = vmatpush2.msra.mxu0 0.0
    %4315 = vmatprep.subr.mxu0 0.0
    %4316 = vmatpush2.msra.mxu0 0.0
    %4317 = vmatprep.subr.mxu0 0.0
    %4318 = vmatpush2.msra.mxu0 0.0
    %4319 = vmatprep.subr.mxu0 0.0
    %4320 = vmatpush2.msra.mxu0 0.0
    %4321 = vmatprep.subr.mxu0 0.0
    %4322 = vmatpush2.msra.mxu0 0.0
    %4323 = vmatprep.subr.mxu0 0.0
    %4324 = vmatpush2.msra.mxu0 0.0
    %4325 = vmatprep.subr.mxu0 0.0
    %4326 = vmatpush2.msra.mxu0 0.0
    %4327 = vmatprep.subr.mxu0 0.0
    %4328 = vmatpush2.msra.mxu0 0.0
    %4329 = vmatprep.subr.mxu0 0.0
    %4330 = vmatpush2.msra.mxu0 0.0
    %4331 = vmatprep.subr.mxu0 0.0
    %4332 = vmatpush2.msra.mxu0 0.0
    %4333 = vmatprep.subr.mxu0 0.0
    %4334 = vmatpush2.msra.mxu0 0.0
    %4335 = vmatprep.subr.mxu0 0.0
    %4336 = vmatpush2.msra.mxu0 0.0
    %4337 = vmatprep.subr.mxu0 0.0
    %4338 = vmatpush2.msra.mxu0 0.0
    %4339 = vmatprep.mubr.f32.mxu0 0.0
    %4340 = vmatmul.mubr.f32.gmra.mxu0 %v4273
    %v4341 = vpop.f32.mrf.mxu0
    %v4342 = vadd.f32 0.0, %v4341
    %v4343 = vpop.f32.mrf.mxu0
    %4344 = vdwg.mxu0
    %v4345 = vadd.f32 %v4106, %v4342
    %v4346 = vlaneseq
    %v4347 = vshrl.u32 %v4346, 7
    %v4348 = vsub.s32 1, %v4347
    %v4349 = vrot.slane %v80, %v4348
    %v4350 = vadd.f32 %v3392, %v4349
    %v4351 = vadd.f32 %v4345, %v4349
    %v4352 = vadd.f32 %v2334, %v4350
    %v4353 = vadd.f32 %v2335, %v4351
    %v4354 = vsel %vm85, %v4352, 0.0
    %4355 = vadd.xlane.f32.xlu0 %v4354
    %v4356 = vpop.xlane.xlu0 %4355
    %v4357 = vsel %vm85, %v4353, 0.0
    %4358 = vadd.xlane.f32.xlu0 %v4357
    %v4359 = vpop.xlane.xlu0 %4358
    %v4360 = vmul.f32 %v4356, %v92
    %v4361 = vmul.f32 %v4359, %v92
    %v4362 = vsub.f32 %v4352, %v4360
    %v4363 = vsub.f32 %v4353, %v4361
    %v4364 = vmul.f32 %v4362, %v4362
    %v4365 = vmul.f32 %v4363, %v4363
    %v4366 = vsel %vm85, %v4364, 0.0
    %4367 = vadd.xlane.f32.xlu0 %v4366
    %v4368 = vpop.xlane.xlu0 %4367
    %v4369 = vsel %vm85, %v4365, 0.0
    %4370 = vadd.xlane.f32.xlu0 %v4369
    %v4371 = vpop.xlane.xlu0 %4370
    %v4372 = vmul.f32 %v4368, %v92
    %v4373 = vmul.f32 %v4371, %v92
    %v4374 = vadd.f32 %v4372, 1e-05
    %v4375 = vadd.f32 %v4373, 1e-05
    %v4376 = vrsqrt.pop %v4374
    %v4377 = vrsqrt.pop %v4375
    %v4378 = vmul.f32 %v4362, %v4376
    %v4379 = vmul.f32 %v4363, %v4377
    %v4380 = vlaneseq
    %v4381 = vshrl.u32 %v4380, 7
    %v4382 = vsub.s32 1, %v4381
    %v4383 = vrot.slane %v81, %v4382
    %v4384 = vmul.f32 %v4378, %v4383
    %v4385 = vmul.f32 %v4379, %v4383
    %v4386 = vlaneseq
    %v4387 = vshrl.u32 %v4386, 7
    %v4388 = vsub.s32 1, %v4387
    %v4389 = vrot.slane %v82, %v4388
    %v4390 = vadd.f32 %v4384, %v4389
    %v4391 = vadd.f32 %v4385, %v4389
    %v4392 = vpack.c.bf16 %v4391, %v4390
    %s4393 = scalar_lea.vmem %s10, 16
    %v4394 = vld [vmem:[%s4393] sm:$0xf]
    %v4395 = vld [vmem:[%s4393 + $0x4] sm:$0xf]
    %v4396 = vld [vmem:[%s4393 + $0x8] sm:$0xf]
    %v4397 = vld [vmem:[%s4393 + $0xc] sm:$0xf]
    %v4398 = vlaneseq
    %v4399 = vshrl.u32 %v4398, 7
    %v4400 = vsub.s32 1, %v4399
    %v4401 = vrot.slane %v83, %v4400
    %v4406 = vunpack.c.l.b16 %v4394
    %v4407 = vunpack.c.l.b16 %v4395
    %v4408 = vunpack.c.l.b16 %v4396
    %v4409 = vunpack.c.l.b16 %v4397
    %v4410 = vpack.c.b16 %v4407, %v4406
    %v4411 = vpack.c.b16 %v4409, %v4408
    %v4415 = vsel %vm85, %v4392, 0
    %4417 = vmatprep.subr.bf16.mxu0 0
    %4418 = vmatpush1.bf16.msra.mxu0 0
    %4419 = vmatprep.subr.bf16.mxu0 0
    %4420 = vmatpush1.bf16.msra.mxu0 0
    %4421 = vmatprep.subr.bf16.mxu0 0
    %4422 = vmatpush1.bf16.msra.mxu0 0
    %4423 = vmatprep.subr.bf16.mxu0 0
    %4424 = vmatpush1.bf16.msra.mxu0 0
    %4425 = vmatprep.subr.bf16.mxu0 0
    %4426 = vmatpush1.bf16.msra.mxu0 0
    %4427 = vmatprep.subr.bf16.mxu0 0
    %4428 = vmatpush1.bf16.msra.mxu0 0
    %4429 = vmatprep.subr.bf16.mxu0 0
    %4430 = vmatpush1.bf16.msra.mxu0 %v4411
    %4431 = vmatprep.subr.bf16.mxu0 0
    %4432 = vmatpush1.bf16.msra.mxu0 %v4410
    %4433 = vmatprep.subr.bf16.mxu0 0
    %4434 = vmatpush2.bf16.msra.mxu0 0
    %4435 = vmatprep.subr.bf16.mxu0 0
    %4436 = vmatpush2.bf16.msra.mxu0 0
    %4437 = vmatprep.subr.bf16.mxu0 0
    %4438 = vmatpush2.bf16.msra.mxu0 0
    %4439 = vmatprep.subr.bf16.mxu0 0
    %4440 = vmatpush2.bf16.msra.mxu0 0
    %4441 = vmatprep.subr.bf16.mxu0 0
    %4442 = vmatpush2.bf16.msra.mxu0 0
    %4443 = vmatprep.subr.bf16.mxu0 0
    %4444 = vmatpush2.bf16.msra.mxu0 0
    %4445 = vmatprep.subr.bf16.mxu0 0
    %4446 = vmatpush2.bf16.msra.mxu0 0
    %4447 = vmatprep.subr.bf16.mxu0 0
    %4448 = vmatpush2.bf16.msra.mxu0 0
    %4449 = vmatprep.mubr.bf16.mxu0 0
    %4450 = vmatmul.mubr.bf16.gmra.mxu0 %v4415
    %v4451 = vpop.f32.mrf.mxu0
    %v4452 = vadd.f32 %v4401, %v4451
    %v4453 = vpop.f32.mrf.mxu0
    %v4454 = vpop.f32.mrf.mxu0
    %v4455 = vadd.f32 %v4401, %v4454
    %v4456 = vpop.f32.mrf.mxu0
    %4457 = vdwg.mxu0
    %v4458 = vmul.f32 %v4452, 1.702
    %v4459 = vmul.f32 %v4455, 1.702
    %v4460 = vxor.u32 %v4458, 2147483648
    %v4461 = vxor.u32 %v4459, 2147483648
    %v4462 = vmul.f32 %v4460, 1.442695
    %v4463 = vpow.pop %v4462
    %v4464 = vmul.f32 %v4461, 1.442695
    %v4465 = vpow.pop %v4464
    %v4466 = vadd.f32 %v4463, 1.0
    %v4467 = vadd.f32 %v4465, 1.0
    %v4468 = vrcp.pop %v4466
    %v4469 = vmul.f32 1.0, %v4468
    %v4470 = vrcp.pop %v4467
    %v4471 = vmul.f32 1.0, %v4470
    %v4472 = vmul.f32 %v4452, %v4469
    %v4473 = vmul.f32 %v4455, %v4471
    %v4474 = vpack.c.bf16 %v4473, %v4472
    %s4475 = scalar_lea.vmem %s12, 64
    %v4476 = vld [vmem:[%s4475] sm:$0xf]
    %v4477 = vld [vmem:[%s4475 + $0x4] sm:$0xf]
    %v4478 = vld [vmem:[%s4475 + $0x8] sm:$0xf]
    %v4479 = vld [vmem:[%s4475 + $0xc] sm:$0xf]
    %v4480 = vld [vmem:[%s4475 + $0x10] sm:$0xf]
    %v4481 = vld [vmem:[%s4475 + $0x14] sm:$0xf]
    %v4482 = vld [vmem:[%s4475 + $0x18] sm:$0xf]
    %v4483 = vld [vmem:[%s4475 + $0x1c] sm:$0xf]
    %v4484 = vld [vmem:[%s4475 + $0x20] sm:$0xf]
    %v4485 = vld [vmem:[%s4475 + $0x24] sm:$0xf]
    %v4486 = vld [vmem:[%s4475 + $0x28] sm:$0xf]
    %v4487 = vld [vmem:[%s4475 + $0x2c] sm:$0xf]
    %v4488 = vld [vmem:[%s4475 + $0x30] sm:$0xf]
    %v4489 = vld [vmem:[%s4475 + $0x34] sm:$0xf]
    %v4490 = vld [vmem:[%s4475 + $0x38] sm:$0xf]
    %v4491 = vld [vmem:[%s4475 + $0x3c] sm:$0xf]
    %v4492 = vlaneseq
    %v4493 = vshrl.u32 %v4492, 7
    %v4494 = vsub.s32 1, %v4493
    %v4495 = vrot.slane %v84, %v4494
    %v4512 = vunpack.c.l.b16 %v4476
    %v4513 = vunpack.c.l.b16 %v4477
    %v4514 = vunpack.c.l.b16 %v4478
    %v4515 = vunpack.c.l.b16 %v4479
    %v4516 = vunpack.c.l.b16 %v4480
    %v4517 = vunpack.c.l.b16 %v4481
    %v4518 = vunpack.c.l.b16 %v4482
    %v4519 = vunpack.c.l.b16 %v4483
    %v4520 = vunpack.c.l.b16 %v4484
    %v4521 = vunpack.c.l.b16 %v4485
    %v4522 = vunpack.c.l.b16 %v4486
    %v4523 = vunpack.c.l.b16 %v4487
    %v4524 = vunpack.c.l.b16 %v4488
    %v4525 = vunpack.c.l.b16 %v4489
    %v4526 = vunpack.c.l.b16 %v4490
    %v4527 = vunpack.c.l.b16 %v4491
    %v4528 = vpack.c.b16 %v4513, %v4512
    %v4529 = vpack.c.b16 %v4515, %v4514
    %v4530 = vpack.c.b16 %v4517, %v4516
    %v4531 = vpack.c.b16 %v4519, %v4518
    %v4532 = vpack.c.b16 %v4521, %v4520
    %v4533 = vpack.c.b16 %v4523, %v4522
    %v4534 = vpack.c.b16 %v4525, %v4524
    %v4535 = vpack.c.b16 %v4527, %v4526
    %4544 = vmatprep.subr.bf16.mxu0 0
    %4545 = vmatpush1.bf16.msra.mxu0 %v4535
    %4546 = vmatprep.subr.bf16.mxu0 0
    %4547 = vmatpush1.bf16.msra.mxu0 %v4534
    %4548 = vmatprep.subr.bf16.mxu0 0
    %4549 = vmatpush1.bf16.msra.mxu0 %v4533
    %4550 = vmatprep.subr.bf16.mxu0 0
    %4551 = vmatpush1.bf16.msra.mxu0 %v4532
    %4552 = vmatprep.subr.bf16.mxu0 0
    %4553 = vmatpush1.bf16.msra.mxu0 %v4531
    %4554 = vmatprep.subr.bf16.mxu0 0
    %4555 = vmatpush1.bf16.msra.mxu0 %v4530
    %4556 = vmatprep.subr.bf16.mxu0 0
    %4557 = vmatpush1.bf16.msra.mxu0 %v4529
    %4558 = vmatprep.subr.bf16.mxu0 0
    %4559 = vmatpush1.bf16.msra.mxu0 %v4528
    %4560 = vmatprep.subr.bf16.mxu0 0
    %4561 = vmatpush2.bf16.msra.mxu0 0
    %4562 = vmatprep.subr.bf16.mxu0 0
    %4563 = vmatpush2.bf16.msra.mxu0 0
    %4564 = vmatprep.subr.bf16.mxu0 0
    %4565 = vmatpush2.bf16.msra.mxu0 0
    %4566 = vmatprep.subr.bf16.mxu0 0
    %4567 = vmatpush2.bf16.msra.mxu0 0
    %4568 = vmatprep.subr.bf16.mxu0 0
    %4569 = vmatpush2.bf16.msra.mxu0 0
    %4570 = vmatprep.subr.bf16.mxu0 0
    %4571 = vmatpush2.bf16.msra.mxu0 0
    %4572 = vmatprep.subr.bf16.mxu0 0
    %4573 = vmatpush2.bf16.msra.mxu0 0
    %4574 = vmatprep.subr.bf16.mxu0 0
    %4575 = vmatpush2.bf16.msra.mxu0 0
    %4576 = vmatprep.mubr.bf16.mxu0 0
    %4577 = vmatmul.mubr.bf16.gmra.mxu0 %v4474
    %v4578 = vpop.f32.mrf.mxu0
    %v4579 = vadd.f32 %v4495, %v4578
    %v4580 = vpop.f32.mrf.mxu0
    %v4581 = vpop.f32.mrf.mxu0
    %v4582 = vadd.f32 %v4495, %v4581
    %v4583 = vpop.f32.mrf.mxu0
    %4584 = vdwg.mxu0
    %v4585 = vadd.f32 %v4352, %v4579
    %v4586 = vadd.f32 %v4353, %v4582
    %v4587 = vld [vmem:[%s14] sm:$0x1]
    %v4588 = vld [vmem:[%s15] sm:$0x1]
    %v4589 = vsel %vm85, %v4585, 0.0
    %4590 = vadd.xlane.f32.xlu0 %v4589
    %v4591 = vpop.xlane.xlu0 %4590
    %v4592 = vsel %vm85, %v4586, 0.0
    %4593 = vadd.xlane.f32.xlu0 %v4592
    %v4594 = vpop.xlane.xlu0 %4593
    %v4595 = vmul.f32 %v4591, %v92
    %v4596 = vmul.f32 %v4594, %v92
    %v4597 = vsub.f32 %v4585, %v4595
    %v4598 = vsub.f32 %v4586, %v4596
    %v4599 = vmul.f32 %v4597, %v4597
    %v4600 = vmul.f32 %v4598, %v4598
    %v4601 = vsel %vm85, %v4599, 0.0
    %4602 = vadd.xlane.f32.xlu0 %v4601
    %v4603 = vpop.xlane.xlu0 %4602
    %v4604 = vsel %vm85, %v4600, 0.0
    %4605 = vadd.xlane.f32.xlu0 %v4604
    %v4606 = vpop.xlane.xlu0 %4605
    %v4607 = vmul.f32 %v4603, %v92
    %v4608 = vmul.f32 %v4606, %v92
    %v4609 = vadd.f32 %v4607, 1e-05
    %v4610 = vadd.f32 %v4608, 1e-05
    %v4611 = vrsqrt.pop %v4609
    %v4612 = vrsqrt.pop %v4610
    %v4613 = vmul.f32 %v4597, %v4611
    %v4614 = vmul.f32 %v4598, %v4612
    %v4616 = vlaneseq
    %v4617 = vshrl.u32 %v4616, 7
    %v4618 = vsub.s32 0, %v4617
    %v4619 = vrot.slane %v4587, %v4618
    %v4621 = vmul.f32 %v4613, %v4619
    %v4622 = vmul.f32 %v4614, %v4619
    %v4624 = vlaneseq
    %v4625 = vshrl.u32 %v4624, 7
    %v4626 = vsub.s32 0, %v4625
    %v4627 = vrot.slane %v4588, %v4626
    %v4629 = vadd.f32 %v4621, %v4627
    %v4630 = vadd.f32 %v4622, %v4627
    %v4631 = vld [vmem:[%s1] sm:$0x3]
    %vm4632 = vcmask 130048
    %v4634 = vsel %vm4632, %v4631, 0
    %4636 = vmatprep.subr.mxu0 0.0
    %4637 = vmatpush1.msra.mxu0 0.0
    %4638 = vmatprep.subr.mxu0 0.0
    %4639 = vmatpush1.msra.mxu0 0.0
    %4640 = vmatprep.subr.mxu0 0.0
    %4641 = vmatpush1.msra.mxu0 0.0
    %4642 = vmatprep.subr.mxu0 0.0
    %4643 = vmatpush1.msra.mxu0 0.0
    %4644 = vmatprep.subr.mxu0 0.0
    %4645 = vmatpush1.msra.mxu0 0.0
    %4646 = vmatprep.subr.mxu0 0.0
    %4647 = vmatpush1.msra.mxu0 0.0
    %4648 = vmatprep.subr.mxu0 0.0
    %4649 = vmatpush1.msra.mxu0 0.0
    %4650 = vmatprep.subr.mxu0 0.0
    %4651 = vmatpush1.msra.mxu0 0.0
    %4652 = vmatprep.subr.mxu0 0.0
    %4653 = vmatpush1.msra.mxu0 0.0
    %4654 = vmatprep.subr.mxu0 0.0
    %4655 = vmatpush1.msra.mxu0 0.0
    %4656 = vmatprep.subr.mxu0 0.0
    %4657 = vmatpush1.msra.mxu0 0.0
    %4658 = vmatprep.subr.mxu0 0.0
    %4659 = vmatpush1.msra.mxu0 0.0
    %4660 = vmatprep.subr.mxu0 0.0
    %4661 = vmatpush1.msra.mxu0 0.0
    %4662 = vmatprep.subr.mxu0 0.0
    %4663 = vmatpush1.msra.mxu0 0.0
    %4664 = vmatprep.subr.mxu0 0.0
    %4665 = vmatpush1.msra.mxu0 %v4630
    %4666 = vmatprep.subr.mxu0 0.0
    %4667 = vmatpush1.msra.mxu0 %v4629
    %4668 = vmatprep.subr.mxu0 0.0
    %4669 = vmatpush2.msra.mxu0 0.0
    %4670 = vmatprep.subr.mxu0 0.0
    %4671 = vmatpush2.msra.mxu0 0.0
    %4672 = vmatprep.subr.mxu0 0.0
    %4673 = vmatpush2.msra.mxu0 0.0
    %4674 = vmatprep.subr.mxu0 0.0
    %4675 = vmatpush2.msra.mxu0 0.0
    %4676 = vmatprep.subr.mxu0 0.0
    %4677 = vmatpush2.msra.mxu0 0.0
    %4678 = vmatprep.subr.mxu0 0.0
    %4679 = vmatpush2.msra.mxu0 0.0
    %4680 = vmatprep.subr.mxu0 0.0
    %4681 = vmatpush2.msra.mxu0 0.0
    %4682 = vmatprep.subr.mxu0 0.0
    %4683 = vmatpush2.msra.mxu0 0.0
    %4684 = vmatprep.subr.mxu0 0.0
    %4685 = vmatpush2.msra.mxu0 0.0
    %4686 = vmatprep.subr.mxu0 0.0
    %4687 = vmatpush2.msra.mxu0 0.0
    %4688 = vmatprep.subr.mxu0 0.0
    %4689 = vmatpush2.msra.mxu0 0.0
    %4690 = vmatprep.subr.mxu0 0.0
    %4691 = vmatpush2.msra.mxu0 0.0
    %4692 = vmatprep.subr.mxu0 0.0
    %4693 = vmatpush2.msra.mxu0 0.0
    %4694 = vmatprep.subr.mxu0 0.0
    %4695 = vmatpush2.msra.mxu0 0.0
    %4696 = vmatprep.subr.mxu0 0.0
    %4697 = vmatpush2.msra.mxu0 0.0
    %4698 = vmatprep.subr.mxu0 0.0
    %4699 = vmatpush2.msra.mxu0 0.0
    %4700 = vmatprep.mubr.f32.mxu0 0.0
    %4701 = vmatmul.mubr.f32.gmra.mxu0 %v4634
    %v4702 = vpop.f32.mrf.mxu0
    %v4703 = vadd.f32 0.0, %v4702
    %v4704 = vpop.f32.mrf.mxu0
    %4705 = vdwg.mxu0
    %v4706 = vpack.c.bf16 %v4703, %v4703
    %v4707 = vld [vmem:[%s16] sm:$0xf]
    %v4708 = vld [vmem:[%s16 + $0x4] sm:$0xf]
    %v4709 = vld [vmem:[%s16 + $0x8] sm:$0xf]
    %v4710 = vld [vmem:[%s16 + $0xc] sm:$0xf]
    %v4711 = vld [vmem:[%s17] sm:$0x1]
    %v4713 = vlaneseq
    %v4714 = vshrl.u32 %v4713, 7
    %v4715 = vsub.s32 0, %v4714
    %v4716 = vrot.slane %v4711, %v4715
    %v4722 = vunpack.c.l.b16 %v4707
    %v4723 = vunpack.c.l.b16 %v4708
    %v4724 = vunpack.c.l.b16 %v4709
    %v4725 = vunpack.c.l.b16 %v4710
    %v4726 = vpack.c.b16 %v4723, %v4722
    %v4727 = vpack.c.b16 %v4725, %v4724
    %v4731 = vsel %vm85, %v4706, 0
    %4733 = vmatprep.subr.bf16.mxu0 0
    %4734 = vmatpush1.bf16.msra.mxu0 0
    %4735 = vmatprep.subr.bf16.mxu0 0
    %4736 = vmatpush1.bf16.msra.mxu0 0
    %4737 = vmatprep.subr.bf16.mxu0 0
    %4738 = vmatpush1.bf16.msra.mxu0 0
    %4739 = vmatprep.subr.bf16.mxu0 0
    %4740 = vmatpush1.bf16.msra.mxu0 0
    %4741 = vmatprep.subr.bf16.mxu0 0
    %4742 = vmatpush1.bf16.msra.mxu0 0
    %4743 = vmatprep.subr.bf16.mxu0 0
    %4744 = vmatpush1.bf16.msra.mxu0 0
    %4745 = vmatprep.subr.bf16.mxu0 0
    %4746 = vmatpush1.bf16.msra.mxu0 %v4727
    %4747 = vmatprep.subr.bf16.mxu0 0
    %4748 = vmatpush1.bf16.msra.mxu0 %v4726
    %4749 = vmatprep.subr.bf16.mxu0 0
    %4750 = vmatpush2.bf16.msra.mxu0 0
    %4751 = vmatprep.subr.bf16.mxu0 0
    %4752 = vmatpush2.bf16.msra.mxu0 0
    %4753 = vmatprep.subr.bf16.mxu0 0
    %4754 = vmatpush2.bf16.msra.mxu0 0
    %4755 = vmatprep.subr.bf16.mxu0 0
    %4756 = vmatpush2.bf16.msra.mxu0 0
    %4757 = vmatprep.subr.bf16.mxu0 0
    %4758 = vmatpush2.bf16.msra.mxu0 0
    %4759 = vmatprep.subr.bf16.mxu0 0
    %4760 = vmatpush2.bf16.msra.mxu0 0
    %4761 = vmatprep.subr.bf16.mxu0 0
    %4762 = vmatpush2.bf16.msra.mxu0 0
    %4763 = vmatprep.subr.bf16.mxu0 0
    %4764 = vmatpush2.bf16.msra.mxu0 0
    %4765 = vmatprep.mubr.bf16.mxu0 0
    %4766 = vmatmul.mubr.bf16.gmra.mxu0 %v4731
    %v4767 = vpop.f32.mrf.mxu0
    %v4768 = vadd.f32 %v4716, %v4767
    %v4769 = vpop.f32.mrf.mxu0
    %v4770 = vpop.f32.mrf.mxu0
    %v4771 = vpop.f32.mrf.mxu0
    %4772 = vdwg.mxu0
    %4773 = vst [vmem:[#allocation2] sm:$0x3] %v4768
    // Predicated region
    $region74: #{text_encoder_forward.1} parent=1 // pred_check
      _
    $region75: #{text_encoder_forward.1} parent=1 // pred_check_branch
      %4775 = sbr.rel (0) target = $region77
    $region76: #{text_encoder_forward.1} parent=1 // pred_region
      %s4777 = ssub.s32 32, 32
      %4778 = vsyncadd [#allocation3], %s4777
      %s4780 = sshll.u32 [#allocation2], 4
      %s4781 = int_to_ptr.vmem [resolvable:$true] %s4780
      %4783 = dma.vmem_to_hbm [thread:$0]  %s4781, 32, %s18, [#allocation3]
    $region77: #{text_encoder_forward.1} parent=1 // pred_fallthru
      _
    // Predicated region
    $region78: #{text_encoder_forward.1} parent=1 // pred_check
      _
    $region79: #{text_encoder_forward.1} parent=1 // pred_check_branch
      %4785 = sbr.rel (0) target = $region81
    $region80: #{text_encoder_forward.1} parent=1 // pred_region
      %4786 = dma.done [#allocation3], 32
    $region81: #{text_encoder_forward.1} parent=1 // pred_fallthru
      _
    %4787 = vsyncpa [#allocation3], 1

</llo_original>
